<compile_context>
chip_gen: v7x
topology: tpu7x:2x2x1
jax: 0.10.0
libtpu: 0.0.40
codegen_flags: <defaults>
</compile_context>

<pallas_src>
import functools

import numpy as np

import jax
import jax.numpy as jnp
from jax.experimental import pallas as pl
from jax.experimental.pallas import tpu as pltpu


# ------------------------------ Pallas kernel -------------------------------

def _luna_block_kernel(x_ref, w1_ref, b1_ref, w2_ref, b2_ref, o_ref,
                       xsh_ref, msh_ref, *, D, H):
    """Fused conv1+ReLU -> conv2+ReLU -> (d,h) half of the 2x2x2 maxpool.

    x_ref  : (D, H, W*Cin) bf16  channels-last, width folded into lanes, no pad.
    w1_ref : (3, 3*W*Cin, W*Cmid) bf16 banded conv1 weights; leading dim = kd,
             K rows = [kh=0 | kh=1 | kh=2] width-banded blocks.
    w2_ref : (3, 3*W*Cmid, W*Cout) bf16 banded conv2 weights; output columns
             = [even output width | odd output width] (width half of the pool).
    o_ref  : ((D/2)*(H/2), W*Cout) f32  (d,h)-pooled, pre-width-pool, lane-dense.
    xsh_ref/msh_ref : (D+2, H, 3*W*C) bf16 kh-shifted, (d,h)-zero-haloed slabs.
    """
    DH = D * H
    WCi = x_ref.shape[-1]          # W * Cin   (lane-dense, multiple of 128)
    WCm = b1_ref.shape[-1]         # W * Cmid
    LAN = b2_ref.shape[-1]         # 2 * (W/2) * Cout  (= W * Cout)
    Q = (D // 2) * (H // 2)

    # ---- build conv1's kh-shifted, (d,h)-zero-haloed input slab (bf16) -----
    xv = x_ref[...]                                          # (D, H, WCi)
    xsh_ref[0:1, :, :] = jnp.zeros((1, H, 3 * WCi), jnp.bfloat16)         # d halo
    xsh_ref[D + 1:D + 2, :, :] = jnp.zeros((1, H, 3 * WCi), jnp.bfloat16)
    xsh_ref[1:D + 1, 0:1, 0:WCi] = jnp.zeros((D, 1, WCi), jnp.bfloat16)   # h halo
    xsh_ref[1:D + 1, H - 1:H, 2 * WCi:3 * WCi] = jnp.zeros(
        (D, 1, WCi), jnp.bfloat16)
    xsh_ref[1:D + 1, 1:H, 0:WCi] = xv[:, 0:H - 1, :]         # kh = 0 block
    xsh_ref[1:D + 1, :, WCi:2 * WCi] = xv                    # kh = 1 (centre)
    xsh_ref[1:D + 1, 0:H - 1, 2 * WCi:3 * WCi] = xv[:, 1:H, :]   # kh = 2 block

    # ---- conv1: 3 MXU dots (K = 3*W*Cin), accumulate in vregs --------------
    acc1 = jnp.dot(xsh_ref[0:D, :, :].reshape(DH, 3 * WCi), w1_ref[0],
                   preferred_element_type=jnp.float32)
    acc1 += jnp.dot(xsh_ref[1:D + 1, :, :].reshape(DH, 3 * WCi), w1_ref[1],
                    preferred_element_type=jnp.float32)
    acc1 += jnp.dot(xsh_ref[2:D + 2, :, :].reshape(DH, 3 * WCi), w1_ref[2],
                    preferred_element_type=jnp.float32)
    act1 = jnp.maximum(acc1 + b1_ref[...], 0.0)              # bias+ReLU in f32
    act1 = act1.astype(jnp.bfloat16).reshape(D, H, WCm)      # MXU-ready bf16

    # ---- conv2's kh-shifted, zero-haloed slab (conv1 act never leaves VMEM) -
    msh_ref[0:1, :, :] = jnp.zeros((1, H, 3 * WCm), jnp.bfloat16)
    msh_ref[D + 1:D + 2, :, :] = jnp.zeros((1, H, 3 * WCm), jnp.bfloat16)
    msh_ref[1:D + 1, 0:1, 0:WCm] = jnp.zeros((D, 1, WCm), jnp.bfloat16)
    msh_ref[1:D + 1, H - 1:H, 2 * WCm:3 * WCm] = jnp.zeros(
        (D, 1, WCm), jnp.bfloat16)
    msh_ref[1:D + 1, 1:H, 0:WCm] = act1[:, 0:H - 1, :]
    msh_ref[1:D + 1, :, WCm:2 * WCm] = act1
    msh_ref[1:D + 1, 0:H - 1, 2 * WCm:3 * WCm] = act1[:, 1:H, :]

    # ---- conv2: 3 MXU dots, merged even|odd output-width column groups -----
    acc2 = jnp.dot(msh_ref[0:D, :, :].reshape(DH, 3 * WCm), w2_ref[0],
                   preferred_element_type=jnp.float32)
    acc2 += jnp.dot(msh_ref[1:D + 1, :, :].reshape(DH, 3 * WCm), w2_ref[1],
                    preferred_element_type=jnp.float32)
    acc2 += jnp.dot(msh_ref[2:D + 2, :, :].reshape(DH, 3 * WCm), w2_ref[2],
                    preferred_element_type=jnp.float32)
    y = jnp.maximum(acc2 + b2_ref[...], 0.0)                 # (DH, LAN) f32

    # ---- maxpool over (d, h): three VPU maxima on reshaped views -----------
    t = y.reshape(D // 2, 2 * H, LAN)                        # rows: d pairs
    yd = jnp.maximum(t[:, :H, :], t[:, H:, :])               # (D/2, H, LAN)
    t2 = yd.reshape(Q, 2, LAN)                               # rows: h pairs
    o_ref[...] = jnp.maximum(t2[:, 0:1, :], t2[:, 1:2, :]).reshape(Q, LAN)


# ----------------------- host-side weight prepacking ------------------------

def _tap_band(K_tap, W, out_ws):
    """Width-banded matrix for one (kd, kh) tap.

    K_tap : (Cout, Cin, 3) over kw.  out_ws: output width positions.
    Returns (W*Cin, len(out_ws)*Cout); rows = (w_in, c_in), cols = (w_out, c_out);
    the kw taps and the width zero-padding are folded into the band structure.
    """
    Cout, Cin, _ = K_tap.shape
    M = np.zeros((W * Cin, len(out_ws) * Cout), np.float32)
    for j, w in enumerate(out_ws):
        for kw in range(3):
            wi = w + kw - 1
            if 0 <= wi < W:
                M[wi * Cin:(wi + 1) * Cin, j * Cout:(j + 1) * Cout] = \
                    np.transpose(K_tap[:, :, kw])
    return M


def _pack_conv1(K, W):
    """K: (Cmid, Cin, 3, 3, 3) -> (3, 3*W*Cin, W*Cmid); leading dim = kd,
    K rows stacked over kh, full-width output columns."""
    ws = list(range(W))
    return np.stack([
        np.concatenate([_tap_band(K[:, :, kd, kh, :], W, ws)
                        for kh in range(3)], axis=0)
        for kd in range(3)], axis=0)


def _pack_conv2(K, W):
    """K: (Cout, Cmid, 3, 3, 3) -> (3, 3*W*Cmid, W*Cout); output columns are
    [even output width | odd output width] (merged parity groups, N = 128)."""
    even = list(range(0, W, 2))
    odd = list(range(1, W, 2))

    def tap(kd, kh):
        return np.concatenate([_tap_band(K[:, :, kd, kh, :], W, even),
                               _tap_band(K[:, :, kd, kh, :], W, odd)], axis=1)

    return np.stack([np.concatenate([tap(kd, kh) for kh in range(3)], axis=0)
                     for kd in range(3)], axis=0)


def pack_params(K1, b1, K2, b2, W):
    K1 = np.asarray(K1, np.float32); b1 = np.asarray(b1, np.float32)
    K2 = np.asarray(K2, np.float32); b2 = np.asarray(b2, np.float32)
    # conv2's input channels must match conv1's output channels (see TODO).
    assert K2.shape[1] == K1.shape[0], "conv2 Cin must equal conv1 Cout"
    return {
        "w1b": jnp.asarray(_pack_conv1(K1, W), jnp.bfloat16),
        "b1f": jnp.asarray(np.tile(b1, W)[None, :], jnp.float32),
        "w2b": jnp.asarray(_pack_conv2(K2, W), jnp.bfloat16),
        "b2f": jnp.asarray(np.tile(b2, W)[None, :], jnp.float32),
    }


# --------------------------------- wrapper ----------------------------------

def luna_block_forward(x, packed):
    """x: (N, Cin, D, H, W) f32 NCDHW.  Returns (N, Cout, D/2, H/2, W/2) f32."""
    n, cin, d, h, w = x.shape
    cmid = packed["b1f"].shape[1] // w
    lan = packed["b2f"].shape[1]            # = W * Cout (even|odd halves)
    wo, cout = w // 2, lan // w
    q = (d // 2) * (h // 2)

    # NCDHW -> (N, D, H, W*Cin) channels-last width-folded, cast to bf16 once.
    # No HBM pad: the (d, h) zero halo is built inside the kernel's VMEM slab.
    xt = jnp.transpose(x, (0, 2, 3, 4, 1)).reshape(n, d, h, w * cin)
    xt = xt.astype(jnp.bfloat16)

    kernel = functools.partial(_luna_block_kernel, D=d, H=h)
    out = pl.pallas_call(
        kernel,
        out_shape=jax.ShapeDtypeStruct((n, q, lan), jnp.float32),
        grid=(n,),
        in_specs=[
            pl.BlockSpec((None, d, h, w * cin), lambda i: (i, 0, 0, 0)),
            pl.BlockSpec((3, 3 * w * cin, w * cmid), lambda i: (0, 0, 0)),
            pl.BlockSpec((1, w * cmid), lambda i: (0, 0)),
            pl.BlockSpec((3, 3 * w * cmid, lan), lambda i: (0, 0, 0)),
            pl.BlockSpec((1, lan), lambda i: (0, 0)),
        ],
        out_specs=pl.BlockSpec((None, q, lan), lambda i: (i, 0, 0)),
        scratch_shapes=[
            pltpu.VMEM((d + 2, h, 3 * w * cin), jnp.bfloat16),   # conv1 slab
            pltpu.VMEM((d + 2, h, 3 * w * cmid), jnp.bfloat16),  # conv2 slab
        ],
        compiler_params=pltpu.CompilerParams(
            dimension_semantics=("parallel",)),
    )(xt, packed["w1b"], packed["b1f"], packed["w2b"], packed["b2f"])

    # Width half of the maxpool: even vs odd output-width column halves.
    half = lan // 2
    pooled = jnp.maximum(out[..., :half], out[..., half:])    # (n, q, Wo*Cout)
    pooled = pooled.reshape(n, d // 2, h // 2, wo, cout)
    return jnp.transpose(pooled, (0, 4, 1, 2, 3))              # -> NCDHW


# ------------------------- pure-JAX reference (check) -----------------------

def _reference_forward(x, K1, b1, K2, b2):
    dn = ("NCDHW", "OIDHW", "NCDHW")
    hp = jax.lax.Precision.HIGHEST
    y = jax.lax.conv_general_dilated(x, K1, (1, 1, 1), "SAME",
                                     dimension_numbers=dn, precision=hp)
    y = jnp.maximum(y + b1[None, :, None, None, None], 0.0)
    y = jax.lax.conv_general_dilated(y, K2, (1, 1, 1), "SAME",
                                     dimension_numbers=dn, precision=hp)
    y = jnp.maximum(y + b2[None, :, None, None, None], 0.0)
    n, c, d, h, w = y.shape
    y = y.reshape(n, c, d // 2, 2, h // 2, 2, w // 2, 2)
    return y.max(axis=(3, 5, 7))


# ----------------------------------- main ------------------------------------

if __name__ == "__main__":
    # in_channels == conv_channels so the reference module is shape-consistent
    # (see TODO at top); W*C = 128 keeps every kernel dim lane-dense and the
    # MXU contraction dim is 3*W*C = 384.
    N, C_IN, C_CONV = 2, 8, 8
    D = H = W = 16

    key = jax.random.PRNGKey(0)
    kx, k1, k2, k3, k4 = jax.random.split(key, 5)

    K1 = jax.random.normal(k1, (C_CONV, C_IN, 3, 3, 3), jnp.float32) \
        * (2.0 / (C_IN * 27)) ** 0.5
    b1 = jax.random.uniform(k2, (C_CONV,), jnp.float32, -0.05, 0.05)
    K2 = jax.random.normal(k3, (C_CONV, C_CONV, 3, 3, 3), jnp.float32) \
        * (2.0 / (C_CONV * 27)) ** 0.5
    b2 = jax.random.uniform(k4, (C_CONV,), jnp.float32, -0.05, 0.05)

    x = jax.random.normal(kx, (N, C_IN, D, H, W), jnp.float32)

    packed = pack_params(K1, b1, K2, b2, W)

    fwd = jax.jit(luna_block_forward)
    out = fwd(x, packed)
    jax.block_until_ready(out)

    assert out.shape == (N, C_CONV, D // 2, H // 2, W // 2), out.shape

    ref = _reference_forward(x, K1, b1, K2, b2)
    max_err = float(jnp.max(jnp.abs(out - ref)))
    # bf16 MXU inputs / bf16 activation slab with f32 accumulation.
    assert max_err < 0.25, f"kernel vs reference mismatch: max abs err {max_err}"

    print("KERNEL_OK")
</pallas_src>

<mosaic_0001>
module attributes {stable_mosaic.version = 11 : i64} {
  func.func @_luna_block_kernel(%arg0: i32, %arg1: memref<1x16x16x128xbf16, #tpu.memory_space<vmem>>, %arg2: memref<3x384x128xbf16, #tpu.memory_space<vmem>>, %arg3: memref<1x128xf32, #tpu.memory_space<vmem>>, %arg4: memref<3x384x128xbf16, #tpu.memory_space<vmem>>, %arg5: memref<1x128xf32, #tpu.memory_space<vmem>>, %arg6: memref<1x64x128xf32, #tpu.memory_space<vmem>>, %arg7: memref<18x16x384xbf16, #tpu.memory_space<vmem>>, %arg8: memref<18x16x384xbf16, #tpu.memory_space<vmem>>) attributes {dimension_semantics = [#tpu.dimension_semantics<parallel>], iteration_bounds = array<i64: 2>, scalar_prefetch = 0 : i64, scratch_operands = 2 : i64, tpu.core_type = #tpu.core_type<tc>, window_params = [{transform_indices = @transform_0, window_bounds = array<i64: 1, 16, 16, 128>}, {pipeline_mode = #tpu.pipeline_mode<synchronous>, transform_indices = @transform_1, window_bounds = array<i64: 3, 384, 128>}, {pipeline_mode = #tpu.pipeline_mode<synchronous>, transform_indices = @transform_2, window_bounds = array<i64: 1, 128>}, {pipeline_mode = #tpu.pipeline_mode<synchronous>, transform_indices = @transform_3, window_bounds = array<i64: 3, 384, 128>}, {pipeline_mode = #tpu.pipeline_mode<synchronous>, transform_indices = @transform_4, window_bounds = array<i64: 1, 128>}, {transform_indices = @transform_5, window_bounds = array<i64: 1, 64, 128>}]} {
    %c0 = arith.constant 0 : index
    %c0_0 = arith.constant 0 : index
    %c0_1 = arith.constant 0 : index
    %c0_2 = arith.constant 0 : index
    %0 = vector.load %arg1[%c0, %c0_0, %c0_1, %c0_2] : memref<1x16x16x128xbf16, #tpu.memory_space<vmem>>, vector<1x16x16x128xbf16>
    %1 = vector.shape_cast %0 : vector<1x16x16x128xbf16> to vector<16x16x128xbf16>
    %cst = arith.constant 0.000000e+00 : bf16
    %2 = vector.broadcast %cst : bf16 to vector<1x16x384xbf16>
    %c0_3 = arith.constant 0 : index
    %c0_4 = arith.constant 0 : index
    %c0_5 = arith.constant 0 : index
    %3 = vector.load %arg7[%c0_3, %c0_4, %c0_5] : memref<18x16x384xbf16, #tpu.memory_space<vmem>>, vector<1x16x384xbf16>
    tpu.vector_store %arg7[%c0_3, %c0_4, %c0_5], %2 {strides = array<i32>} : memref<18x16x384xbf16, #tpu.memory_space<vmem>>, vector<1x16x384xbf16>,
    %cst_6 = arith.constant 0.000000e+00 : bf16
    %4 = vector.broadcast %cst_6 : bf16 to vector<1x16x384xbf16>
    %c17 = arith.constant 17 : index
    %c0_7 = arith.constant 0 : index
    %c0_8 = arith.constant 0 : index
    %5 = vector.load %arg7[%c17, %c0_7, %c0_8] : memref<18x16x384xbf16, #tpu.memory_space<vmem>>, vector<1x16x384xbf16>
    tpu.vector_store %arg7[%c17, %c0_7, %c0_8], %4 {strides = array<i32>} : memref<18x16x384xbf16, #tpu.memory_space<vmem>>, vector<1x16x384xbf16>,
    %cst_9 = arith.constant 0.000000e+00 : bf16
    %6 = vector.broadcast %cst_9 : bf16 to vector<16x1x128xbf16>
    %c1 = arith.constant 1 : index
    %c0_10 = arith.constant 0 : index
    %c0_11 = arith.constant 0 : index
    %7 = vector.load %arg7[%c1, %c0_10, %c0_11] : memref<18x16x384xbf16, #tpu.memory_space<vmem>>, vector<16x1x128xbf16>
    tpu.vector_store %arg7[%c1, %c0_10, %c0_11], %6 {strides = array<i32>} : memref<18x16x384xbf16, #tpu.memory_space<vmem>>, vector<16x1x128xbf16>,
    %cst_12 = arith.constant 0.000000e+00 : bf16
    %8 = vector.broadcast %cst_12 : bf16 to vector<16x1x128xbf16>
    %c1_13 = arith.constant 1 : index
    %c15 = arith.constant 15 : index
    %c256 = arith.constant 256 : index
    %9 = vector.load %arg7[%c1_13, %c15, %c256] : memref<18x16x384xbf16, #tpu.memory_space<vmem>>, vector<16x1x128xbf16>
    tpu.vector_store %arg7[%c1_13, %c15, %c256], %8 {strides = array<i32>} : memref<18x16x384xbf16, #tpu.memory_space<vmem>>, vector<16x1x128xbf16>,
    %10 = vector.extract_strided_slice %1 {offsets = [0, 0, 0], sizes = [16, 15, 128], strides = [1, 1, 1]} : vector<16x16x128xbf16> to vector<16x15x128xbf16>
    %c1_14 = arith.constant 1 : index
    %c1_15 = arith.constant 1 : index
    %c0_16 = arith.constant 0 : index
    %11 = vector.load %arg7[%c1_14, %c1_15, %c0_16] : memref<18x16x384xbf16, #tpu.memory_space<vmem>>, vector<16x15x128xbf16>
    tpu.vector_store %arg7[%c1_14, %c1_15, %c0_16], %10 {strides = array<i32>} : memref<18x16x384xbf16, #tpu.memory_space<vmem>>, vector<16x15x128xbf16>,
    %c1_17 = arith.constant 1 : index
    %c0_18 = arith.constant 0 : index
    %c128 = arith.constant 128 : index
    %12 = vector.load %arg7[%c1_17, %c0_18, %c128] : memref<18x16x384xbf16, #tpu.memory_space<vmem>>, vector<16x16x128xbf16>
    tpu.vector_store %arg7[%c1_17, %c0_18, %c128], %1 {strides = array<i32>} : memref<18x16x384xbf16, #tpu.memory_space<vmem>>, vector<16x16x128xbf16>,
    %13 = vector.extract_strided_slice %1 {offsets = [0, 1, 0], sizes = [16, 15, 128], strides = [1, 1, 1]} : vector<16x16x128xbf16> to vector<16x15x128xbf16>
    %c1_19 = arith.constant 1 : index
    %c0_20 = arith.constant 0 : index
    %c256_21 = arith.constant 256 : index
    %14 = vector.load %arg7[%c1_19, %c0_20, %c256_21] : memref<18x16x384xbf16, #tpu.memory_space<vmem>>, vector<16x15x128xbf16>
    tpu.vector_store %arg7[%c1_19, %c0_20, %c256_21], %13 {strides = array<i32>} : memref<18x16x384xbf16, #tpu.memory_space<vmem>>, vector<16x15x128xbf16>,
    %c0_22 = arith.constant 0 : index
    %c0_23 = arith.constant 0 : index
    %c0_24 = arith.constant 0 : index
    %15 = vector.load %arg7[%c0_22, %c0_23, %c0_24] : memref<18x16x384xbf16, #tpu.memory_space<vmem>>, vector<16x16x384xbf16>
    %16 = vector.shape_cast %15 : vector<16x16x384xbf16> to vector<256x384xbf16>
    %c0_25 = arith.constant 0 : index
    %c0_26 = arith.constant 0 : index
    %c0_27 = arith.constant 0 : index
    %17 = vector.load %arg2[%c0_25, %c0_26, %c0_27] : memref<3x384x128xbf16, #tpu.memory_space<vmem>>, vector<1x384x128xbf16>
    %18 = vector.shape_cast %17 : vector<1x384x128xbf16> to vector<384x128xbf16>
    %cst_28 = arith.constant dense<0.000000e+00> : vector<256x128xf32>
    %19 = tpu.matmul %16, %18, %cst_28 {dimension_numbers = #tpu.dot_dimension_numbers<[1], [0], [0], [1], [0, 0, 1, 1], [], []>} : vector<256x384xbf16>, vector<384x128xbf16>, vector<256x128xf32> -> vector<256x128xf32>
    %c1_29 = arith.constant 1 : index
    %c0_30 = arith.constant 0 : index
    %c0_31 = arith.constant 0 : index
    %20 = vector.load %arg7[%c1_29, %c0_30, %c0_31] : memref<18x16x384xbf16, #tpu.memory_space<vmem>>, vector<16x16x384xbf16>
    %21 = vector.shape_cast %20 : vector<16x16x384xbf16> to vector<256x384xbf16>
    %c1_32 = arith.constant 1 : index
    %c0_33 = arith.constant 0 : index
    %c0_34 = arith.constant 0 : index
    %22 = vector.load %arg2[%c1_32, %c0_33, %c0_34] : memref<3x384x128xbf16, #tpu.memory_space<vmem>>, vector<1x384x128xbf16>
    %23 = vector.shape_cast %22 : vector<1x384x128xbf16> to vector<384x128xbf16>
    %cst_35 = arith.constant dense<0.000000e+00> : vector<256x128xf32>
    %24 = tpu.matmul %21, %23, %cst_35 {dimension_numbers = #tpu.dot_dimension_numbers<[1], [0], [0], [1], [0, 0, 1, 1], [], []>} : vector<256x384xbf16>, vector<384x128xbf16>, vector<256x128xf32> -> vector<256x128xf32>
    %25 = arith.addf %19, %24 : vector<256x128xf32>
    %c2 = arith.constant 2 : index
    %c0_36 = arith.constant 0 : index
    %c0_37 = arith.constant 0 : index
    %26 = vector.load %arg7[%c2, %c0_36, %c0_37] : memref<18x16x384xbf16, #tpu.memory_space<vmem>>, vector<16x16x384xbf16>
    %27 = vector.shape_cast %26 : vector<16x16x384xbf16> to vector<256x384xbf16>
    %c2_38 = arith.constant 2 : index
    %c0_39 = arith.constant 0 : index
    %c0_40 = arith.constant 0 : index
    %28 = vector.load %arg2[%c2_38, %c0_39, %c0_40] : memref<3x384x128xbf16, #tpu.memory_space<vmem>>, vector<1x384x128xbf16>
    %29 = vector.shape_cast %28 : vector<1x384x128xbf16> to vector<384x128xbf16>
    %cst_41 = arith.constant dense<0.000000e+00> : vector<256x128xf32>
    %30 = tpu.matmul %27, %29, %cst_41 {dimension_numbers = #tpu.dot_dimension_numbers<[1], [0], [0], [1], [0, 0, 1, 1], [], []>} : vector<256x384xbf16>, vector<384x128xbf16>, vector<256x128xf32> -> vector<256x128xf32>
    %31 = arith.addf %25, %30 : vector<256x128xf32>
    %c0_42 = arith.constant 0 : index
    %c0_43 = arith.constant 0 : index
    %32 = vector.load %arg3[%c0_42, %c0_43] : memref<1x128xf32, #tpu.memory_space<vmem>>, vector<1x128xf32>
    %33 = vector.broadcast %32 : vector<1x128xf32> to vector<256x128xf32>
    %34 = arith.addf %31, %33 : vector<256x128xf32>
    %cst_44 = arith.constant 0.000000e+00 : f32
    %35 = vector.broadcast %cst_44 : f32 to vector<256x128xf32>
    %36 = arith.maximumf %34, %35 : vector<256x128xf32>
    %37 = arith.truncf %36 : vector<256x128xf32> to vector<256x128xbf16>
    %38 = vector.shape_cast %37 : vector<256x128xbf16> to vector<16x16x128xbf16>
    %cst_45 = arith.constant 0.000000e+00 : bf16
    %39 = vector.broadcast %cst_45 : bf16 to vector<1x16x384xbf16>
    %c0_46 = arith.constant 0 : index
    %c0_47 = arith.constant 0 : index
    %c0_48 = arith.constant 0 : index
    %40 = vector.load %arg8[%c0_46, %c0_47, %c0_48] : memref<18x16x384xbf16, #tpu.memory_space<vmem>>, vector<1x16x384xbf16>
    tpu.vector_store %arg8[%c0_46, %c0_47, %c0_48], %39 {strides = array<i32>} : memref<18x16x384xbf16, #tpu.memory_space<vmem>>, vector<1x16x384xbf16>,
    %cst_49 = arith.constant 0.000000e+00 : bf16
    %41 = vector.broadcast %cst_49 : bf16 to vector<1x16x384xbf16>
    %c17_50 = arith.constant 17 : index
    %c0_51 = arith.constant 0 : index
    %c0_52 = arith.constant 0 : index
    %42 = vector.load %arg8[%c17_50, %c0_51, %c0_52] : memref<18x16x384xbf16, #tpu.memory_space<vmem>>, vector<1x16x384xbf16>
    tpu.vector_store %arg8[%c17_50, %c0_51, %c0_52], %41 {strides = array<i32>} : memref<18x16x384xbf16, #tpu.memory_space<vmem>>, vector<1x16x384xbf16>,
    %cst_53 = arith.constant 0.000000e+00 : bf16
    %43 = vector.broadcast %cst_53 : bf16 to vector<16x1x128xbf16>
    %c1_54 = arith.constant 1 : index
    %c0_55 = arith.constant 0 : index
    %c0_56 = arith.constant 0 : index
    %44 = vector.load %arg8[%c1_54, %c0_55, %c0_56] : memref<18x16x384xbf16, #tpu.memory_space<vmem>>, vector<16x1x128xbf16>
    tpu.vector_store %arg8[%c1_54, %c0_55, %c0_56], %43 {strides = array<i32>} : memref<18x16x384xbf16, #tpu.memory_space<vmem>>, vector<16x1x128xbf16>,
    %cst_57 = arith.constant 0.000000e+00 : bf16
    %45 = vector.broadcast %cst_57 : bf16 to vector<16x1x128xbf16>
    %c1_58 = arith.constant 1 : index
    %c15_59 = arith.constant 15 : index
    %c256_60 = arith.constant 256 : index
    %46 = vector.load %arg8[%c1_58, %c15_59, %c256_60] : memref<18x16x384xbf16, #tpu.memory_space<vmem>>, vector<16x1x128xbf16>
    tpu.vector_store %arg8[%c1_58, %c15_59, %c256_60], %45 {strides = array<i32>} : memref<18x16x384xbf16, #tpu.memory_space<vmem>>, vector<16x1x128xbf16>,
    %47 = vector.extract_strided_slice %38 {offsets = [0, 0, 0], sizes = [16, 15, 128], strides = [1, 1, 1]} : vector<16x16x128xbf16> to vector<16x15x128xbf16>
    %c1_61 = arith.constant 1 : index
    %c1_62 = arith.constant 1 : index
    %c0_63 = arith.constant 0 : index
    %48 = vector.load %arg8[%c1_61, %c1_62, %c0_63] : memref<18x16x384xbf16, #tpu.memory_space<vmem>>, vector<16x15x128xbf16>
    tpu.vector_store %arg8[%c1_61, %c1_62, %c0_63], %47 {strides = array<i32>} : memref<18x16x384xbf16, #tpu.memory_space<vmem>>, vector<16x15x128xbf16>,
    %c1_64 = arith.constant 1 : index
    %c0_65 = arith.constant 0 : index
    %c128_66 = arith.constant 128 : index
    %49 = vector.load %arg8[%c1_64, %c0_65, %c128_66] : memref<18x16x384xbf16, #tpu.memory_space<vmem>>, vector<16x16x128xbf16>
    tpu.vector_store %arg8[%c1_64, %c0_65, %c128_66], %38 {strides = array<i32>} : memref<18x16x384xbf16, #tpu.memory_space<vmem>>, vector<16x16x128xbf16>,
    %50 = vector.extract_strided_slice %38 {offsets = [0, 1, 0], sizes = [16, 15, 128], strides = [1, 1, 1]} : vector<16x16x128xbf16> to vector<16x15x128xbf16>
    %c1_67 = arith.constant 1 : index
    %c0_68 = arith.constant 0 : index
    %c256_69 = arith.constant 256 : index
    %51 = vector.load %arg8[%c1_67, %c0_68, %c256_69] : memref<18x16x384xbf16, #tpu.memory_space<vmem>>, vector<16x15x128xbf16>
    tpu.vector_store %arg8[%c1_67, %c0_68, %c256_69], %50 {strides = array<i32>} : memref<18x16x384xbf16, #tpu.memory_space<vmem>>, vector<16x15x128xbf16>,
    %c0_70 = arith.constant 0 : index
    %c0_71 = arith.constant 0 : index
    %c0_72 = arith.constant 0 : index
    %52 = vector.load %arg8[%c0_70, %c0_71, %c0_72] : memref<18x16x384xbf16, #tpu.memory_space<vmem>>, vector<16x16x384xbf16>
    %53 = vector.shape_cast %52 : vector<16x16x384xbf16> to vector<256x384xbf16>
    %c0_73 = arith.constant 0 : index
    %c0_74 = arith.constant 0 : index
    %c0_75 = arith.constant 0 : index
    %54 = vector.load %arg4[%c0_73, %c0_74, %c0_75] : memref<3x384x128xbf16, #tpu.memory_space<vmem>>, vector<1x384x128xbf16>
    %55 = vector.shape_cast %54 : vector<1x384x128xbf16> to vector<384x128xbf16>
    %cst_76 = arith.constant dense<0.000000e+00> : vector<256x128xf32>
    %56 = tpu.matmul %53, %55, %cst_76 {dimension_numbers = #tpu.dot_dimension_numbers<[1], [0], [0], [1], [0, 0, 1, 1], [], []>} : vector<256x384xbf16>, vector<384x128xbf16>, vector<256x128xf32> -> vector<256x128xf32>
    %c1_77 = arith.constant 1 : index
    %c0_78 = arith.constant 0 : index
    %c0_79 = arith.constant 0 : index
    %57 = vector.load %arg8[%c1_77, %c0_78, %c0_79] : memref<18x16x384xbf16, #tpu.memory_space<vmem>>, vector<16x16x384xbf16>
    %58 = vector.shape_cast %57 : vector<16x16x384xbf16> to vector<256x384xbf16>
    %c1_80 = arith.constant 1 : index
    %c0_81 = arith.constant 0 : index
    %c0_82 = arith.constant 0 : index
    %59 = vector.load %arg4[%c1_80, %c0_81, %c0_82] : memref<3x384x128xbf16, #tpu.memory_space<vmem>>, vector<1x384x128xbf16>
    %60 = vector.shape_cast %59 : vector<1x384x128xbf16> to vector<384x128xbf16>
    %cst_83 = arith.constant dense<0.000000e+00> : vector<256x128xf32>
    %61 = tpu.matmul %58, %60, %cst_83 {dimension_numbers = #tpu.dot_dimension_numbers<[1], [0], [0], [1], [0, 0, 1, 1], [], []>} : vector<256x384xbf16>, vector<384x128xbf16>, vector<256x128xf32> -> vector<256x128xf32>
    %62 = arith.addf %56, %61 : vector<256x128xf32>
    %c2_84 = arith.constant 2 : index
    %c0_85 = arith.constant 0 : index
    %c0_86 = arith.constant 0 : index
    %63 = vector.load %arg8[%c2_84, %c0_85, %c0_86] : memref<18x16x384xbf16, #tpu.memory_space<vmem>>, vector<16x16x384xbf16>
    %64 = vector.shape_cast %63 : vector<16x16x384xbf16> to vector<256x384xbf16>
    %c2_87 = arith.constant 2 : index
    %c0_88 = arith.constant 0 : index
    %c0_89 = arith.constant 0 : index
    %65 = vector.load %arg4[%c2_87, %c0_88, %c0_89] : memref<3x384x128xbf16, #tpu.memory_space<vmem>>, vector<1x384x128xbf16>
    %66 = vector.shape_cast %65 : vector<1x384x128xbf16> to vector<384x128xbf16>
    %cst_90 = arith.constant dense<0.000000e+00> : vector<256x128xf32>
    %67 = tpu.matmul %64, %66, %cst_90 {dimension_numbers = #tpu.dot_dimension_numbers<[1], [0], [0], [1], [0, 0, 1, 1], [], []>} : vector<256x384xbf16>, vector<384x128xbf16>, vector<256x128xf32> -> vector<256x128xf32>
    %68 = arith.addf %62, %67 : vector<256x128xf32>
    %c0_91 = arith.constant 0 : index
    %c0_92 = arith.constant 0 : index
    %69 = vector.load %arg5[%c0_91, %c0_92] : memref<1x128xf32, #tpu.memory_space<vmem>>, vector<1x128xf32>
    %70 = vector.broadcast %69 : vector<1x128xf32> to vector<256x128xf32>
    %71 = arith.addf %68, %70 : vector<256x128xf32>
    %cst_93 = arith.constant 0.000000e+00 : f32
    %72 = vector.broadcast %cst_93 : f32 to vector<256x128xf32>
    %73 = arith.maximumf %71, %72 : vector<256x128xf32>
    %74 = vector.shape_cast %73 : vector<256x128xf32> to vector<8x32x128xf32>
    %75 = vector.extract_strided_slice %74 {offsets = [0, 0, 0], sizes = [8, 16, 128], strides = [1, 1, 1]} : vector<8x32x128xf32> to vector<8x16x128xf32>
    %76 = vector.extract_strided_slice %74 {offsets = [0, 16, 0], sizes = [8, 16, 128], strides = [1, 1, 1]} : vector<8x32x128xf32> to vector<8x16x128xf32>
    %77 = arith.maximumf %75, %76 : vector<8x16x128xf32>
    %78 = vector.shape_cast %77 : vector<8x16x128xf32> to vector<64x2x128xf32>
    %79 = vector.extract_strided_slice %78 {offsets = [0, 0, 0], sizes = [64, 1, 128], strides = [1, 1, 1]} : vector<64x2x128xf32> to vector<64x1x128xf32>
    %80 = vector.extract_strided_slice %78 {offsets = [0, 1, 0], sizes = [64, 1, 128], strides = [1, 1, 1]} : vector<64x2x128xf32> to vector<64x1x128xf32>
    %81 = arith.maximumf %79, %80 : vector<64x1x128xf32>
    %82 = vector.shape_cast %81 : vector<64x1x128xf32> to vector<64x128xf32>
    %c0_94 = arith.constant 0 : index
    %c0_95 = arith.constant 0 : index
    %c0_96 = arith.constant 0 : index
    %83 = vector.load %arg6[%c0_94, %c0_95, %c0_96] : memref<1x64x128xf32, #tpu.memory_space<vmem>>, vector<1x64x128xf32>
    %84 = vector.shape_cast %83 : vector<1x64x128xf32> to vector<64x128xf32>
    %85 = vector.shape_cast %82 : vector<64x128xf32> to vector<1x64x128xf32>
    tpu.vector_store %arg6[%c0_94, %c0_95, %c0_96], %85 {strides = array<i32>} : memref<1x64x128xf32, #tpu.memory_space<vmem>>, vector<1x64x128xf32>,
    return
  }
  func.func @transform_0(%arg0: i32) -> (i32, i32, i32, i32) {
    %c0_i32 = arith.constant 0 : i32
    %c0_i32_0 = arith.constant 0 : i32
    %c0_i32_1 = arith.constant 0 : i32
    %c0_i32_2 = arith.constant 0 : i32
    return %arg0, %c0_i32, %c0_i32_0, %c0_i32_1 : i32, i32, i32, i32
  }
  func.func @transform_1(%arg0: i32) -> (i32, i32, i32) {
    %c0_i32 = arith.constant 0 : i32
    %c0_i32_0 = arith.constant 0 : i32
    %c0_i32_1 = arith.constant 0 : i32
    %c0_i32_2 = arith.constant 0 : i32
    return %c0_i32, %c0_i32_0, %c0_i32_1 : i32, i32, i32
  }
  func.func @transform_2(%arg0: i32) -> (i32, i32) {
    %c0_i32 = arith.constant 0 : i32
    %c0_i32_0 = arith.constant 0 : i32
    %c0_i32_1 = arith.constant 0 : i32
    return %c0_i32, %c0_i32_0 : i32, i32
  }
  func.func @transform_3(%arg0: i32) -> (i32, i32, i32) {
    %c0_i32 = arith.constant 0 : i32
    %c0_i32_0 = arith.constant 0 : i32
    %c0_i32_1 = arith.constant 0 : i32
    %c0_i32_2 = arith.constant 0 : i32
    return %c0_i32, %c0_i32_0, %c0_i32_1 : i32, i32, i32
  }
  func.func @transform_4(%arg0: i32) -> (i32, i32) {
    %c0_i32 = arith.constant 0 : i32
    %c0_i32_0 = arith.constant 0 : i32
    %c0_i32_1 = arith.constant 0 : i32
    return %c0_i32, %c0_i32_0 : i32, i32
  }
  func.func @transform_5(%arg0: i32) -> (i32, i32, i32) {
    %c0_i32 = arith.constant 0 : i32
    %c0_i32_0 = arith.constant 0 : i32
    %c0_i32_1 = arith.constant 0 : i32
    return %arg0, %c0_i32, %c0_i32_0 : i32, i32, i32
  }
}

</mosaic_0001>

<llo_original>
// kernel: luna_block_forward.1
$region0: #{luna_block_forward.1}
  #allocation0 [shape = 'u32[]', space=smem, size = 0x4, offset = 0x4, fixed_abs, tag = 'smem constant byte address 0x4 - core index']
  #allocation1 [shape = 'u32[144,128]{1,0:T(1,128)}', space=vmem, size = 0x12000, scoped, tag = 'internal scratch']
  #allocation2 [shape = 'bf16[18,16,384]{2,1,0:T(16,128)(2,1)}', space=vmem, size = 0x36000, scoped, tag = 'scratch operand']
  #allocation3 [shape = 'bf16[18,16,384]{2,1,0:T(16,128)(2,1)}', space=vmem, size = 0x36000, scoped, tag = 'scratch operand']
  %s0 = inlined_call_operand.vmem [shape: bf16[2,16,16,128], index: 0, kind: input, shape index: {}]
  %s1 = inlined_call_operand.vmem [shape: bf16[3,384,128], index: 1, kind: input, shape index: {}]
  %s2 = inlined_call_operand.vmem [shape: f32[1,128], index: 2, kind: input, shape index: {}]
  %s3 = inlined_call_operand.vmem [shape: bf16[3,384,128], index: 3, kind: input, shape index: {}]
  %s4 = inlined_call_operand.vmem [shape: f32[1,128], index: 4, kind: input, shape index: {}]
  %s5 = inlined_call_operand.vmem [shape: f32[2,64,128], index: 5, kind: output, shape index: {}]
  %s6 = sld [smem:[#allocation0]]
  $region53: #{luna_block_forward.1} parent=0
    _
  %s8 = ssub.s32 1, %s6
  %s9 = scalar_select 0, %s8, %s6
  loop: start=0, step=1, limit=4
  $region2: #{luna_block_forward.1} parent=0 // loop_pre_header
    _
  $region3: #{luna_block_forward.1} parent=0 // loop_header
    %s11 = sphi 0, %s15
    %p12 = scmp.ge.s32.totalorder %s11, 4
    %s21 = sphi 0, %s23
    %s24 = sphi 0, %s21
    %s25 = sphi 0, %s24
    %s41 = sphi 0, %s25
    %s45 = sphi 0, %s45
    %s47 = sphi 0, %s45
    %s48 = sphi 0, %s47
    %s62 = sphi 0, %s48
    %s66 = sphi 0, %s66
    %s68 = sphi 0, %s66
    %s69 = sphi 0, %s68
    %s83 = sphi 0, %s69
    %s87 = sphi 0, %s87
    %s89 = sphi 0, %s87
    %s90 = sphi 0, %s89
    %s104 = sphi 0, %s90
    %s108 = sphi 0, %s108
    %s110 = sphi 0, %s108
    %s111 = sphi 0, %s110
    %s125 = sphi 0, %s111
    %s131 = sphi 0, %s133
    %s134 = sphi 0, %s131
    %s135 = sphi 0, %s134
    %s151 = sphi 0, %s135
  $region4: #{luna_block_forward.1} parent=0 // loop_header_branch
    %14 = sbr.rel (%p12) target = $region8
  $region5: #{luna_block_forward.1} parent=0 // loop_body
    %s16 = ssub.s32 %s11, 1
    %s17 = ssub.s32 %s11, 2
    %s18 = sadd.s32 %s11, 1
    %s19 = ssub.s32 %s11, %s18
    %p20 = scmp.eq.s32.totalorder %s19, 0
    %s22 = sadd.s32 %s21, 1
    %s23 = scalar_select %p20, %s21, %s22
    %p26 = pneg %p20
    %p27 = scmp.eq.s32.totalorder %s11, 1
    %p28 = por %p26, %p27
    %p29 = scmp.ne.s32.totalorder %s21, %s24
    %p30 = scmp.eq.s32.totalorder %s11, 0
    %p31 = por %p29, %p30
    %p32 = scmp.ne.s32.totalorder %s21, %s24
    %p33 = scmp.eq.s32.totalorder %s16, 1
    %p34 = por %p32, %p33
    %p35 = scmp.ne.s32.totalorder %s24, %s25
    %p36 = scmp.eq.s32.totalorder %s16, 0
    %p37 = por %p35, %p36
    %p38 = scmp.ne.s32.totalorder %s24, %s25
    %p39 = scmp.eq.s32.totalorder %s17, 1
    %p40 = por %p38, %p39
    %p42 = scmp.ne.s32.totalorder %s25, %s41
    %p43 = scmp.eq.s32.totalorder %s17, 0
    %p44 = por %p42, %p43
    %s46 = sadd.s32 %s45, 1
    %p49 = scmp.eq.s32.totalorder %s11, 1
    %p50 = scmp.ne.s32.totalorder %s45, %s47
    %p51 = scmp.eq.s32.totalorder %s11, 0
    %p52 = por %p50, %p51
    %p53 = scmp.ne.s32.totalorder %s45, %s47
    %p54 = scmp.eq.s32.totalorder %s16, 1
    %p55 = por %p53, %p54
    %p56 = scmp.ne.s32.totalorder %s47, %s48
    %p57 = scmp.eq.s32.totalorder %s16, 0
    %p58 = por %p56, %p57
    %p59 = scmp.ne.s32.totalorder %s47, %s48
    %p60 = scmp.eq.s32.totalorder %s17, 1
    %p61 = por %p59, %p60
    %p63 = scmp.ne.s32.totalorder %s48, %s62
    %p64 = scmp.eq.s32.totalorder %s17, 0
    %p65 = por %p63, %p64
    %s67 = sadd.s32 %s66, 1
    %p70 = scmp.eq.s32.totalorder %s11, 1
    %p71 = scmp.ne.s32.totalorder %s66, %s68
    %p72 = scmp.eq.s32.totalorder %s11, 0
    %p73 = por %p71, %p72
    %p74 = scmp.ne.s32.totalorder %s66, %s68
    %p75 = scmp.eq.s32.totalorder %s16, 1
    %p76 = por %p74, %p75
    %p77 = scmp.ne.s32.totalorder %s68, %s69
    %p78 = scmp.eq.s32.totalorder %s16, 0
    %p79 = por %p77, %p78
    %p80 = scmp.ne.s32.totalorder %s68, %s69
    %p81 = scmp.eq.s32.totalorder %s17, 1
    %p82 = por %p80, %p81
    %p84 = scmp.ne.s32.totalorder %s69, %s83
    %p85 = scmp.eq.s32.totalorder %s17, 0
    %p86 = por %p84, %p85
    %s88 = sadd.s32 %s87, 1
    %p91 = scmp.eq.s32.totalorder %s11, 1
    %p92 = scmp.ne.s32.totalorder %s87, %s89
    %p93 = scmp.eq.s32.totalorder %s11, 0
    %p94 = por %p92, %p93
    %p95 = scmp.ne.s32.totalorder %s87, %s89
    %p96 = scmp.eq.s32.totalorder %s16, 1
    %p97 = por %p95, %p96
    %p98 = scmp.ne.s32.totalorder %s89, %s90
    %p99 = scmp.eq.s32.totalorder %s16, 0
    %p100 = por %p98, %p99
    %p101 = scmp.ne.s32.totalorder %s89, %s90
    %p102 = scmp.eq.s32.totalorder %s17, 1
    %p103 = por %p101, %p102
    %p105 = scmp.ne.s32.totalorder %s90, %s104
    %p106 = scmp.eq.s32.totalorder %s17, 0
    %p107 = por %p105, %p106
    %s109 = sadd.s32 %s108, 1
    %p112 = scmp.eq.s32.totalorder %s11, 1
    %p113 = scmp.ne.s32.totalorder %s108, %s110
    %p114 = scmp.eq.s32.totalorder %s11, 0
    %p115 = por %p113, %p114
    %p116 = scmp.ne.s32.totalorder %s108, %s110
    %p117 = scmp.eq.s32.totalorder %s16, 1
    %p118 = por %p116, %p117
    %p119 = scmp.ne.s32.totalorder %s110, %s111
    %p120 = scmp.eq.s32.totalorder %s16, 0
    %p121 = por %p119, %p120
    %p122 = scmp.ne.s32.totalorder %s110, %s111
    %p123 = scmp.eq.s32.totalorder %s17, 1
    %p124 = por %p122, %p123
    %p126 = scmp.ne.s32.totalorder %s111, %s125
    %p127 = scmp.eq.s32.totalorder %s17, 0
    %p128 = por %p126, %p127
    %s129 = ssub.s32 %s11, %s18
    %p130 = scmp.eq.s32.totalorder %s129, 0
    %s132 = sadd.s32 %s131, 1
    %s133 = scalar_select %p130, %s131, %s132
    %p136 = pneg %p130
    %p137 = scmp.eq.s32.totalorder %s11, 1
    %p138 = por %p136, %p137
    %p139 = scmp.ne.s32.totalorder %s131, %s134
    %p140 = scmp.eq.s32.totalorder %s11, 0
    %p141 = por %p139, %p140
    %p142 = scmp.ne.s32.totalorder %s131, %s134
    %p143 = scmp.eq.s32.totalorder %s16, 1
    %p144 = por %p142, %p143
    %p145 = scmp.ne.s32.totalorder %s134, %s135
    %p146 = scmp.eq.s32.totalorder %s16, 0
    %p147 = por %p145, %p146
    %p148 = scmp.ne.s32.totalorder %s134, %s135
    %p149 = scmp.eq.s32.totalorder %s17, 1
    %p150 = por %p148, %p149
    %p152 = scmp.ne.s32.totalorder %s135, %s151
    %p153 = scmp.eq.s32.totalorder %s17, 0
    %p154 = por %p152, %p153
    %p155 = scmp.le.s32.totalorder 1, %s11
    %p156 = scmp.lt.s32.totalorder %s11, 3
    %p157 = pnand %p155, %p156
    %p158 = pneg %p157
    // Predicated region
    $region9: #{luna_block_forward.1} parent=5 // pred_check
      _
    $region10: #{luna_block_forward.1} parent=5 // pred_check_branch
      %160 = sbr.rel (%p157) target = $region12
    $region11: #{luna_block_forward.1} parent=5 // pred_region
      %s161 = ssub.s32 %s11, 1
      // Predicated region
      $region13: #{luna_block_forward.1} parent=11 // pred_check
        %p162 = pneg %p58
      $region14: #{luna_block_forward.1} parent=11 // pred_check_branch
        %164 = sbr.rel (%p162) target = $region16
      $region15: #{luna_block_forward.1} parent=11 // pred_region
        _
      $region16: #{luna_block_forward.1} parent=11 // pred_fallthru
        _
      // Predicated region
      $region17: #{luna_block_forward.1} parent=11 // pred_check
        %p165 = pneg %p79
      $region18: #{luna_block_forward.1} parent=11 // pred_check_branch
        %167 = sbr.rel (%p165) target = $region20
      $region19: #{luna_block_forward.1} parent=11 // pred_region
        _
      $region20: #{luna_block_forward.1} parent=11 // pred_fallthru
        _
      // Predicated region
      $region21: #{luna_block_forward.1} parent=11 // pred_check
        %p168 = pneg %p100
      $region22: #{luna_block_forward.1} parent=11 // pred_check_branch
        %170 = sbr.rel (%p168) target = $region24
      $region23: #{luna_block_forward.1} parent=11 // pred_region
        _
      $region24: #{luna_block_forward.1} parent=11 // pred_fallthru
        _
      // Predicated region
      $region25: #{luna_block_forward.1} parent=11 // pred_check
        %p171 = pneg %p121
      $region26: #{luna_block_forward.1} parent=11 // pred_check_branch
        %173 = sbr.rel (%p171) target = $region28
      $region27: #{luna_block_forward.1} parent=11 // pred_region
        _
      $region28: #{luna_block_forward.1} parent=11 // pred_fallthru
        _
    $region12: #{luna_block_forward.1} parent=5 // pred_fallthru
      _
    %p174 = scmp.lt.s32.totalorder %s11, 2
    // Predicated region
    $region29: #{luna_block_forward.1} parent=5 // pred_check
      %p175 = pneg %p174
    $region30: #{luna_block_forward.1} parent=5 // pred_check_branch
      %177 = sbr.rel (%p175) target = $region32
    $region31: #{luna_block_forward.1} parent=5 // pred_region
      // Predicated region
      $region33: #{luna_block_forward.1} parent=31 // pred_check
        %p178 = pneg %p31
      $region34: #{luna_block_forward.1} parent=31 // pred_check_branch
        %180 = sbr.rel (%p178) target = $region36
      $region35: #{luna_block_forward.1} parent=31 // pred_region
        %p181 = scmp.lt.s32.totalorder %s11, 1
        %s182 = scalar_select %p181, %s11, 1
        %s183 = smul.addr %s182, 32
        %s184 = smul.addr %s183, 4
        %s185 = scalar_lea.vmem %s0, %s184
      $region36: #{luna_block_forward.1} parent=31 // pred_fallthru
        _
    $region32: #{luna_block_forward.1} parent=5 // pred_fallthru
      _
    %p186 = scmp.le.s32.totalorder 1, %s11
    %p187 = scmp.lt.s32.totalorder %s11, 3
    %p188 = pnand %p186, %p187
    %p189 = pneg %p188
    // Predicated region
    $region37: #{luna_block_forward.1} parent=5 // pred_check
      _
    $region38: #{luna_block_forward.1} parent=5 // pred_check_branch
      %191 = sbr.rel (%p188) target = $region40
    $region39: #{luna_block_forward.1} parent=5 // pred_region
      %s192 = ssub.s32 %s11, 1
      %p193 = scmp.lt.s32.totalorder %s16, 1
      %s194 = scalar_select %p193, %s16, 1
      %s195 = smul.addr %s194, 32
      %s196 = smul.addr %s195, 4
      %s197 = scalar_lea.vmem %s0, %s196
      %p198 = pneg %p37
      %p199 = pneg %p34
      %p200 = pneg %p58
      %p201 = pneg %p55
      %p202 = pneg %p79
      %p203 = pneg %p76
      %p204 = pneg %p100
      %p205 = pneg %p97
      %p206 = pneg %p121
      %p207 = pneg %p118
      %p208 = pneg %p147
      %p209 = pneg %p144
      %p210 = scmp.lt.s32.totalorder %s16, 1
      %s211 = scalar_select %p210, %s16, 1
      %s212 = smul.addr %s211, 8
      %s213 = smul.addr %s212, 8
      %s214 = scalar_lea.vmem %s5, %s213
      %p215 = scmp.lt.s32.totalorder %s16, 1
      %s216 = scalar_select %p215, %s16, 1
      %s217 = smul.addr %s216, 32
      %s218 = smul.addr %s217, 4
      %s219 = scalar_lea.vmem %s0, %s218
      %p220 = scmp.lt.s32.totalorder %s16, 1
      %s221 = scalar_select %p220, %s16, 1
      %s222 = smul.addr %s221, 8
      %s223 = smul.addr %s222, 8
      %s224 = scalar_lea.vmem %s5, %s223
      %v226 = vld [vmem:[%s219] sm:$0xf]
      %v227 = vld [vmem:[%s219 + $0x4] sm:$0xf]
      %v228 = vld [vmem:[%s219 + $0x8] sm:$0xf]
      %v229 = vld [vmem:[%s219 + $0xc] sm:$0xf]
      %v230 = vld [vmem:[%s219 + $0x10] sm:$0xf]
      %v231 = vld [vmem:[%s219 + $0x14] sm:$0xf]
      %v232 = vld [vmem:[%s219 + $0x18] sm:$0xf]
      %v233 = vld [vmem:[%s219 + $0x1c] sm:$0xf]
      %v234 = vld [vmem:[%s219 + $0x20] sm:$0xf]
      %v235 = vld [vmem:[%s219 + $0x24] sm:$0xf]
      %v236 = vld [vmem:[%s219 + $0x28] sm:$0xf]
      %v237 = vld [vmem:[%s219 + $0x2c] sm:$0xf]
      %v238 = vld [vmem:[%s219 + $0x30] sm:$0xf]
      %v239 = vld [vmem:[%s219 + $0x34] sm:$0xf]
      %v240 = vld [vmem:[%s219 + $0x38] sm:$0xf]
      %v241 = vld [vmem:[%s219 + $0x3c] sm:$0xf]
      %v242 = vld [vmem:[%s219 + $0x40] sm:$0xf]
      %v243 = vld [vmem:[%s219 + $0x44] sm:$0xf]
      %v244 = vld [vmem:[%s219 + $0x48] sm:$0xf]
      %v245 = vld [vmem:[%s219 + $0x4c] sm:$0xf]
      %v246 = vld [vmem:[%s219 + $0x50] sm:$0xf]
      %v247 = vld [vmem:[%s219 + $0x54] sm:$0xf]
      %v248 = vld [vmem:[%s219 + $0x58] sm:$0xf]
      %v249 = vld [vmem:[%s219 + $0x5c] sm:$0xf]
      %v250 = vld [vmem:[%s219 + $0x60] sm:$0xf]
      %v251 = vld [vmem:[%s219 + $0x64] sm:$0xf]
      %v252 = vld [vmem:[%s219 + $0x68] sm:$0xf]
      %v253 = vld [vmem:[%s219 + $0x6c] sm:$0xf]
      %v254 = vld [vmem:[%s219 + $0x70] sm:$0xf]
      %v255 = vld [vmem:[%s219 + $0x74] sm:$0xf]
      %v256 = vld [vmem:[%s219 + $0x78] sm:$0xf]
      %v257 = vld [vmem:[%s219 + $0x7c] sm:$0xf]
      %258 = vst [vmem:[#allocation2] sm:$0xff] 0
      %259 = vst [vmem:[#allocation2 + $0x8] sm:$0xff] 0
      %260 = vst [vmem:[#allocation2 + $0x10] sm:$0xff] 0
      %s261 = scalar_lea.vmem [#allocation2], 408
      %262 = vst [vmem:[%s261] sm:$0xff] 0
      %263 = vst [vmem:[%s261 + $0x8] sm:$0xff] 0
      %264 = vst [vmem:[%s261 + $0x10] sm:$0xff] 0
      %s265 = scalar_lea.vmem [#allocation2], 24
      %vm266 = vcmask 1040384
      %vm267 = vsmask.f32 256
      %vm268 = vmand %vm266, %vm267
      %v269 = vld [vmem:[%s265] sm:$0x1]
      %v270 = vsel %vm268, 0, %v269
      %271 = vst [vmem:[%s265] sm:$0x1] %v270
      %v272 = vld [vmem:[%s265 + $0x18] sm:$0x1]
      %v273 = vsel %vm268, 0, %v272
      %274 = vst [vmem:[%s265 + $0x18] sm:$0x1] %v273
      %v275 = vld [vmem:[%s265 + $0x30] sm:$0x1]
      %v276 = vsel %vm268, 0, %v275
      %277 = vst [vmem:[%s265 + $0x30] sm:$0x1] %v276
      %v278 = vld [vmem:[%s265 + $0x48] sm:$0x1]
      %v279 = vsel %vm268, 0, %v278
      %280 = vst [vmem:[%s265 + $0x48] sm:$0x1] %v279
      %v281 = vld [vmem:[%s265 + $0x60] sm:$0x1]
      %v282 = vsel %vm268, 0, %v281
      %283 = vst [vmem:[%s265 + $0x60] sm:$0x1] %v282
      %v284 = vld [vmem:[%s265 + $0x78] sm:$0x1]
      %v285 = vsel %vm268, 0, %v284
      %286 = vst [vmem:[%s265 + $0x78] sm:$0x1] %v285
      %v287 = vld [vmem:[%s265 + $0x90] sm:$0x1]
      %v288 = vsel %vm268, 0, %v287
      %289 = vst [vmem:[%s265 + $0x90] sm:$0x1] %v288
      %v290 = vld [vmem:[%s265 + $0xa8] sm:$0x1]
      %v291 = vsel %vm268, 0, %v290
      %292 = vst [vmem:[%s265 + $0xa8] sm:$0x1] %v291
      %v293 = vld [vmem:[%s265 + $0xc0] sm:$0x1]
      %v294 = vsel %vm268, 0, %v293
      %295 = vst [vmem:[%s265 + $0xc0] sm:$0x1] %v294
      %v296 = vld [vmem:[%s265 + $0xd8] sm:$0x1]
      %v297 = vsel %vm268, 0, %v296
      %298 = vst [vmem:[%s265 + $0xd8] sm:$0x1] %v297
      %v299 = vld [vmem:[%s265 + $0xf0] sm:$0x1]
      %v300 = vsel %vm268, 0, %v299
      %301 = vst [vmem:[%s265 + $0xf0] sm:$0x1] %v300
      %v302 = vld [vmem:[%s265 + $0x108] sm:$0x1]
      %v303 = vsel %vm268, 0, %v302
      %304 = vst [vmem:[%s265 + $0x108] sm:$0x1] %v303
      %v305 = vld [vmem:[%s265 + $0x120] sm:$0x1]
      %v306 = vsel %vm268, 0, %v305
      %307 = vst [vmem:[%s265 + $0x120] sm:$0x1] %v306
      %v308 = vld [vmem:[%s265 + $0x138] sm:$0x1]
      %v309 = vsel %vm268, 0, %v308
      %310 = vst [vmem:[%s265 + $0x138] sm:$0x1] %v309
      %v311 = vld [vmem:[%s265 + $0x150] sm:$0x1]
      %v312 = vsel %vm268, 0, %v311
      %313 = vst [vmem:[%s265 + $0x150] sm:$0x1] %v312
      %v314 = vld [vmem:[%s265 + $0x168] sm:$0x1]
      %v315 = vsel %vm268, 0, %v314
      %316 = vst [vmem:[%s265 + $0x168] sm:$0x1] %v315
      %vm317 = vcmask 1047559
      %vm318 = vsmask.f32 7966
      %vm319 = vmand %vm317, %vm318
      %v320 = vld [vmem:[%s265 + $0x10] sm:$0x80]
      %v321 = vsel %vm319, 0, %v320
      %322 = vst [vmem:[%s265 + $0x10] sm:$0x80] %v321
      %v323 = vld [vmem:[%s265 + $0x28] sm:$0x80]
      %v324 = vsel %vm319, 0, %v323
      %325 = vst [vmem:[%s265 + $0x28] sm:$0x80] %v324
      %v326 = vld [vmem:[%s265 + $0x40] sm:$0x80]
      %v327 = vsel %vm319, 0, %v326
      %328 = vst [vmem:[%s265 + $0x40] sm:$0x80] %v327
      %v329 = vld [vmem:[%s265 + $0x58] sm:$0x80]
      %v330 = vsel %vm319, 0, %v329
      %331 = vst [vmem:[%s265 + $0x58] sm:$0x80] %v330
      %v332 = vld [vmem:[%s265 + $0x70] sm:$0x80]
      %v333 = vsel %vm319, 0, %v332
      %334 = vst [vmem:[%s265 + $0x70] sm:$0x80] %v333
      %v335 = vld [vmem:[%s265 + $0x88] sm:$0x80]
      %v336 = vsel %vm319, 0, %v335
      %337 = vst [vmem:[%s265 + $0x88] sm:$0x80] %v336
      %v338 = vld [vmem:[%s265 + $0xa0] sm:$0x80]
      %v339 = vsel %vm319, 0, %v338
      %340 = vst [vmem:[%s265 + $0xa0] sm:$0x80] %v339
      %v341 = vld [vmem:[%s265 + $0xb8] sm:$0x80]
      %v342 = vsel %vm319, 0, %v341
      %343 = vst [vmem:[%s265 + $0xb8] sm:$0x80] %v342
      %v344 = vld [vmem:[%s265 + $0xd0] sm:$0x80]
      %v345 = vsel %vm319, 0, %v344
      %346 = vst [vmem:[%s265 + $0xd0] sm:$0x80] %v345
      %v347 = vld [vmem:[%s265 + $0xe8] sm:$0x80]
      %v348 = vsel %vm319, 0, %v347
      %349 = vst [vmem:[%s265 + $0xe8] sm:$0x80] %v348
      %v350 = vld [vmem:[%s265 + $0x100] sm:$0x80]
      %v351 = vsel %vm319, 0, %v350
      %352 = vst [vmem:[%s265 + $0x100] sm:$0x80] %v351
      %v353 = vld [vmem:[%s265 + $0x118] sm:$0x80]
      %v354 = vsel %vm319, 0, %v353
      %355 = vst [vmem:[%s265 + $0x118] sm:$0x80] %v354
      %v356 = vld [vmem:[%s265 + $0x130] sm:$0x80]
      %v357 = vsel %vm319, 0, %v356
      %358 = vst [vmem:[%s265 + $0x130] sm:$0x80] %v357
      %v359 = vld [vmem:[%s265 + $0x148] sm:$0x80]
      %v360 = vsel %vm319, 0, %v359
      %361 = vst [vmem:[%s265 + $0x148] sm:$0x80] %v360
      %v362 = vld [vmem:[%s265 + $0x160] sm:$0x80]
      %v363 = vsel %vm319, 0, %v362
      %364 = vst [vmem:[%s265 + $0x160] sm:$0x80] %v363
      %v365 = vld [vmem:[%s265 + $0x178] sm:$0x80]
      %v366 = vsel %vm319, 0, %v365
      %367 = vst [vmem:[%s265 + $0x178] sm:$0x80] %v366
      %v400 = vunpack.c.l.b16 %v226
      %v401 = vunpack.c.l.b16 %v227
      %v402 = vunpack.c.l.b16 %v228
      %v403 = vunpack.c.l.b16 %v229
      %v404 = vunpack.c.l.b16 %v230
      %v405 = vunpack.c.l.b16 %v231
      %v406 = vunpack.c.l.b16 %v232
      %v407 = vunpack.c.l.b16 %v233
      %v408 = vunpack.c.l.b16 %v234
      %v409 = vunpack.c.l.b16 %v235
      %v410 = vunpack.c.l.b16 %v236
      %v411 = vunpack.c.l.b16 %v237
      %v412 = vunpack.c.l.b16 %v238
      %v413 = vunpack.c.l.b16 %v239
      %v414 = vunpack.c.l.b16 %v240
      %v415 = vunpack.c.l.b16 %v241
      %v416 = vunpack.c.l.b16 %v242
      %v417 = vunpack.c.l.b16 %v243
      %v418 = vunpack.c.l.b16 %v244
      %v419 = vunpack.c.l.b16 %v245
      %v420 = vunpack.c.l.b16 %v246
      %v421 = vunpack.c.l.b16 %v247
      %v422 = vunpack.c.l.b16 %v248
      %v423 = vunpack.c.l.b16 %v249
      %v424 = vunpack.c.l.b16 %v250
      %v425 = vunpack.c.l.b16 %v251
      %v426 = vunpack.c.l.b16 %v252
      %v427 = vunpack.c.l.b16 %v253
      %v428 = vunpack.c.l.b16 %v254
      %v429 = vunpack.c.l.b16 %v255
      %v430 = vunpack.c.l.b16 %v256
      %v431 = vunpack.c.l.b16 %v257
      %v432 = vpack.c.b16 %v401, %v400
      %v433 = vpack.c.b16 %v403, %v402
      %v434 = vpack.c.b16 %v405, %v404
      %v435 = vpack.c.b16 %v407, %v406
      %v436 = vpack.c.b16 %v409, %v408
      %v437 = vpack.c.b16 %v411, %v410
      %v438 = vpack.c.b16 %v413, %v412
      %v439 = vpack.c.b16 %v415, %v414
      %v440 = vpack.c.b16 %v417, %v416
      %v441 = vpack.c.b16 %v419, %v418
      %v442 = vpack.c.b16 %v421, %v420
      %v443 = vpack.c.b16 %v423, %v422
      %v444 = vpack.c.b16 %v425, %v424
      %v445 = vpack.c.b16 %v427, %v426
      %v446 = vpack.c.b16 %v429, %v428
      %v447 = vpack.c.b16 %v431, %v430
      %v449 = vshrl.u32 %v432, 16
      %v451 = vrot.slane %v449, 7
      %v452 = vshll.u32 %v432, 16
      %v454 = vor.u32 %v451, %v452
      %v456 = vshrl.u32 %v433, 16
      %v458 = vrot.slane %v456, 7
      %v459 = vshll.u32 %v433, 16
      %v461 = vor.u32 %v458, %v459
      %v463 = vshrl.u32 %v434, 16
      %v465 = vrot.slane %v463, 7
      %v466 = vshll.u32 %v434, 16
      %v468 = vor.u32 %v465, %v466
      %v470 = vshrl.u32 %v435, 16
      %v472 = vrot.slane %v470, 7
      %v473 = vshll.u32 %v435, 16
      %v475 = vor.u32 %v472, %v473
      %v477 = vshrl.u32 %v436, 16
      %v479 = vrot.slane %v477, 7
      %v480 = vshll.u32 %v436, 16
      %v482 = vor.u32 %v479, %v480
      %v484 = vshrl.u32 %v437, 16
      %v486 = vrot.slane %v484, 7
      %v487 = vshll.u32 %v437, 16
      %v489 = vor.u32 %v486, %v487
      %v491 = vshrl.u32 %v438, 16
      %v493 = vrot.slane %v491, 7
      %v494 = vshll.u32 %v438, 16
      %v496 = vor.u32 %v493, %v494
      %v498 = vshrl.u32 %v439, 16
      %v500 = vrot.slane %v498, 7
      %v501 = vshll.u32 %v439, 16
      %v503 = vor.u32 %v500, %v501
      %v505 = vshrl.u32 %v440, 16
      %v507 = vrot.slane %v505, 7
      %v508 = vshll.u32 %v440, 16
      %v510 = vor.u32 %v507, %v508
      %v512 = vshrl.u32 %v441, 16
      %v514 = vrot.slane %v512, 7
      %v515 = vshll.u32 %v441, 16
      %v517 = vor.u32 %v514, %v515
      %v519 = vshrl.u32 %v442, 16
      %v521 = vrot.slane %v519, 7
      %v522 = vshll.u32 %v442, 16
      %v524 = vor.u32 %v521, %v522
      %v526 = vshrl.u32 %v443, 16
      %v528 = vrot.slane %v526, 7
      %v529 = vshll.u32 %v443, 16
      %v531 = vor.u32 %v528, %v529
      %v533 = vshrl.u32 %v444, 16
      %v535 = vrot.slane %v533, 7
      %v536 = vshll.u32 %v444, 16
      %v538 = vor.u32 %v535, %v536
      %v540 = vshrl.u32 %v445, 16
      %v542 = vrot.slane %v540, 7
      %v543 = vshll.u32 %v445, 16
      %v545 = vor.u32 %v542, %v543
      %v547 = vshrl.u32 %v446, 16
      %v549 = vrot.slane %v547, 7
      %v550 = vshll.u32 %v446, 16
      %v552 = vor.u32 %v549, %v550
      %v554 = vshrl.u32 %v447, 16
      %v556 = vrot.slane %v554, 7
      %v557 = vshll.u32 %v447, 16
      %v559 = vor.u32 %v556, %v557
      %vm576 = vcmask 1047552
      %vm577 = vsmask.f32 7938
      %vm578 = vmand %vm576, %vm577
      %v579 = vld [vmem:[%s265] sm:$0xff]
      %v580 = vsel %vm578, %v454, %v579
      %581 = vst [vmem:[%s265] sm:$0xff] %v580
      %v582 = vld [vmem:[%s265 + $0x18] sm:$0xff]
      %v583 = vsel %vm578, %v461, %v582
      %584 = vst [vmem:[%s265 + $0x18] sm:$0xff] %v583
      %v585 = vld [vmem:[%s265 + $0x30] sm:$0xff]
      %v586 = vsel %vm578, %v468, %v585
      %587 = vst [vmem:[%s265 + $0x30] sm:$0xff] %v586
      %v588 = vld [vmem:[%s265 + $0x48] sm:$0xff]
      %v589 = vsel %vm578, %v475, %v588
      %590 = vst [vmem:[%s265 + $0x48] sm:$0xff] %v589
      %v591 = vld [vmem:[%s265 + $0x60] sm:$0xff]
      %v592 = vsel %vm578, %v482, %v591
      %593 = vst [vmem:[%s265 + $0x60] sm:$0xff] %v592
      %v594 = vld [vmem:[%s265 + $0x78] sm:$0xff]
      %v595 = vsel %vm578, %v489, %v594
      %596 = vst [vmem:[%s265 + $0x78] sm:$0xff] %v595
      %v597 = vld [vmem:[%s265 + $0x90] sm:$0xff]
      %v598 = vsel %vm578, %v496, %v597
      %599 = vst [vmem:[%s265 + $0x90] sm:$0xff] %v598
      %v600 = vld [vmem:[%s265 + $0xa8] sm:$0xff]
      %v601 = vsel %vm578, %v503, %v600
      %602 = vst [vmem:[%s265 + $0xa8] sm:$0xff] %v601
      %v603 = vld [vmem:[%s265 + $0xc0] sm:$0xff]
      %v604 = vsel %vm578, %v510, %v603
      %605 = vst [vmem:[%s265 + $0xc0] sm:$0xff] %v604
      %v606 = vld [vmem:[%s265 + $0xd8] sm:$0xff]
      %v607 = vsel %vm578, %v517, %v606
      %608 = vst [vmem:[%s265 + $0xd8] sm:$0xff] %v607
      %v609 = vld [vmem:[%s265 + $0xf0] sm:$0xff]
      %v610 = vsel %vm578, %v524, %v609
      %611 = vst [vmem:[%s265 + $0xf0] sm:$0xff] %v610
      %v612 = vld [vmem:[%s265 + $0x108] sm:$0xff]
      %v613 = vsel %vm578, %v531, %v612
      %614 = vst [vmem:[%s265 + $0x108] sm:$0xff] %v613
      %v615 = vld [vmem:[%s265 + $0x120] sm:$0xff]
      %v616 = vsel %vm578, %v538, %v615
      %617 = vst [vmem:[%s265 + $0x120] sm:$0xff] %v616
      %v618 = vld [vmem:[%s265 + $0x138] sm:$0xff]
      %v619 = vsel %vm578, %v545, %v618
      %620 = vst [vmem:[%s265 + $0x138] sm:$0xff] %v619
      %v621 = vld [vmem:[%s265 + $0x150] sm:$0xff]
      %v622 = vsel %vm578, %v552, %v621
      %623 = vst [vmem:[%s265 + $0x150] sm:$0xff] %v622
      %v624 = vld [vmem:[%s265 + $0x168] sm:$0xff]
      %v625 = vsel %vm578, %v559, %v624
      %626 = vst [vmem:[%s265 + $0x168] sm:$0xff] %v625
      %643 = vst [vmem:[%s265 + $0x8] sm:$0xff] %v432
      %644 = vst [vmem:[%s265 + $0x20] sm:$0xff] %v433
      %645 = vst [vmem:[%s265 + $0x38] sm:$0xff] %v434
      %646 = vst [vmem:[%s265 + $0x50] sm:$0xff] %v435
      %647 = vst [vmem:[%s265 + $0x68] sm:$0xff] %v436
      %648 = vst [vmem:[%s265 + $0x80] sm:$0xff] %v437
      %649 = vst [vmem:[%s265 + $0x98] sm:$0xff] %v438
      %650 = vst [vmem:[%s265 + $0xb0] sm:$0xff] %v439
      %651 = vst [vmem:[%s265 + $0xc8] sm:$0xff] %v440
      %652 = vst [vmem:[%s265 + $0xe0] sm:$0xff] %v441
      %653 = vst [vmem:[%s265 + $0xf8] sm:$0xff] %v442
      %654 = vst [vmem:[%s265 + $0x110] sm:$0xff] %v443
      %655 = vst [vmem:[%s265 + $0x128] sm:$0xff] %v444
      %656 = vst [vmem:[%s265 + $0x140] sm:$0xff] %v445
      %657 = vst [vmem:[%s265 + $0x158] sm:$0xff] %v446
      %658 = vst [vmem:[%s265 + $0x170] sm:$0xff] %v447
      %v659 = vrot.slane %v452, 1
      %v660 = vor.u32 %v449, %v659
      %v661 = vrot.slane %v459, 1
      %v662 = vor.u32 %v456, %v661
      %v663 = vrot.slane %v466, 1
      %v664 = vor.u32 %v463, %v663
      %v665 = vrot.slane %v473, 1
      %v666 = vor.u32 %v470, %v665
      %v667 = vrot.slane %v480, 1
      %v668 = vor.u32 %v477, %v667
      %v669 = vrot.slane %v487, 1
      %v670 = vor.u32 %v484, %v669
      %v671 = vrot.slane %v494, 1
      %v672 = vor.u32 %v491, %v671
      %v673 = vrot.slane %v501, 1
      %v674 = vor.u32 %v498, %v673
      %v675 = vrot.slane %v508, 1
      %v676 = vor.u32 %v505, %v675
      %v677 = vrot.slane %v515, 1
      %v678 = vor.u32 %v512, %v677
      %v679 = vrot.slane %v522, 1
      %v680 = vor.u32 %v519, %v679
      %v681 = vrot.slane %v529, 1
      %v682 = vor.u32 %v526, %v681
      %v683 = vrot.slane %v536, 1
      %v684 = vor.u32 %v533, %v683
      %v685 = vrot.slane %v543, 1
      %v686 = vor.u32 %v540, %v685
      %v687 = vrot.slane %v550, 1
      %v688 = vor.u32 %v547, %v687
      %v689 = vrot.slane %v557, 1
      %v690 = vor.u32 %v554, %v689
      %vm707 = vsmask.f32 7424
      %vm708 = vmand %vm576, %vm707
      %v709 = vld [vmem:[%s265 + $0x10] sm:$0xff]
      %v710 = vsel %vm708, %v660, %v709
      %711 = vst [vmem:[%s265 + $0x10] sm:$0xff] %v710
      %v712 = vld [vmem:[%s265 + $0x28] sm:$0xff]
      %v713 = vsel %vm708, %v662, %v712
      %714 = vst [vmem:[%s265 + $0x28] sm:$0xff] %v713
      %v715 = vld [vmem:[%s265 + $0x40] sm:$0xff]
      %v716 = vsel %vm708, %v664, %v715
      %717 = vst [vmem:[%s265 + $0x40] sm:$0xff] %v716
      %v718 = vld [vmem:[%s265 + $0x58] sm:$0xff]
      %v719 = vsel %vm708, %v666, %v718
      %720 = vst [vmem:[%s265 + $0x58] sm:$0xff] %v719
      %v721 = vld [vmem:[%s265 + $0x70] sm:$0xff]
      %v722 = vsel %vm708, %v668, %v721
      %723 = vst [vmem:[%s265 + $0x70] sm:$0xff] %v722
      %v724 = vld [vmem:[%s265 + $0x88] sm:$0xff]
      %v725 = vsel %vm708, %v670, %v724
      %726 = vst [vmem:[%s265 + $0x88] sm:$0xff] %v725
      %v727 = vld [vmem:[%s265 + $0xa0] sm:$0xff]
      %v728 = vsel %vm708, %v672, %v727
      %729 = vst [vmem:[%s265 + $0xa0] sm:$0xff] %v728
      %v730 = vld [vmem:[%s265 + $0xb8] sm:$0xff]
      %v731 = vsel %vm708, %v674, %v730
      %732 = vst [vmem:[%s265 + $0xb8] sm:$0xff] %v731
      %v733 = vld [vmem:[%s265 + $0xd0] sm:$0xff]
      %v734 = vsel %vm708, %v676, %v733
      %735 = vst [vmem:[%s265 + $0xd0] sm:$0xff] %v734
      %v736 = vld [vmem:[%s265 + $0xe8] sm:$0xff]
      %v737 = vsel %vm708, %v678, %v736
      %738 = vst [vmem:[%s265 + $0xe8] sm:$0xff] %v737
      %v739 = vld [vmem:[%s265 + $0x100] sm:$0xff]
      %v740 = vsel %vm708, %v680, %v739
      %741 = vst [vmem:[%s265 + $0x100] sm:$0xff] %v740
      %v742 = vld [vmem:[%s265 + $0x118] sm:$0xff]
      %v743 = vsel %vm708, %v682, %v742
      %744 = vst [vmem:[%s265 + $0x118] sm:$0xff] %v743
      %v745 = vld [vmem:[%s265 + $0x130] sm:$0xff]
      %v746 = vsel %vm708, %v684, %v745
      %747 = vst [vmem:[%s265 + $0x130] sm:$0xff] %v746
      %v748 = vld [vmem:[%s265 + $0x148] sm:$0xff]
      %v749 = vsel %vm708, %v686, %v748
      %750 = vst [vmem:[%s265 + $0x148] sm:$0xff] %v749
      %v751 = vld [vmem:[%s265 + $0x160] sm:$0xff]
      %v752 = vsel %vm708, %v688, %v751
      %753 = vst [vmem:[%s265 + $0x160] sm:$0xff] %v752
      %v754 = vld [vmem:[%s265 + $0x178] sm:$0xff]
      %v755 = vsel %vm708, %v690, %v754
      %756 = vst [vmem:[%s265 + $0x178] sm:$0xff] %v755
      %v757 = vld [vmem:[#allocation2] sm:$0xff]
      %v758 = vld [vmem:[#allocation2 + $0x8] sm:$0xff]
      %v759 = vld [vmem:[#allocation2 + $0x10] sm:$0xff]
      %v760 = vld [vmem:[#allocation2 + $0x18] sm:$0xff]
      %v761 = vld [vmem:[#allocation2 + $0x20] sm:$0xff]
      %v762 = vld [vmem:[#allocation2 + $0x28] sm:$0xff]
      %v763 = vld [vmem:[#allocation2 + $0x30] sm:$0xff]
      %v764 = vld [vmem:[#allocation2 + $0x38] sm:$0xff]
      %v765 = vld [vmem:[#allocation2 + $0x40] sm:$0xff]
      %v766 = vld [vmem:[#allocation2 + $0x48] sm:$0xff]
      %v767 = vld [vmem:[#allocation2 + $0x50] sm:$0xff]
      %v768 = vld [vmem:[#allocation2 + $0x58] sm:$0xff]
      %v769 = vld [vmem:[#allocation2 + $0x60] sm:$0xff]
      %v770 = vld [vmem:[#allocation2 + $0x68] sm:$0xff]
      %v771 = vld [vmem:[#allocation2 + $0x70] sm:$0xff]
      %v772 = vld [vmem:[#allocation2 + $0x78] sm:$0xff]
      %v773 = vld [vmem:[#allocation2 + $0x80] sm:$0xff]
      %v774 = vld [vmem:[#allocation2 + $0x88] sm:$0xff]
      %v775 = vld [vmem:[#allocation2 + $0x90] sm:$0xff]
      %v776 = vld [vmem:[#allocation2 + $0x98] sm:$0xff]
      %v777 = vld [vmem:[#allocation2 + $0xa0] sm:$0xff]
      %v778 = vld [vmem:[#allocation2 + $0xa8] sm:$0xff]
      %v779 = vld [vmem:[#allocation2 + $0xb0] sm:$0xff]
      %v780 = vld [vmem:[#allocation2 + $0xb8] sm:$0xff]
      %v781 = vld [vmem:[#allocation2 + $0xc0] sm:$0xff]
      %v782 = vld [vmem:[#allocation2 + $0xc8] sm:$0xff]
      %v783 = vld [vmem:[#allocation2 + $0xd0] sm:$0xff]
      %v784 = vld [vmem:[#allocation2 + $0xd8] sm:$0xff]
      %v785 = vld [vmem:[#allocation2 + $0xe0] sm:$0xff]
      %v786 = vld [vmem:[#allocation2 + $0xe8] sm:$0xff]
      %v787 = vld [vmem:[#allocation2 + $0xf0] sm:$0xff]
      %v788 = vld [vmem:[#allocation2 + $0xf8] sm:$0xff]
      %v789 = vld [vmem:[#allocation2 + $0x100] sm:$0xff]
      %v790 = vld [vmem:[#allocation2 + $0x108] sm:$0xff]
      %v791 = vld [vmem:[#allocation2 + $0x110] sm:$0xff]
      %v792 = vld [vmem:[#allocation2 + $0x118] sm:$0xff]
      %v793 = vld [vmem:[#allocation2 + $0x120] sm:$0xff]
      %v794 = vld [vmem:[#allocation2 + $0x128] sm:$0xff]
      %v795 = vld [vmem:[#allocation2 + $0x130] sm:$0xff]
      %v796 = vld [vmem:[#allocation2 + $0x138] sm:$0xff]
      %v797 = vld [vmem:[#allocation2 + $0x140] sm:$0xff]
      %v798 = vld [vmem:[#allocation2 + $0x148] sm:$0xff]
      %v799 = vld [vmem:[#allocation2 + $0x150] sm:$0xff]
      %v800 = vld [vmem:[#allocation2 + $0x158] sm:$0xff]
      %v801 = vld [vmem:[#allocation2 + $0x160] sm:$0xff]
      %v802 = vld [vmem:[#allocation2 + $0x168] sm:$0xff]
      %v803 = vld [vmem:[#allocation2 + $0x170] sm:$0xff]
      %v804 = vld [vmem:[#allocation2 + $0x178] sm:$0xff]
      %v805 = vld [vmem:[%s1] sm:$0xf]
      %v806 = vld [vmem:[%s1 + $0x4] sm:$0xf]
      %v807 = vld [vmem:[%s1 + $0x8] sm:$0xf]
      %v808 = vld [vmem:[%s1 + $0xc] sm:$0xf]
      %v809 = vld [vmem:[%s1 + $0x10] sm:$0xf]
      %v810 = vld [vmem:[%s1 + $0x14] sm:$0xf]
      %v811 = vld [vmem:[%s1 + $0x18] sm:$0xf]
      %v812 = vld [vmem:[%s1 + $0x1c] sm:$0xf]
      %v813 = vld [vmem:[%s1 + $0x20] sm:$0xf]
      %v814 = vld [vmem:[%s1 + $0x24] sm:$0xf]
      %v815 = vld [vmem:[%s1 + $0x28] sm:$0xf]
      %v816 = vld [vmem:[%s1 + $0x2c] sm:$0xf]
      %v817 = vld [vmem:[%s1 + $0x30] sm:$0xf]
      %v818 = vld [vmem:[%s1 + $0x34] sm:$0xf]
      %v819 = vld [vmem:[%s1 + $0x38] sm:$0xf]
      %v820 = vld [vmem:[%s1 + $0x3c] sm:$0xf]
      %v821 = vld [vmem:[%s1 + $0x40] sm:$0xf]
      %v822 = vld [vmem:[%s1 + $0x44] sm:$0xf]
      %v823 = vld [vmem:[%s1 + $0x48] sm:$0xf]
      %v824 = vld [vmem:[%s1 + $0x4c] sm:$0xf]
      %v825 = vld [vmem:[%s1 + $0x50] sm:$0xf]
      %v826 = vld [vmem:[%s1 + $0x54] sm:$0xf]
      %v827 = vld [vmem:[%s1 + $0x58] sm:$0xf]
      %v828 = vld [vmem:[%s1 + $0x5c] sm:$0xf]
      %v829 = vld [vmem:[%s1 + $0x60] sm:$0xf]
      %v830 = vld [vmem:[%s1 + $0x64] sm:$0xf]
      %v831 = vld [vmem:[%s1 + $0x68] sm:$0xf]
      %v832 = vld [vmem:[%s1 + $0x6c] sm:$0xf]
      %v833 = vld [vmem:[%s1 + $0x70] sm:$0xf]
      %v834 = vld [vmem:[%s1 + $0x74] sm:$0xf]
      %v835 = vld [vmem:[%s1 + $0x78] sm:$0xf]
      %v836 = vld [vmem:[%s1 + $0x7c] sm:$0xf]
      %v837 = vld [vmem:[%s1 + $0x80] sm:$0xf]
      %v838 = vld [vmem:[%s1 + $0x84] sm:$0xf]
      %v839 = vld [vmem:[%s1 + $0x88] sm:$0xf]
      %v840 = vld [vmem:[%s1 + $0x8c] sm:$0xf]
      %v841 = vld [vmem:[%s1 + $0x90] sm:$0xf]
      %v842 = vld [vmem:[%s1 + $0x94] sm:$0xf]
      %v843 = vld [vmem:[%s1 + $0x98] sm:$0xf]
      %v844 = vld [vmem:[%s1 + $0x9c] sm:$0xf]
      %v845 = vld [vmem:[%s1 + $0xa0] sm:$0xf]
      %v846 = vld [vmem:[%s1 + $0xa4] sm:$0xf]
      %v847 = vld [vmem:[%s1 + $0xa8] sm:$0xf]
      %v848 = vld [vmem:[%s1 + $0xac] sm:$0xf]
      %v849 = vld [vmem:[%s1 + $0xb0] sm:$0xf]
      %v850 = vld [vmem:[%s1 + $0xb4] sm:$0xf]
      %v851 = vld [vmem:[%s1 + $0xb8] sm:$0xf]
      %v852 = vld [vmem:[%s1 + $0xbc] sm:$0xf]
      %v853 = vld [vmem:[%s265] sm:$0xff]
      %v854 = vld [vmem:[%s265 + $0x8] sm:$0xff]
      %v855 = vld [vmem:[%s265 + $0x10] sm:$0xff]
      %v856 = vld [vmem:[%s265 + $0x18] sm:$0xff]
      %v857 = vld [vmem:[%s265 + $0x20] sm:$0xff]
      %v858 = vld [vmem:[%s265 + $0x28] sm:$0xff]
      %v859 = vld [vmem:[%s265 + $0x30] sm:$0xff]
      %v860 = vld [vmem:[%s265 + $0x38] sm:$0xff]
      %v861 = vld [vmem:[%s265 + $0x40] sm:$0xff]
      %v862 = vld [vmem:[%s265 + $0x48] sm:$0xff]
      %v863 = vld [vmem:[%s265 + $0x50] sm:$0xff]
      %v864 = vld [vmem:[%s265 + $0x58] sm:$0xff]
      %v865 = vld [vmem:[%s265 + $0x60] sm:$0xff]
      %v866 = vld [vmem:[%s265 + $0x68] sm:$0xff]
      %v867 = vld [vmem:[%s265 + $0x70] sm:$0xff]
      %v868 = vld [vmem:[%s265 + $0x78] sm:$0xff]
      %v869 = vld [vmem:[%s265 + $0x80] sm:$0xff]
      %v870 = vld [vmem:[%s265 + $0x88] sm:$0xff]
      %v871 = vld [vmem:[%s265 + $0x90] sm:$0xff]
      %v872 = vld [vmem:[%s265 + $0x98] sm:$0xff]
      %v873 = vld [vmem:[%s265 + $0xa0] sm:$0xff]
      %v874 = vld [vmem:[%s265 + $0xa8] sm:$0xff]
      %v875 = vld [vmem:[%s265 + $0xb0] sm:$0xff]
      %v876 = vld [vmem:[%s265 + $0xb8] sm:$0xff]
      %v877 = vld [vmem:[%s265 + $0xc0] sm:$0xff]
      %v878 = vld [vmem:[%s265 + $0xc8] sm:$0xff]
      %v879 = vld [vmem:[%s265 + $0xd0] sm:$0xff]
      %v880 = vld [vmem:[%s265 + $0xd8] sm:$0xff]
      %v881 = vld [vmem:[%s265 + $0xe0] sm:$0xff]
      %v882 = vld [vmem:[%s265 + $0xe8] sm:$0xff]
      %v883 = vld [vmem:[%s265 + $0xf0] sm:$0xff]
      %v884 = vld [vmem:[%s265 + $0xf8] sm:$0xff]
      %v885 = vld [vmem:[%s265 + $0x100] sm:$0xff]
      %v886 = vld [vmem:[%s265 + $0x108] sm:$0xff]
      %v887 = vld [vmem:[%s265 + $0x110] sm:$0xff]
      %v888 = vld [vmem:[%s265 + $0x118] sm:$0xff]
      %v889 = vld [vmem:[%s265 + $0x120] sm:$0xff]
      %v890 = vld [vmem:[%s265 + $0x128] sm:$0xff]
      %v891 = vld [vmem:[%s265 + $0x130] sm:$0xff]
      %v892 = vld [vmem:[%s265 + $0x138] sm:$0xff]
      %v893 = vld [vmem:[%s265 + $0x140] sm:$0xff]
      %v894 = vld [vmem:[%s265 + $0x148] sm:$0xff]
      %v895 = vld [vmem:[%s265 + $0x150] sm:$0xff]
      %v896 = vld [vmem:[%s265 + $0x158] sm:$0xff]
      %v897 = vld [vmem:[%s265 + $0x160] sm:$0xff]
      %v898 = vld [vmem:[%s265 + $0x168] sm:$0xff]
      %v899 = vld [vmem:[%s265 + $0x170] sm:$0xff]
      %v900 = vld [vmem:[%s265 + $0x178] sm:$0xff]
      %s901 = scalar_lea.vmem %s1, 192
      %v902 = vld [vmem:[%s901] sm:$0xf]
      %v903 = vld [vmem:[%s901 + $0x4] sm:$0xf]
      %v904 = vld [vmem:[%s901 + $0x8] sm:$0xf]
      %v905 = vld [vmem:[%s901 + $0xc] sm:$0xf]
      %v906 = vld [vmem:[%s901 + $0x10] sm:$0xf]
      %v907 = vld [vmem:[%s901 + $0x14] sm:$0xf]
      %v908 = vld [vmem:[%s901 + $0x18] sm:$0xf]
      %v909 = vld [vmem:[%s901 + $0x1c] sm:$0xf]
      %v910 = vld [vmem:[%s901 + $0x20] sm:$0xf]
      %v911 = vld [vmem:[%s901 + $0x24] sm:$0xf]
      %v912 = vld [vmem:[%s901 + $0x28] sm:$0xf]
      %v913 = vld [vmem:[%s901 + $0x2c] sm:$0xf]
      %v914 = vld [vmem:[%s901 + $0x30] sm:$0xf]
      %v915 = vld [vmem:[%s901 + $0x34] sm:$0xf]
      %v916 = vld [vmem:[%s901 + $0x38] sm:$0xf]
      %v917 = vld [vmem:[%s901 + $0x3c] sm:$0xf]
      %v918 = vld [vmem:[%s901 + $0x40] sm:$0xf]
      %v919 = vld [vmem:[%s901 + $0x44] sm:$0xf]
      %v920 = vld [vmem:[%s901 + $0x48] sm:$0xf]
      %v921 = vld [vmem:[%s901 + $0x4c] sm:$0xf]
      %v922 = vld [vmem:[%s901 + $0x50] sm:$0xf]
      %v923 = vld [vmem:[%s901 + $0x54] sm:$0xf]
      %v924 = vld [vmem:[%s901 + $0x58] sm:$0xf]
      %v925 = vld [vmem:[%s901 + $0x5c] sm:$0xf]
      %v926 = vld [vmem:[%s901 + $0x60] sm:$0xf]
      %v927 = vld [vmem:[%s901 + $0x64] sm:$0xf]
      %v928 = vld [vmem:[%s901 + $0x68] sm:$0xf]
      %v929 = vld [vmem:[%s901 + $0x6c] sm:$0xf]
      %v930 = vld [vmem:[%s901 + $0x70] sm:$0xf]
      %v931 = vld [vmem:[%s901 + $0x74] sm:$0xf]
      %v932 = vld [vmem:[%s901 + $0x78] sm:$0xf]
      %v933 = vld [vmem:[%s901 + $0x7c] sm:$0xf]
      %v934 = vld [vmem:[%s901 + $0x80] sm:$0xf]
      %v935 = vld [vmem:[%s901 + $0x84] sm:$0xf]
      %v936 = vld [vmem:[%s901 + $0x88] sm:$0xf]
      %v937 = vld [vmem:[%s901 + $0x8c] sm:$0xf]
      %v938 = vld [vmem:[%s901 + $0x90] sm:$0xf]
      %v939 = vld [vmem:[%s901 + $0x94] sm:$0xf]
      %v940 = vld [vmem:[%s901 + $0x98] sm:$0xf]
      %v941 = vld [vmem:[%s901 + $0x9c] sm:$0xf]
      %v942 = vld [vmem:[%s901 + $0xa0] sm:$0xf]
      %v943 = vld [vmem:[%s901 + $0xa4] sm:$0xf]
      %v944 = vld [vmem:[%s901 + $0xa8] sm:$0xf]
      %v945 = vld [vmem:[%s901 + $0xac] sm:$0xf]
      %v946 = vld [vmem:[%s901 + $0xb0] sm:$0xf]
      %v947 = vld [vmem:[%s901 + $0xb4] sm:$0xf]
      %v948 = vld [vmem:[%s901 + $0xb8] sm:$0xf]
      %v949 = vld [vmem:[%s901 + $0xbc] sm:$0xf]
      %v998 = vunpack.c.l.b16 %v902
      %v999 = vunpack.c.l.b16 %v903
      %v1000 = vunpack.c.l.b16 %v904
      %v1001 = vunpack.c.l.b16 %v905
      %v1002 = vunpack.c.l.b16 %v906
      %v1003 = vunpack.c.l.b16 %v907
      %v1004 = vunpack.c.l.b16 %v908
      %v1005 = vunpack.c.l.b16 %v909
      %v1006 = vunpack.c.l.b16 %v910
      %v1007 = vunpack.c.l.b16 %v911
      %v1008 = vunpack.c.l.b16 %v912
      %v1009 = vunpack.c.l.b16 %v913
      %v1010 = vunpack.c.l.b16 %v914
      %v1011 = vunpack.c.l.b16 %v915
      %v1012 = vunpack.c.l.b16 %v916
      %v1013 = vunpack.c.l.b16 %v917
      %v1014 = vunpack.c.l.b16 %v918
      %v1015 = vunpack.c.l.b16 %v919
      %v1016 = vunpack.c.l.b16 %v920
      %v1017 = vunpack.c.l.b16 %v921
      %v1018 = vunpack.c.l.b16 %v922
      %v1019 = vunpack.c.l.b16 %v923
      %v1020 = vunpack.c.l.b16 %v924
      %v1021 = vunpack.c.l.b16 %v925
      %v1022 = vunpack.c.l.b16 %v926
      %v1023 = vunpack.c.l.b16 %v927
      %v1024 = vunpack.c.l.b16 %v928
      %v1025 = vunpack.c.l.b16 %v929
      %v1026 = vunpack.c.l.b16 %v930
      %v1027 = vunpack.c.l.b16 %v931
      %v1028 = vunpack.c.l.b16 %v932
      %v1029 = vunpack.c.l.b16 %v933
      %v1030 = vunpack.c.l.b16 %v934
      %v1031 = vunpack.c.l.b16 %v935
      %v1032 = vunpack.c.l.b16 %v936
      %v1033 = vunpack.c.l.b16 %v937
      %v1034 = vunpack.c.l.b16 %v938
      %v1035 = vunpack.c.l.b16 %v939
      %v1036 = vunpack.c.l.b16 %v940
      %v1037 = vunpack.c.l.b16 %v941
      %v1038 = vunpack.c.l.b16 %v942
      %v1039 = vunpack.c.l.b16 %v943
      %v1040 = vunpack.c.l.b16 %v944
      %v1041 = vunpack.c.l.b16 %v945
      %v1042 = vunpack.c.l.b16 %v946
      %v1043 = vunpack.c.l.b16 %v947
      %v1044 = vunpack.c.l.b16 %v948
      %v1045 = vunpack.c.l.b16 %v949
      %v1046 = vpack.c.b16 %v999, %v998
      %v1047 = vpack.c.b16 %v1001, %v1000
      %v1048 = vpack.c.b16 %v1003, %v1002
      %v1049 = vpack.c.b16 %v1005, %v1004
      %v1050 = vpack.c.b16 %v1007, %v1006
      %v1051 = vpack.c.b16 %v1009, %v1008
      %v1052 = vpack.c.b16 %v1011, %v1010
      %v1053 = vpack.c.b16 %v1013, %v1012
      %v1054 = vpack.c.b16 %v1015, %v1014
      %v1055 = vpack.c.b16 %v1017, %v1016
      %v1056 = vpack.c.b16 %v1019, %v1018
      %v1057 = vpack.c.b16 %v1021, %v1020
      %v1058 = vpack.c.b16 %v1023, %v1022
      %v1059 = vpack.c.b16 %v1025, %v1024
      %v1060 = vpack.c.b16 %v1027, %v1026
      %v1061 = vpack.c.b16 %v1029, %v1028
      %v1062 = vpack.c.b16 %v1031, %v1030
      %v1063 = vpack.c.b16 %v1033, %v1032
      %v1064 = vpack.c.b16 %v1035, %v1034
      %v1065 = vpack.c.b16 %v1037, %v1036
      %v1066 = vpack.c.b16 %v1039, %v1038
      %v1067 = vpack.c.b16 %v1041, %v1040
      %v1068 = vpack.c.b16 %v1043, %v1042
      %v1069 = vpack.c.b16 %v1045, %v1044
      %1094 = vmatprep.subr.bf16.mxu0 0
      %1095 = vmatpush1.bf16.msra.mxu0 %v1046
      %1096 = vmatprep.subr.bf16.mxu0 0
      %1097 = vmatpush1.bf16.msra.mxu0 %v1047
      %1098 = vmatprep.subr.bf16.mxu0 0
      %1099 = vmatpush1.bf16.msra.mxu0 %v1048
      %1100 = vmatprep.subr.bf16.mxu0 0
      %1101 = vmatpush1.bf16.msra.mxu0 %v1049
      %1102 = vmatprep.subr.bf16.mxu0 0
      %1103 = vmatpush1.bf16.msra.mxu0 %v1050
      %1104 = vmatprep.subr.bf16.mxu0 0
      %1105 = vmatpush1.bf16.msra.mxu0 %v1051
      %1106 = vmatprep.subr.bf16.mxu0 0
      %1107 = vmatpush1.bf16.msra.mxu0 %v1052
      %1108 = vmatprep.subr.bf16.mxu0 0
      %1109 = vmatpush1.bf16.msra.mxu0 %v1053
      %1110 = vmatprep.subr.bf16.mxu0 0
      %1111 = vmatpush1.bf16.msra.mxu0 %v1054
      %1112 = vmatprep.subr.bf16.mxu0 0
      %1113 = vmatpush1.bf16.msra.mxu0 %v1055
      %1114 = vmatprep.subr.bf16.mxu0 0
      %1115 = vmatpush1.bf16.msra.mxu0 %v1056
      %1116 = vmatprep.subr.bf16.mxu0 0
      %1117 = vmatpush1.bf16.msra.mxu0 %v1057
      %1118 = vmatprep.subr.bf16.mxu0 0
      %1119 = vmatpush1.bf16.msra.mxu0 %v1058
      %1120 = vmatprep.subr.bf16.mxu0 0
      %1121 = vmatpush1.bf16.msra.mxu0 %v1059
      %1122 = vmatprep.subr.bf16.mxu0 0
      %1123 = vmatpush1.bf16.msra.mxu0 %v1060
      %1124 = vmatprep.subr.bf16.mxu0 0
      %1125 = vmatpush1.bf16.msra.mxu0 %v1061
      %1126 = vmatprep.mubr.bf16.mxu0 %v854
      %1127 = vmatmul.mubr.bf16.gmra.mrb[0].mxu0 %v853
      %v1128 = vpop.f32.mrb[0].mxu0
      %v1129 = vadd.f32 0.0, %v1128
      %v1130 = vpop.f32.mrb[0].mxu0
      %v1131 = vpop.f32.mrb[0].mxu0
      %v1132 = vadd.f32 0.0, %v1131
      %v1133 = vpop.f32.mrb[0].mxu0
      %1134 = vmatprep.mubr.bf16.mxu0 %v857
      %1135 = vmatmul.mubr.bf16.gmra.mrb[0].mxu0 %v856
      %v1136 = vpop.f32.mrb[0].mxu0
      %v1137 = vadd.f32 0.0, %v1136
      %v1138 = vpop.f32.mrb[0].mxu0
      %v1139 = vpop.f32.mrb[0].mxu0
      %v1140 = vadd.f32 0.0, %v1139
      %v1141 = vpop.f32.mrb[0].mxu0
      %1142 = vmatprep.mubr.bf16.mxu0 %v860
      %1143 = vmatmul.mubr.bf16.gmra.mrb[0].mxu0 %v859
      %v1144 = vpop.f32.mrb[0].mxu0
      %v1145 = vadd.f32 0.0, %v1144
      %v1146 = vpop.f32.mrb[0].mxu0
      %v1147 = vpop.f32.mrb[0].mxu0
      %v1148 = vadd.f32 0.0, %v1147
      %v1149 = vpop.f32.mrb[0].mxu0
      %1150 = vmatprep.mubr.bf16.mxu0 %v863
      %1151 = vmatmul.mubr.bf16.gmra.mrb[0].mxu0 %v862
      %v1152 = vpop.f32.mrb[0].mxu0
      %v1153 = vadd.f32 0.0, %v1152
      %v1154 = vpop.f32.mrb[0].mxu0
      %v1155 = vpop.f32.mrb[0].mxu0
      %v1156 = vadd.f32 0.0, %v1155
      %v1157 = vpop.f32.mrb[0].mxu0
      %1158 = vmatprep.mubr.bf16.mxu0 %v866
      %1159 = vmatmul.mubr.bf16.gmra.mrb[0].mxu0 %v865
      %v1160 = vpop.f32.mrb[0].mxu0
      %v1161 = vadd.f32 0.0, %v1160
      %v1162 = vpop.f32.mrb[0].mxu0
      %v1163 = vpop.f32.mrb[0].mxu0
      %v1164 = vadd.f32 0.0, %v1163
      %v1165 = vpop.f32.mrb[0].mxu0
      %1166 = vmatprep.mubr.bf16.mxu0 %v869
      %1167 = vmatmul.mubr.bf16.gmra.mrb[0].mxu0 %v868
      %v1168 = vpop.f32.mrb[0].mxu0
      %v1169 = vadd.f32 0.0, %v1168
      %v1170 = vpop.f32.mrb[0].mxu0
      %v1171 = vpop.f32.mrb[0].mxu0
      %v1172 = vadd.f32 0.0, %v1171
      %v1173 = vpop.f32.mrb[0].mxu0
      %1174 = vmatprep.mubr.bf16.mxu0 %v872
      %1175 = vmatmul.mubr.bf16.gmra.mrb[0].mxu0 %v871
      %v1176 = vpop.f32.mrb[0].mxu0
      %v1177 = vadd.f32 0.0, %v1176
      %v1178 = vpop.f32.mrb[0].mxu0
      %v1179 = vpop.f32.mrb[0].mxu0
      %v1180 = vadd.f32 0.0, %v1179
      %v1181 = vpop.f32.mrb[0].mxu0
      %1182 = vmatprep.mubr.bf16.mxu0 %v875
      %1183 = vmatmul.mubr.bf16.gmra.mrb[0].mxu0 %v874
      %v1184 = vpop.f32.mrb[0].mxu0
      %v1185 = vadd.f32 0.0, %v1184
      %v1186 = vpop.f32.mrb[0].mxu0
      %v1187 = vpop.f32.mrb[0].mxu0
      %v1188 = vadd.f32 0.0, %v1187
      %v1189 = vpop.f32.mrb[0].mxu0
      %1190 = vmatprep.mubr.bf16.mxu0 %v878
      %1191 = vmatmul.mubr.bf16.gmra.mrb[0].mxu0 %v877
      %v1192 = vpop.f32.mrb[0].mxu0
      %v1193 = vadd.f32 0.0, %v1192
      %v1194 = vpop.f32.mrb[0].mxu0
      %v1195 = vpop.f32.mrb[0].mxu0
      %v1196 = vadd.f32 0.0, %v1195
      %v1197 = vpop.f32.mrb[0].mxu0
      %1198 = vmatprep.mubr.bf16.mxu0 %v881
      %1199 = vmatmul.mubr.bf16.gmra.mrb[0].mxu0 %v880
      %v1200 = vpop.f32.mrb[0].mxu0
      %v1201 = vadd.f32 0.0, %v1200
      %v1202 = vpop.f32.mrb[0].mxu0
      %v1203 = vpop.f32.mrb[0].mxu0
      %v1204 = vadd.f32 0.0, %v1203
      %v1205 = vpop.f32.mrb[0].mxu0
      %1206 = vmatprep.mubr.bf16.mxu0 %v884
      %1207 = vmatmul.mubr.bf16.gmra.mrb[0].mxu0 %v883
      %v1208 = vpop.f32.mrb[0].mxu0
      %v1209 = vadd.f32 0.0, %v1208
      %v1210 = vpop.f32.mrb[0].mxu0
      %v1211 = vpop.f32.mrb[0].mxu0
      %v1212 = vadd.f32 0.0, %v1211
      %v1213 = vpop.f32.mrb[0].mxu0
      %1214 = vmatprep.mubr.bf16.mxu0 %v887
      %1215 = vmatmul.mubr.bf16.gmra.mrb[0].mxu0 %v886
      %v1216 = vpop.f32.mrb[0].mxu0
      %v1217 = vadd.f32 0.0, %v1216
      %v1218 = vpop.f32.mrb[0].mxu0
      %v1219 = vpop.f32.mrb[0].mxu0
      %v1220 = vadd.f32 0.0, %v1219
      %v1221 = vpop.f32.mrb[0].mxu0
      %1222 = vmatprep.mubr.bf16.mxu0 %v890
      %1223 = vmatmul.mubr.bf16.gmra.mrb[0].mxu0 %v889
      %v1224 = vpop.f32.mrb[0].mxu0
      %v1225 = vadd.f32 0.0, %v1224
      %v1226 = vpop.f32.mrb[0].mxu0
      %v1227 = vpop.f32.mrb[0].mxu0
      %v1228 = vadd.f32 0.0, %v1227
      %v1229 = vpop.f32.mrb[0].mxu0
      %1230 = vmatprep.mubr.bf16.mxu0 %v893
      %1231 = vmatmul.mubr.bf16.gmra.mrb[0].mxu0 %v892
      %v1232 = vpop.f32.mrb[0].mxu0
      %v1233 = vadd.f32 0.0, %v1232
      %v1234 = vpop.f32.mrb[0].mxu0
      %v1235 = vpop.f32.mrb[0].mxu0
      %v1236 = vadd.f32 0.0, %v1235
      %v1237 = vpop.f32.mrb[0].mxu0
      %1238 = vmatprep.mubr.bf16.mxu0 %v896
      %1239 = vmatmul.mubr.bf16.gmra.mrb[0].mxu0 %v895
      %v1240 = vpop.f32.mrb[0].mxu0
      %v1241 = vadd.f32 0.0, %v1240
      %v1242 = vpop.f32.mrb[0].mxu0
      %v1243 = vpop.f32.mrb[0].mxu0
      %v1244 = vadd.f32 0.0, %v1243
      %v1245 = vpop.f32.mrb[0].mxu0
      %1246 = vmatprep.mubr.bf16.mxu0 %v899
      %1247 = vmatmul.mubr.bf16.gmra.mrb[0].mxu0 %v898
      %v1248 = vpop.f32.mrb[0].mxu0
      %v1249 = vadd.f32 0.0, %v1248
      %v1250 = vpop.f32.mrb[0].mxu0
      %v1251 = vpop.f32.mrb[0].mxu0
      %v1252 = vadd.f32 0.0, %v1251
      %v1253 = vpop.f32.mrb[0].mxu0
      %1254 = vdwg.mxu0
      %1255 = vmatprep.subr.bf16.mxu0 0
      %1256 = vmatpush1.bf16.msra.mxu0 %v1062
      %1257 = vmatprep.subr.bf16.mxu0 0
      %1258 = vmatpush1.bf16.msra.mxu0 %v1063
      %1259 = vmatprep.subr.bf16.mxu0 0
      %1260 = vmatpush1.bf16.msra.mxu0 %v1064
      %1261 = vmatprep.subr.bf16.mxu0 0
      %1262 = vmatpush1.bf16.msra.mxu0 %v1065
      %1263 = vmatprep.subr.bf16.mxu0 0
      %1264 = vmatpush1.bf16.msra.mxu0 %v1066
      %1265 = vmatprep.subr.bf16.mxu0 0
      %1266 = vmatpush1.bf16.msra.mxu0 %v1067
      %1267 = vmatprep.subr.bf16.mxu0 0
      %1268 = vmatpush1.bf16.msra.mxu0 %v1068
      %1269 = vmatprep.subr.bf16.mxu0 0
      %1270 = vmatpush1.bf16.msra.mxu0 %v1069
      %1271 = vmatprep.subr.bf16.mxu0 0
      %1272 = vmatpush1.bf16.msra.mxu0 0
      %1273 = vmatprep.subr.bf16.mxu0 0
      %1274 = vmatpush1.bf16.msra.mxu0 0
      %1275 = vmatprep.subr.bf16.mxu0 0
      %1276 = vmatpush1.bf16.msra.mxu0 0
      %1277 = vmatprep.subr.bf16.mxu0 0
      %1278 = vmatpush1.bf16.msra.mxu0 0
      %1279 = vmatprep.subr.bf16.mxu0 0
      %1280 = vmatpush1.bf16.msra.mxu0 0
      %1281 = vmatprep.subr.bf16.mxu0 0
      %1282 = vmatpush1.bf16.msra.mxu0 0
      %1283 = vmatprep.subr.bf16.mxu0 0
      %1284 = vmatpush1.bf16.msra.mxu0 0
      %1285 = vmatprep.subr.bf16.mxu0 0
      %1286 = vmatpush1.bf16.msra.mxu0 0
      %1287 = vmatprep.mubr.bf16.mxu0 0
      %1288 = vmatmul.mubr.bf16.gmra.mrb[0].mxu0 %v855
      %v1289 = vpop.f32.mrb[0].mxu0
      %v1290 = vadd.f32 %v1129, %v1289
      %v1291 = vpop.f32.mrb[0].mxu0
      %v1292 = vpop.f32.mrb[0].mxu0
      %v1293 = vadd.f32 %v1132, %v1292
      %v1294 = vpop.f32.mrb[0].mxu0
      %1295 = vmatprep.mubr.bf16.mxu0 0
      %1296 = vmatmul.mubr.bf16.gmra.mrb[0].mxu0 %v858
      %v1297 = vpop.f32.mrb[0].mxu0
      %v1298 = vadd.f32 %v1137, %v1297
      %v1299 = vpop.f32.mrb[0].mxu0
      %v1300 = vpop.f32.mrb[0].mxu0
      %v1301 = vadd.f32 %v1140, %v1300
      %v1302 = vpop.f32.mrb[0].mxu0
      %1303 = vmatprep.mubr.bf16.mxu0 0
      %1304 = vmatmul.mubr.bf16.gmra.mrb[0].mxu0 %v861
      %v1305 = vpop.f32.mrb[0].mxu0
      %v1306 = vadd.f32 %v1145, %v1305
      %v1307 = vpop.f32.mrb[0].mxu0
      %v1308 = vpop.f32.mrb[0].mxu0
      %v1309 = vadd.f32 %v1148, %v1308
      %v1310 = vpop.f32.mrb[0].mxu0
      %1311 = vmatprep.mubr.bf16.mxu0 0
      %1312 = vmatmul.mubr.bf16.gmra.mrb[0].mxu0 %v864
      %v1313 = vpop.f32.mrb[0].mxu0
      %v1314 = vadd.f32 %v1153, %v1313
      %v1315 = vpop.f32.mrb[0].mxu0
      %v1316 = vpop.f32.mrb[0].mxu0
      %v1317 = vadd.f32 %v1156, %v1316
      %v1318 = vpop.f32.mrb[0].mxu0
      %1319 = vmatprep.mubr.bf16.mxu0 0
      %1320 = vmatmul.mubr.bf16.gmra.mrb[0].mxu0 %v867
      %v1321 = vpop.f32.mrb[0].mxu0
      %v1322 = vadd.f32 %v1161, %v1321
      %v1323 = vpop.f32.mrb[0].mxu0
      %v1324 = vpop.f32.mrb[0].mxu0
      %v1325 = vadd.f32 %v1164, %v1324
      %v1326 = vpop.f32.mrb[0].mxu0
      %1327 = vmatprep.mubr.bf16.mxu0 0
      %1328 = vmatmul.mubr.bf16.gmra.mrb[0].mxu0 %v870
      %v1329 = vpop.f32.mrb[0].mxu0
      %v1330 = vadd.f32 %v1169, %v1329
      %v1331 = vpop.f32.mrb[0].mxu0
      %v1332 = vpop.f32.mrb[0].mxu0
      %v1333 = vadd.f32 %v1172, %v1332
      %v1334 = vpop.f32.mrb[0].mxu0
      %1335 = vmatprep.mubr.bf16.mxu0 0
      %1336 = vmatmul.mubr.bf16.gmra.mrb[0].mxu0 %v873
      %v1337 = vpop.f32.mrb[0].mxu0
      %v1338 = vadd.f32 %v1177, %v1337
      %v1339 = vpop.f32.mrb[0].mxu0
      %v1340 = vpop.f32.mrb[0].mxu0
      %v1341 = vadd.f32 %v1180, %v1340
      %v1342 = vpop.f32.mrb[0].mxu0
      %1343 = vmatprep.mubr.bf16.mxu0 0
      %1344 = vmatmul.mubr.bf16.gmra.mrb[0].mxu0 %v876
      %v1345 = vpop.f32.mrb[0].mxu0
      %v1346 = vadd.f32 %v1185, %v1345
      %v1347 = vpop.f32.mrb[0].mxu0
      %v1348 = vpop.f32.mrb[0].mxu0
      %v1349 = vadd.f32 %v1188, %v1348
      %v1350 = vpop.f32.mrb[0].mxu0
      %1351 = vmatprep.mubr.bf16.mxu0 0
      %1352 = vmatmul.mubr.bf16.gmra.mrb[0].mxu0 %v879
      %v1353 = vpop.f32.mrb[0].mxu0
      %v1354 = vadd.f32 %v1193, %v1353
      %v1355 = vpop.f32.mrb[0].mxu0
      %v1356 = vpop.f32.mrb[0].mxu0
      %v1357 = vadd.f32 %v1196, %v1356
      %v1358 = vpop.f32.mrb[0].mxu0
      %1359 = vmatprep.mubr.bf16.mxu0 0
      %1360 = vmatmul.mubr.bf16.gmra.mrb[0].mxu0 %v882
      %v1361 = vpop.f32.mrb[0].mxu0
      %v1362 = vadd.f32 %v1201, %v1361
      %v1363 = vpop.f32.mrb[0].mxu0
      %v1364 = vpop.f32.mrb[0].mxu0
      %v1365 = vadd.f32 %v1204, %v1364
      %v1366 = vpop.f32.mrb[0].mxu0
      %1367 = vmatprep.mubr.bf16.mxu0 0
      %1368 = vmatmul.mubr.bf16.gmra.mrb[0].mxu0 %v885
      %v1369 = vpop.f32.mrb[0].mxu0
      %v1370 = vadd.f32 %v1209, %v1369
      %v1371 = vpop.f32.mrb[0].mxu0
      %v1372 = vpop.f32.mrb[0].mxu0
      %v1373 = vadd.f32 %v1212, %v1372
      %v1374 = vpop.f32.mrb[0].mxu0
      %1375 = vmatprep.mubr.bf16.mxu0 0
      %1376 = vmatmul.mubr.bf16.gmra.mrb[0].mxu0 %v888
      %v1377 = vpop.f32.mrb[0].mxu0
      %v1378 = vadd.f32 %v1217, %v1377
      %v1379 = vpop.f32.mrb[0].mxu0
      %v1380 = vpop.f32.mrb[0].mxu0
      %v1381 = vadd.f32 %v1220, %v1380
      %v1382 = vpop.f32.mrb[0].mxu0
      %1383 = vmatprep.mubr.bf16.mxu0 0
      %1384 = vmatmul.mubr.bf16.gmra.mrb[0].mxu0 %v891
      %v1385 = vpop.f32.mrb[0].mxu0
      %v1386 = vadd.f32 %v1225, %v1385
      %v1387 = vpop.f32.mrb[0].mxu0
      %v1388 = vpop.f32.mrb[0].mxu0
      %v1389 = vadd.f32 %v1228, %v1388
      %v1390 = vpop.f32.mrb[0].mxu0
      %1391 = vmatprep.mubr.bf16.mxu0 0
      %1392 = vmatmul.mubr.bf16.gmra.mrb[0].mxu0 %v894
      %v1393 = vpop.f32.mrb[0].mxu0
      %v1394 = vadd.f32 %v1233, %v1393
      %v1395 = vpop.f32.mrb[0].mxu0
      %v1396 = vpop.f32.mrb[0].mxu0
      %v1397 = vadd.f32 %v1236, %v1396
      %v1398 = vpop.f32.mrb[0].mxu0
      %1399 = vmatprep.mubr.bf16.mxu0 0
      %1400 = vmatmul.mubr.bf16.gmra.mrb[0].mxu0 %v897
      %v1401 = vpop.f32.mrb[0].mxu0
      %v1402 = vadd.f32 %v1241, %v1401
      %v1403 = vpop.f32.mrb[0].mxu0
      %v1404 = vpop.f32.mrb[0].mxu0
      %v1405 = vadd.f32 %v1244, %v1404
      %v1406 = vpop.f32.mrb[0].mxu0
      %1407 = vmatprep.mubr.bf16.mxu0 0
      %1408 = vmatmul.mubr.bf16.gmra.mrb[0].mxu0 %v900
      %v1409 = vpop.f32.mrb[0].mxu0
      %v1410 = vadd.f32 %v1249, %v1409
      %v1411 = vpop.f32.mrb[0].mxu0
      %v1412 = vpop.f32.mrb[0].mxu0
      %v1413 = vadd.f32 %v1252, %v1412
      %v1414 = vpop.f32.mrb[0].mxu0
      %1415 = vdwg.mxu0
      %v1464 = vunpack.c.l.b16 %v805
      %v1465 = vunpack.c.l.b16 %v806
      %v1466 = vunpack.c.l.b16 %v807
      %v1467 = vunpack.c.l.b16 %v808
      %v1468 = vunpack.c.l.b16 %v809
      %v1469 = vunpack.c.l.b16 %v810
      %v1470 = vunpack.c.l.b16 %v811
      %v1471 = vunpack.c.l.b16 %v812
      %v1472 = vunpack.c.l.b16 %v813
      %v1473 = vunpack.c.l.b16 %v814
      %v1474 = vunpack.c.l.b16 %v815
      %v1475 = vunpack.c.l.b16 %v816
      %v1476 = vunpack.c.l.b16 %v817
      %v1477 = vunpack.c.l.b16 %v818
      %v1478 = vunpack.c.l.b16 %v819
      %v1479 = vunpack.c.l.b16 %v820
      %v1480 = vunpack.c.l.b16 %v821
      %v1481 = vunpack.c.l.b16 %v822
      %v1482 = vunpack.c.l.b16 %v823
      %v1483 = vunpack.c.l.b16 %v824
      %v1484 = vunpack.c.l.b16 %v825
      %v1485 = vunpack.c.l.b16 %v826
      %v1486 = vunpack.c.l.b16 %v827
      %v1487 = vunpack.c.l.b16 %v828
      %v1488 = vunpack.c.l.b16 %v829
      %v1489 = vunpack.c.l.b16 %v830
      %v1490 = vunpack.c.l.b16 %v831
      %v1491 = vunpack.c.l.b16 %v832
      %v1492 = vunpack.c.l.b16 %v833
      %v1493 = vunpack.c.l.b16 %v834
      %v1494 = vunpack.c.l.b16 %v835
      %v1495 = vunpack.c.l.b16 %v836
      %v1496 = vunpack.c.l.b16 %v837
      %v1497 = vunpack.c.l.b16 %v838
      %v1498 = vunpack.c.l.b16 %v839
      %v1499 = vunpack.c.l.b16 %v840
      %v1500 = vunpack.c.l.b16 %v841
      %v1501 = vunpack.c.l.b16 %v842
      %v1502 = vunpack.c.l.b16 %v843
      %v1503 = vunpack.c.l.b16 %v844
      %v1504 = vunpack.c.l.b16 %v845
      %v1505 = vunpack.c.l.b16 %v846
      %v1506 = vunpack.c.l.b16 %v847
      %v1507 = vunpack.c.l.b16 %v848
      %v1508 = vunpack.c.l.b16 %v849
      %v1509 = vunpack.c.l.b16 %v850
      %v1510 = vunpack.c.l.b16 %v851
      %v1511 = vunpack.c.l.b16 %v852
      %v1512 = vpack.c.b16 %v1465, %v1464
      %v1513 = vpack.c.b16 %v1467, %v1466
      %v1514 = vpack.c.b16 %v1469, %v1468
      %v1515 = vpack.c.b16 %v1471, %v1470
      %v1516 = vpack.c.b16 %v1473, %v1472
      %v1517 = vpack.c.b16 %v1475, %v1474
      %v1518 = vpack.c.b16 %v1477, %v1476
      %v1519 = vpack.c.b16 %v1479, %v1478
      %v1520 = vpack.c.b16 %v1481, %v1480
      %v1521 = vpack.c.b16 %v1483, %v1482
      %v1522 = vpack.c.b16 %v1485, %v1484
      %v1523 = vpack.c.b16 %v1487, %v1486
      %v1524 = vpack.c.b16 %v1489, %v1488
      %v1525 = vpack.c.b16 %v1491, %v1490
      %v1526 = vpack.c.b16 %v1493, %v1492
      %v1527 = vpack.c.b16 %v1495, %v1494
      %v1528 = vpack.c.b16 %v1497, %v1496
      %v1529 = vpack.c.b16 %v1499, %v1498
      %v1530 = vpack.c.b16 %v1501, %v1500
      %v1531 = vpack.c.b16 %v1503, %v1502
      %v1532 = vpack.c.b16 %v1505, %v1504
      %v1533 = vpack.c.b16 %v1507, %v1506
      %v1534 = vpack.c.b16 %v1509, %v1508
      %v1535 = vpack.c.b16 %v1511, %v1510
      %1560 = vmatprep.subr.bf16.mxu0 0
      %1561 = vmatpush1.bf16.msra.mxu0 %v1512
      %1562 = vmatprep.subr.bf16.mxu0 0
      %1563 = vmatpush1.bf16.msra.mxu0 %v1513
      %1564 = vmatprep.subr.bf16.mxu0 0
      %1565 = vmatpush1.bf16.msra.mxu0 %v1514
      %1566 = vmatprep.subr.bf16.mxu0 0
      %1567 = vmatpush1.bf16.msra.mxu0 %v1515
      %1568 = vmatprep.subr.bf16.mxu0 0
      %1569 = vmatpush1.bf16.msra.mxu0 %v1516
      %1570 = vmatprep.subr.bf16.mxu0 0
      %1571 = vmatpush1.bf16.msra.mxu0 %v1517
      %1572 = vmatprep.subr.bf16.mxu0 0
      %1573 = vmatpush1.bf16.msra.mxu0 %v1518
      %1574 = vmatprep.subr.bf16.mxu0 0
      %1575 = vmatpush1.bf16.msra.mxu0 %v1519
      %1576 = vmatprep.subr.bf16.mxu0 0
      %1577 = vmatpush1.bf16.msra.mxu0 %v1520
      %1578 = vmatprep.subr.bf16.mxu0 0
      %1579 = vmatpush1.bf16.msra.mxu0 %v1521
      %1580 = vmatprep.subr.bf16.mxu0 0
      %1581 = vmatpush1.bf16.msra.mxu0 %v1522
      %1582 = vmatprep.subr.bf16.mxu0 0
      %1583 = vmatpush1.bf16.msra.mxu0 %v1523
      %1584 = vmatprep.subr.bf16.mxu0 0
      %1585 = vmatpush1.bf16.msra.mxu0 %v1524
      %1586 = vmatprep.subr.bf16.mxu0 0
      %1587 = vmatpush1.bf16.msra.mxu0 %v1525
      %1588 = vmatprep.subr.bf16.mxu0 0
      %1589 = vmatpush1.bf16.msra.mxu0 %v1526
      %1590 = vmatprep.subr.bf16.mxu0 0
      %1591 = vmatpush1.bf16.msra.mxu0 %v1527
      %1592 = vmatprep.mubr.bf16.mxu0 %v758
      %1593 = vmatmul.mubr.bf16.gmra.mrb[0].mxu0 %v757
      %v1594 = vpop.f32.mrb[0].mxu0
      %v1595 = vadd.f32 %v1290, %v1594
      %v1596 = vpop.f32.mrb[0].mxu0
      %v1597 = vpop.f32.mrb[0].mxu0
      %v1598 = vadd.f32 %v1293, %v1597
      %v1599 = vpop.f32.mrb[0].mxu0
      %1600 = vmatprep.mubr.bf16.mxu0 %v761
      %1601 = vmatmul.mubr.bf16.gmra.mrb[0].mxu0 %v760
      %v1602 = vpop.f32.mrb[0].mxu0
      %v1603 = vadd.f32 %v1298, %v1602
      %v1604 = vpop.f32.mrb[0].mxu0
      %v1605 = vpop.f32.mrb[0].mxu0
      %v1606 = vadd.f32 %v1301, %v1605
      %v1607 = vpop.f32.mrb[0].mxu0
      %1608 = vmatprep.mubr.bf16.mxu0 %v764
      %1609 = vmatmul.mubr.bf16.gmra.mrb[0].mxu0 %v763
      %v1610 = vpop.f32.mrb[0].mxu0
      %v1611 = vadd.f32 %v1306, %v1610
      %v1612 = vpop.f32.mrb[0].mxu0
      %v1613 = vpop.f32.mrb[0].mxu0
      %v1614 = vadd.f32 %v1309, %v1613
      %v1615 = vpop.f32.mrb[0].mxu0
      %1616 = vmatprep.mubr.bf16.mxu0 %v767
      %1617 = vmatmul.mubr.bf16.gmra.mrb[0].mxu0 %v766
      %v1618 = vpop.f32.mrb[0].mxu0
      %v1619 = vadd.f32 %v1314, %v1618
      %v1620 = vpop.f32.mrb[0].mxu0
      %v1621 = vpop.f32.mrb[0].mxu0
      %v1622 = vadd.f32 %v1317, %v1621
      %v1623 = vpop.f32.mrb[0].mxu0
      %1624 = vmatprep.mubr.bf16.mxu0 %v770
      %1625 = vmatmul.mubr.bf16.gmra.mrb[0].mxu0 %v769
      %v1626 = vpop.f32.mrb[0].mxu0
      %v1627 = vadd.f32 %v1322, %v1626
      %v1628 = vpop.f32.mrb[0].mxu0
      %v1629 = vpop.f32.mrb[0].mxu0
      %v1630 = vadd.f32 %v1325, %v1629
      %v1631 = vpop.f32.mrb[0].mxu0
      %1632 = vmatprep.mubr.bf16.mxu0 %v773
      %1633 = vmatmul.mubr.bf16.gmra.mrb[0].mxu0 %v772
      %v1634 = vpop.f32.mrb[0].mxu0
      %v1635 = vadd.f32 %v1330, %v1634
      %v1636 = vpop.f32.mrb[0].mxu0
      %v1637 = vpop.f32.mrb[0].mxu0
      %v1638 = vadd.f32 %v1333, %v1637
      %v1639 = vpop.f32.mrb[0].mxu0
      %1640 = vmatprep.mubr.bf16.mxu0 %v776
      %1641 = vmatmul.mubr.bf16.gmra.mrb[0].mxu0 %v775
      %v1642 = vpop.f32.mrb[0].mxu0
      %v1643 = vadd.f32 %v1338, %v1642
      %v1644 = vpop.f32.mrb[0].mxu0
      %v1645 = vpop.f32.mrb[0].mxu0
      %v1646 = vadd.f32 %v1341, %v1645
      %v1647 = vpop.f32.mrb[0].mxu0
      %1648 = vmatprep.mubr.bf16.mxu0 %v779
      %1649 = vmatmul.mubr.bf16.gmra.mrb[0].mxu0 %v778
      %v1650 = vpop.f32.mrb[0].mxu0
      %v1651 = vadd.f32 %v1346, %v1650
      %v1652 = vpop.f32.mrb[0].mxu0
      %v1653 = vpop.f32.mrb[0].mxu0
      %v1654 = vadd.f32 %v1349, %v1653
      %v1655 = vpop.f32.mrb[0].mxu0
      %1656 = vmatprep.mubr.bf16.mxu0 %v782
      %1657 = vmatmul.mubr.bf16.gmra.mrb[0].mxu0 %v781
      %v1658 = vpop.f32.mrb[0].mxu0
      %v1659 = vadd.f32 %v1354, %v1658
      %v1660 = vpop.f32.mrb[0].mxu0
      %v1661 = vpop.f32.mrb[0].mxu0
      %v1662 = vadd.f32 %v1357, %v1661
      %v1663 = vpop.f32.mrb[0].mxu0
      %1664 = vmatprep.mubr.bf16.mxu0 %v785
      %1665 = vmatmul.mubr.bf16.gmra.mrb[0].mxu0 %v784
      %v1666 = vpop.f32.mrb[0].mxu0
      %v1667 = vadd.f32 %v1362, %v1666
      %v1668 = vpop.f32.mrb[0].mxu0
      %v1669 = vpop.f32.mrb[0].mxu0
      %v1670 = vadd.f32 %v1365, %v1669
      %v1671 = vpop.f32.mrb[0].mxu0
      %1672 = vmatprep.mubr.bf16.mxu0 %v788
      %1673 = vmatmul.mubr.bf16.gmra.mrb[0].mxu0 %v787
      %v1674 = vpop.f32.mrb[0].mxu0
      %v1675 = vadd.f32 %v1370, %v1674
      %v1676 = vpop.f32.mrb[0].mxu0
      %v1677 = vpop.f32.mrb[0].mxu0
      %v1678 = vadd.f32 %v1373, %v1677
      %v1679 = vpop.f32.mrb[0].mxu0
      %1680 = vmatprep.mubr.bf16.mxu0 %v791
      %1681 = vmatmul.mubr.bf16.gmra.mrb[0].mxu0 %v790
      %v1682 = vpop.f32.mrb[0].mxu0
      %v1683 = vadd.f32 %v1378, %v1682
      %v1684 = vpop.f32.mrb[0].mxu0
      %v1685 = vpop.f32.mrb[0].mxu0
      %v1686 = vadd.f32 %v1381, %v1685
      %v1687 = vpop.f32.mrb[0].mxu0
      %1688 = vmatprep.mubr.bf16.mxu0 %v794
      %1689 = vmatmul.mubr.bf16.gmra.mrb[0].mxu0 %v793
      %v1690 = vpop.f32.mrb[0].mxu0
      %v1691 = vadd.f32 %v1386, %v1690
      %v1692 = vpop.f32.mrb[0].mxu0
      %v1693 = vpop.f32.mrb[0].mxu0
      %v1694 = vadd.f32 %v1389, %v1693
      %v1695 = vpop.f32.mrb[0].mxu0
      %1696 = vmatprep.mubr.bf16.mxu0 %v797
      %1697 = vmatmul.mubr.bf16.gmra.mrb[0].mxu0 %v796
      %v1698 = vpop.f32.mrb[0].mxu0
      %v1699 = vadd.f32 %v1394, %v1698
      %v1700 = vpop.f32.mrb[0].mxu0
      %v1701 = vpop.f32.mrb[0].mxu0
      %v1702 = vadd.f32 %v1397, %v1701
      %v1703 = vpop.f32.mrb[0].mxu0
      %1704 = vmatprep.mubr.bf16.mxu0 %v800
      %1705 = vmatmul.mubr.bf16.gmra.mrb[0].mxu0 %v799
      %v1706 = vpop.f32.mrb[0].mxu0
      %v1707 = vadd.f32 %v1402, %v1706
      %v1708 = vpop.f32.mrb[0].mxu0
      %v1709 = vpop.f32.mrb[0].mxu0
      %v1710 = vadd.f32 %v1405, %v1709
      %v1711 = vpop.f32.mrb[0].mxu0
      %1712 = vmatprep.mubr.bf16.mxu0 %v803
      %1713 = vmatmul.mubr.bf16.gmra.mrb[0].mxu0 %v802
      %v1714 = vpop.f32.mrb[0].mxu0
      %v1715 = vadd.f32 %v1410, %v1714
      %v1716 = vpop.f32.mrb[0].mxu0
      %v1717 = vpop.f32.mrb[0].mxu0
      %v1718 = vadd.f32 %v1413, %v1717
      %v1719 = vpop.f32.mrb[0].mxu0
      %1720 = vdwg.mxu0
      %1721 = vmatprep.subr.bf16.mxu0 0
      %1722 = vmatpush1.bf16.msra.mxu0 %v1528
      %1723 = vmatprep.subr.bf16.mxu0 0
      %1724 = vmatpush1.bf16.msra.mxu0 %v1529
      %1725 = vmatprep.subr.bf16.mxu0 0
      %1726 = vmatpush1.bf16.msra.mxu0 %v1530
      %1727 = vmatprep.subr.bf16.mxu0 0
      %1728 = vmatpush1.bf16.msra.mxu0 %v1531
      %1729 = vmatprep.subr.bf16.mxu0 0
      %1730 = vmatpush1.bf16.msra.mxu0 %v1532
      %1731 = vmatprep.subr.bf16.mxu0 0
      %1732 = vmatpush1.bf16.msra.mxu0 %v1533
      %1733 = vmatprep.subr.bf16.mxu0 0
      %1734 = vmatpush1.bf16.msra.mxu0 %v1534
      %1735 = vmatprep.subr.bf16.mxu0 0
      %1736 = vmatpush1.bf16.msra.mxu0 %v1535
      %1737 = vmatprep.subr.bf16.mxu0 0
      %1738 = vmatpush1.bf16.msra.mxu0 0
      %1739 = vmatprep.subr.bf16.mxu0 0
      %1740 = vmatpush1.bf16.msra.mxu0 0
      %1741 = vmatprep.subr.bf16.mxu0 0
      %1742 = vmatpush1.bf16.msra.mxu0 0
      %1743 = vmatprep.subr.bf16.mxu0 0
      %1744 = vmatpush1.bf16.msra.mxu0 0
      %1745 = vmatprep.subr.bf16.mxu0 0
      %1746 = vmatpush1.bf16.msra.mxu0 0
      %1747 = vmatprep.subr.bf16.mxu0 0
      %1748 = vmatpush1.bf16.msra.mxu0 0
      %1749 = vmatprep.subr.bf16.mxu0 0
      %1750 = vmatpush1.bf16.msra.mxu0 0
      %1751 = vmatprep.subr.bf16.mxu0 0
      %1752 = vmatpush1.bf16.msra.mxu0 0
      %1753 = vmatprep.mubr.bf16.mxu0 0
      %1754 = vmatmul.mubr.bf16.gmra.mrb[0].mxu0 %v759
      %v1755 = vpop.f32.mrb[0].mxu0
      %v1756 = vadd.f32 %v1595, %v1755
      %v1757 = vpop.f32.mrb[0].mxu0
      %v1758 = vpop.f32.mrb[0].mxu0
      %v1759 = vadd.f32 %v1598, %v1758
      %v1760 = vpop.f32.mrb[0].mxu0
      %1761 = vmatprep.mubr.bf16.mxu0 0
      %1762 = vmatmul.mubr.bf16.gmra.mrb[0].mxu0 %v762
      %v1763 = vpop.f32.mrb[0].mxu0
      %v1764 = vadd.f32 %v1603, %v1763
      %v1765 = vpop.f32.mrb[0].mxu0
      %v1766 = vpop.f32.mrb[0].mxu0
      %v1767 = vadd.f32 %v1606, %v1766
      %v1768 = vpop.f32.mrb[0].mxu0
      %1769 = vmatprep.mubr.bf16.mxu0 0
      %1770 = vmatmul.mubr.bf16.gmra.mrb[0].mxu0 %v765
      %v1771 = vpop.f32.mrb[0].mxu0
      %v1772 = vadd.f32 %v1611, %v1771
      %v1773 = vpop.f32.mrb[0].mxu0
      %v1774 = vpop.f32.mrb[0].mxu0
      %v1775 = vadd.f32 %v1614, %v1774
      %v1776 = vpop.f32.mrb[0].mxu0
      %1777 = vmatprep.mubr.bf16.mxu0 0
      %1778 = vmatmul.mubr.bf16.gmra.mrb[0].mxu0 %v768
      %v1779 = vpop.f32.mrb[0].mxu0
      %v1780 = vadd.f32 %v1619, %v1779
      %v1781 = vpop.f32.mrb[0].mxu0
      %v1782 = vpop.f32.mrb[0].mxu0
      %v1783 = vadd.f32 %v1622, %v1782
      %v1784 = vpop.f32.mrb[0].mxu0
      %1785 = vmatprep.mubr.bf16.mxu0 0
      %1786 = vmatmul.mubr.bf16.gmra.mrb[0].mxu0 %v771
      %v1787 = vpop.f32.mrb[0].mxu0
      %v1788 = vadd.f32 %v1627, %v1787
      %v1789 = vpop.f32.mrb[0].mxu0
      %v1790 = vpop.f32.mrb[0].mxu0
      %v1791 = vadd.f32 %v1630, %v1790
      %v1792 = vpop.f32.mrb[0].mxu0
      %1793 = vmatprep.mubr.bf16.mxu0 0
      %1794 = vmatmul.mubr.bf16.gmra.mrb[0].mxu0 %v774
      %v1795 = vpop.f32.mrb[0].mxu0
      %v1796 = vadd.f32 %v1635, %v1795
      %v1797 = vpop.f32.mrb[0].mxu0
      %v1798 = vpop.f32.mrb[0].mxu0
      %v1799 = vadd.f32 %v1638, %v1798
      %v1800 = vpop.f32.mrb[0].mxu0
      %1801 = vmatprep.mubr.bf16.mxu0 0
      %1802 = vmatmul.mubr.bf16.gmra.mrb[0].mxu0 %v777
      %v1803 = vpop.f32.mrb[0].mxu0
      %v1804 = vadd.f32 %v1643, %v1803
      %v1805 = vpop.f32.mrb[0].mxu0
      %v1806 = vpop.f32.mrb[0].mxu0
      %v1807 = vadd.f32 %v1646, %v1806
      %v1808 = vpop.f32.mrb[0].mxu0
      %1809 = vmatprep.mubr.bf16.mxu0 0
      %1810 = vmatmul.mubr.bf16.gmra.mrb[0].mxu0 %v780
      %v1811 = vpop.f32.mrb[0].mxu0
      %v1812 = vadd.f32 %v1651, %v1811
      %v1813 = vpop.f32.mrb[0].mxu0
      %v1814 = vpop.f32.mrb[0].mxu0
      %v1815 = vadd.f32 %v1654, %v1814
      %v1816 = vpop.f32.mrb[0].mxu0
      %1817 = vmatprep.mubr.bf16.mxu0 0
      %1818 = vmatmul.mubr.bf16.gmra.mrb[0].mxu0 %v783
      %v1819 = vpop.f32.mrb[0].mxu0
      %v1820 = vadd.f32 %v1659, %v1819
      %v1821 = vpop.f32.mrb[0].mxu0
      %v1822 = vpop.f32.mrb[0].mxu0
      %v1823 = vadd.f32 %v1662, %v1822
      %v1824 = vpop.f32.mrb[0].mxu0
      %1825 = vmatprep.mubr.bf16.mxu0 0
      %1826 = vmatmul.mubr.bf16.gmra.mrb[0].mxu0 %v786
      %v1827 = vpop.f32.mrb[0].mxu0
      %v1828 = vadd.f32 %v1667, %v1827
      %v1829 = vpop.f32.mrb[0].mxu0
      %v1830 = vpop.f32.mrb[0].mxu0
      %v1831 = vadd.f32 %v1670, %v1830
      %v1832 = vpop.f32.mrb[0].mxu0
      %1833 = vmatprep.mubr.bf16.mxu0 0
      %1834 = vmatmul.mubr.bf16.gmra.mrb[0].mxu0 %v789
      %v1835 = vpop.f32.mrb[0].mxu0
      %v1836 = vadd.f32 %v1675, %v1835
      %v1837 = vpop.f32.mrb[0].mxu0
      %v1838 = vpop.f32.mrb[0].mxu0
      %v1839 = vadd.f32 %v1678, %v1838
      %v1840 = vpop.f32.mrb[0].mxu0
      %1841 = vmatprep.mubr.bf16.mxu0 0
      %1842 = vmatmul.mubr.bf16.gmra.mrb[0].mxu0 %v792
      %v1843 = vpop.f32.mrb[0].mxu0
      %v1844 = vadd.f32 %v1683, %v1843
      %v1845 = vpop.f32.mrb[0].mxu0
      %v1846 = vpop.f32.mrb[0].mxu0
      %v1847 = vadd.f32 %v1686, %v1846
      %v1848 = vpop.f32.mrb[0].mxu0
      %1849 = vmatprep.mubr.bf16.mxu0 0
      %1850 = vmatmul.mubr.bf16.gmra.mrb[0].mxu0 %v795
      %v1851 = vpop.f32.mrb[0].mxu0
      %v1852 = vadd.f32 %v1691, %v1851
      %v1853 = vpop.f32.mrb[0].mxu0
      %v1854 = vpop.f32.mrb[0].mxu0
      %v1855 = vadd.f32 %v1694, %v1854
      %v1856 = vpop.f32.mrb[0].mxu0
      %1857 = vmatprep.mubr.bf16.mxu0 0
      %1858 = vmatmul.mubr.bf16.gmra.mrb[0].mxu0 %v798
      %v1859 = vpop.f32.mrb[0].mxu0
      %v1860 = vadd.f32 %v1699, %v1859
      %v1861 = vpop.f32.mrb[0].mxu0
      %v1862 = vpop.f32.mrb[0].mxu0
      %v1863 = vadd.f32 %v1702, %v1862
      %v1864 = vpop.f32.mrb[0].mxu0
      %1865 = vmatprep.mubr.bf16.mxu0 0
      %1866 = vmatmul.mubr.bf16.gmra.mrb[0].mxu0 %v801
      %v1867 = vpop.f32.mrb[0].mxu0
      %v1868 = vadd.f32 %v1707, %v1867
      %v1869 = vpop.f32.mrb[0].mxu0
      %v1870 = vpop.f32.mrb[0].mxu0
      %v1871 = vadd.f32 %v1710, %v1870
      %v1872 = vpop.f32.mrb[0].mxu0
      %1873 = vmatprep.mubr.bf16.mxu0 0
      %1874 = vmatmul.mubr.bf16.gmra.mrb[0].mxu0 %v804
      %v1875 = vpop.f32.mrb[0].mxu0
      %v1876 = vadd.f32 %v1715, %v1875
      %v1877 = vpop.f32.mrb[0].mxu0
      %v1878 = vpop.f32.mrb[0].mxu0
      %v1879 = vadd.f32 %v1718, %v1878
      %v1880 = vpop.f32.mrb[0].mxu0
      %1881 = vdwg.mxu0
      %s1882 = scalar_lea.vmem [#allocation2], 48
      %v1883 = vld [vmem:[%s1882] sm:$0xff]
      %v1884 = vld [vmem:[%s1882 + $0x8] sm:$0xff]
      %v1885 = vld [vmem:[%s1882 + $0x10] sm:$0xff]
      %v1886 = vld [vmem:[%s1882 + $0x18] sm:$0xff]
      %v1887 = vld [vmem:[%s1882 + $0x20] sm:$0xff]
      %v1888 = vld [vmem:[%s1882 + $0x28] sm:$0xff]
      %v1889 = vld [vmem:[%s1882 + $0x30] sm:$0xff]
      %v1890 = vld [vmem:[%s1882 + $0x38] sm:$0xff]
      %v1891 = vld [vmem:[%s1882 + $0x40] sm:$0xff]
      %v1892 = vld [vmem:[%s1882 + $0x48] sm:$0xff]
      %v1893 = vld [vmem:[%s1882 + $0x50] sm:$0xff]
      %v1894 = vld [vmem:[%s1882 + $0x58] sm:$0xff]
      %v1895 = vld [vmem:[%s1882 + $0x60] sm:$0xff]
      %v1896 = vld [vmem:[%s1882 + $0x68] sm:$0xff]
      %v1897 = vld [vmem:[%s1882 + $0x70] sm:$0xff]
      %v1898 = vld [vmem:[%s1882 + $0x78] sm:$0xff]
      %v1899 = vld [vmem:[%s1882 + $0x80] sm:$0xff]
      %v1900 = vld [vmem:[%s1882 + $0x88] sm:$0xff]
      %v1901 = vld [vmem:[%s1882 + $0x90] sm:$0xff]
      %v1902 = vld [vmem:[%s1882 + $0x98] sm:$0xff]
      %v1903 = vld [vmem:[%s1882 + $0xa0] sm:$0xff]
      %v1904 = vld [vmem:[%s1882 + $0xa8] sm:$0xff]
      %v1905 = vld [vmem:[%s1882 + $0xb0] sm:$0xff]
      %v1906 = vld [vmem:[%s1882 + $0xb8] sm:$0xff]
      %v1907 = vld [vmem:[%s1882 + $0xc0] sm:$0xff]
      %v1908 = vld [vmem:[%s1882 + $0xc8] sm:$0xff]
      %v1909 = vld [vmem:[%s1882 + $0xd0] sm:$0xff]
      %v1910 = vld [vmem:[%s1882 + $0xd8] sm:$0xff]
      %v1911 = vld [vmem:[%s1882 + $0xe0] sm:$0xff]
      %v1912 = vld [vmem:[%s1882 + $0xe8] sm:$0xff]
      %v1913 = vld [vmem:[%s1882 + $0xf0] sm:$0xff]
      %v1914 = vld [vmem:[%s1882 + $0xf8] sm:$0xff]
      %v1915 = vld [vmem:[%s1882 + $0x100] sm:$0xff]
      %v1916 = vld [vmem:[%s1882 + $0x108] sm:$0xff]
      %v1917 = vld [vmem:[%s1882 + $0x110] sm:$0xff]
      %v1918 = vld [vmem:[%s1882 + $0x118] sm:$0xff]
      %v1919 = vld [vmem:[%s1882 + $0x120] sm:$0xff]
      %v1920 = vld [vmem:[%s1882 + $0x128] sm:$0xff]
      %v1921 = vld [vmem:[%s1882 + $0x130] sm:$0xff]
      %v1922 = vld [vmem:[%s1882 + $0x138] sm:$0xff]
      %v1923 = vld [vmem:[%s1882 + $0x140] sm:$0xff]
      %v1924 = vld [vmem:[%s1882 + $0x148] sm:$0xff]
      %v1925 = vld [vmem:[%s1882 + $0x150] sm:$0xff]
      %v1926 = vld [vmem:[%s1882 + $0x158] sm:$0xff]
      %v1927 = vld [vmem:[%s1882 + $0x160] sm:$0xff]
      %v1928 = vld [vmem:[%s1882 + $0x168] sm:$0xff]
      %v1929 = vld [vmem:[%s1882 + $0x170] sm:$0xff]
      %v1930 = vld [vmem:[%s1882 + $0x178] sm:$0xff]
      %s1931 = scalar_lea.vmem %s1, 384
      %v1932 = vld [vmem:[%s1931] sm:$0xf]
      %v1933 = vld [vmem:[%s1931 + $0x4] sm:$0xf]
      %v1934 = vld [vmem:[%s1931 + $0x8] sm:$0xf]
      %v1935 = vld [vmem:[%s1931 + $0xc] sm:$0xf]
      %v1936 = vld [vmem:[%s1931 + $0x10] sm:$0xf]
      %v1937 = vld [vmem:[%s1931 + $0x14] sm:$0xf]
      %v1938 = vld [vmem:[%s1931 + $0x18] sm:$0xf]
      %v1939 = vld [vmem:[%s1931 + $0x1c] sm:$0xf]
      %v1940 = vld [vmem:[%s1931 + $0x20] sm:$0xf]
      %v1941 = vld [vmem:[%s1931 + $0x24] sm:$0xf]
      %v1942 = vld [vmem:[%s1931 + $0x28] sm:$0xf]
      %v1943 = vld [vmem:[%s1931 + $0x2c] sm:$0xf]
      %v1944 = vld [vmem:[%s1931 + $0x30] sm:$0xf]
      %v1945 = vld [vmem:[%s1931 + $0x34] sm:$0xf]
      %v1946 = vld [vmem:[%s1931 + $0x38] sm:$0xf]
      %v1947 = vld [vmem:[%s1931 + $0x3c] sm:$0xf]
      %v1948 = vld [vmem:[%s1931 + $0x40] sm:$0xf]
      %v1949 = vld [vmem:[%s1931 + $0x44] sm:$0xf]
      %v1950 = vld [vmem:[%s1931 + $0x48] sm:$0xf]
      %v1951 = vld [vmem:[%s1931 + $0x4c] sm:$0xf]
      %v1952 = vld [vmem:[%s1931 + $0x50] sm:$0xf]
      %v1953 = vld [vmem:[%s1931 + $0x54] sm:$0xf]
      %v1954 = vld [vmem:[%s1931 + $0x58] sm:$0xf]
      %v1955 = vld [vmem:[%s1931 + $0x5c] sm:$0xf]
      %v1956 = vld [vmem:[%s1931 + $0x60] sm:$0xf]
      %v1957 = vld [vmem:[%s1931 + $0x64] sm:$0xf]
      %v1958 = vld [vmem:[%s1931 + $0x68] sm:$0xf]
      %v1959 = vld [vmem:[%s1931 + $0x6c] sm:$0xf]
      %v1960 = vld [vmem:[%s1931 + $0x70] sm:$0xf]
      %v1961 = vld [vmem:[%s1931 + $0x74] sm:$0xf]
      %v1962 = vld [vmem:[%s1931 + $0x78] sm:$0xf]
      %v1963 = vld [vmem:[%s1931 + $0x7c] sm:$0xf]
      %v1964 = vld [vmem:[%s1931 + $0x80] sm:$0xf]
      %v1965 = vld [vmem:[%s1931 + $0x84] sm:$0xf]
      %v1966 = vld [vmem:[%s1931 + $0x88] sm:$0xf]
      %v1967 = vld [vmem:[%s1931 + $0x8c] sm:$0xf]
      %v1968 = vld [vmem:[%s1931 + $0x90] sm:$0xf]
      %v1969 = vld [vmem:[%s1931 + $0x94] sm:$0xf]
      %v1970 = vld [vmem:[%s1931 + $0x98] sm:$0xf]
      %v1971 = vld [vmem:[%s1931 + $0x9c] sm:$0xf]
      %v1972 = vld [vmem:[%s1931 + $0xa0] sm:$0xf]
      %v1973 = vld [vmem:[%s1931 + $0xa4] sm:$0xf]
      %v1974 = vld [vmem:[%s1931 + $0xa8] sm:$0xf]
      %v1975 = vld [vmem:[%s1931 + $0xac] sm:$0xf]
      %v1976 = vld [vmem:[%s1931 + $0xb0] sm:$0xf]
      %v1977 = vld [vmem:[%s1931 + $0xb4] sm:$0xf]
      %v1978 = vld [vmem:[%s1931 + $0xb8] sm:$0xf]
      %v1979 = vld [vmem:[%s1931 + $0xbc] sm:$0xf]
      %v2028 = vunpack.c.l.b16 %v1932
      %v2029 = vunpack.c.l.b16 %v1933
      %v2030 = vunpack.c.l.b16 %v1934
      %v2031 = vunpack.c.l.b16 %v1935
      %v2032 = vunpack.c.l.b16 %v1936
      %v2033 = vunpack.c.l.b16 %v1937
      %v2034 = vunpack.c.l.b16 %v1938
      %v2035 = vunpack.c.l.b16 %v1939
      %v2036 = vunpack.c.l.b16 %v1940
      %v2037 = vunpack.c.l.b16 %v1941
      %v2038 = vunpack.c.l.b16 %v1942
      %v2039 = vunpack.c.l.b16 %v1943
      %v2040 = vunpack.c.l.b16 %v1944
      %v2041 = vunpack.c.l.b16 %v1945
      %v2042 = vunpack.c.l.b16 %v1946
      %v2043 = vunpack.c.l.b16 %v1947
      %v2044 = vunpack.c.l.b16 %v1948
      %v2045 = vunpack.c.l.b16 %v1949
      %v2046 = vunpack.c.l.b16 %v1950
      %v2047 = vunpack.c.l.b16 %v1951
      %v2048 = vunpack.c.l.b16 %v1952
      %v2049 = vunpack.c.l.b16 %v1953
      %v2050 = vunpack.c.l.b16 %v1954
      %v2051 = vunpack.c.l.b16 %v1955
      %v2052 = vunpack.c.l.b16 %v1956
      %v2053 = vunpack.c.l.b16 %v1957
      %v2054 = vunpack.c.l.b16 %v1958
      %v2055 = vunpack.c.l.b16 %v1959
      %v2056 = vunpack.c.l.b16 %v1960
      %v2057 = vunpack.c.l.b16 %v1961
      %v2058 = vunpack.c.l.b16 %v1962
      %v2059 = vunpack.c.l.b16 %v1963
      %v2060 = vunpack.c.l.b16 %v1964
      %v2061 = vunpack.c.l.b16 %v1965
      %v2062 = vunpack.c.l.b16 %v1966
      %v2063 = vunpack.c.l.b16 %v1967
      %v2064 = vunpack.c.l.b16 %v1968
      %v2065 = vunpack.c.l.b16 %v1969
      %v2066 = vunpack.c.l.b16 %v1970
      %v2067 = vunpack.c.l.b16 %v1971
      %v2068 = vunpack.c.l.b16 %v1972
      %v2069 = vunpack.c.l.b16 %v1973
      %v2070 = vunpack.c.l.b16 %v1974
      %v2071 = vunpack.c.l.b16 %v1975
      %v2072 = vunpack.c.l.b16 %v1976
      %v2073 = vunpack.c.l.b16 %v1977
      %v2074 = vunpack.c.l.b16 %v1978
      %v2075 = vunpack.c.l.b16 %v1979
      %v2076 = vpack.c.b16 %v2029, %v2028
      %v2077 = vpack.c.b16 %v2031, %v2030
      %v2078 = vpack.c.b16 %v2033, %v2032
      %v2079 = vpack.c.b16 %v2035, %v2034
      %v2080 = vpack.c.b16 %v2037, %v2036
      %v2081 = vpack.c.b16 %v2039, %v2038
      %v2082 = vpack.c.b16 %v2041, %v2040
      %v2083 = vpack.c.b16 %v2043, %v2042
      %v2084 = vpack.c.b16 %v2045, %v2044
      %v2085 = vpack.c.b16 %v2047, %v2046
      %v2086 = vpack.c.b16 %v2049, %v2048
      %v2087 = vpack.c.b16 %v2051, %v2050
      %v2088 = vpack.c.b16 %v2053, %v2052
      %v2089 = vpack.c.b16 %v2055, %v2054
      %v2090 = vpack.c.b16 %v2057, %v2056
      %v2091 = vpack.c.b16 %v2059, %v2058
      %v2092 = vpack.c.b16 %v2061, %v2060
      %v2093 = vpack.c.b16 %v2063, %v2062
      %v2094 = vpack.c.b16 %v2065, %v2064
      %v2095 = vpack.c.b16 %v2067, %v2066
      %v2096 = vpack.c.b16 %v2069, %v2068
      %v2097 = vpack.c.b16 %v2071, %v2070
      %v2098 = vpack.c.b16 %v2073, %v2072
      %v2099 = vpack.c.b16 %v2075, %v2074
      %2124 = vmatprep.subr.bf16.mxu0 0
      %2125 = vmatpush1.bf16.msra.mxu0 %v2076
      %2126 = vmatprep.subr.bf16.mxu0 0
      %2127 = vmatpush1.bf16.msra.mxu0 %v2077
      %2128 = vmatprep.subr.bf16.mxu0 0
      %2129 = vmatpush1.bf16.msra.mxu0 %v2078
      %2130 = vmatprep.subr.bf16.mxu0 0
      %2131 = vmatpush1.bf16.msra.mxu0 %v2079
      %2132 = vmatprep.subr.bf16.mxu0 0
      %2133 = vmatpush1.bf16.msra.mxu0 %v2080
      %2134 = vmatprep.subr.bf16.mxu0 0
      %2135 = vmatpush1.bf16.msra.mxu0 %v2081
      %2136 = vmatprep.subr.bf16.mxu0 0
      %2137 = vmatpush1.bf16.msra.mxu0 %v2082
      %2138 = vmatprep.subr.bf16.mxu0 0
      %2139 = vmatpush1.bf16.msra.mxu0 %v2083
      %2140 = vmatprep.subr.bf16.mxu0 0
      %2141 = vmatpush1.bf16.msra.mxu0 %v2084
      %2142 = vmatprep.subr.bf16.mxu0 0
      %2143 = vmatpush1.bf16.msra.mxu0 %v2085
      %2144 = vmatprep.subr.bf16.mxu0 0
      %2145 = vmatpush1.bf16.msra.mxu0 %v2086
      %2146 = vmatprep.subr.bf16.mxu0 0
      %2147 = vmatpush1.bf16.msra.mxu0 %v2087
      %2148 = vmatprep.subr.bf16.mxu0 0
      %2149 = vmatpush1.bf16.msra.mxu0 %v2088
      %2150 = vmatprep.subr.bf16.mxu0 0
      %2151 = vmatpush1.bf16.msra.mxu0 %v2089
      %2152 = vmatprep.subr.bf16.mxu0 0
      %2153 = vmatpush1.bf16.msra.mxu0 %v2090
      %2154 = vmatprep.subr.bf16.mxu0 0
      %2155 = vmatpush1.bf16.msra.mxu0 %v2091
      %2156 = vmatprep.mubr.bf16.mxu0 %v1884
      %2157 = vmatmul.mubr.bf16.gmra.mrb[0].mxu0 %v1883
      %v2158 = vpop.f32.mrb[0].mxu0
      %v2159 = vadd.f32 0.0, %v2158
      %v2160 = vpop.f32.mrb[0].mxu0
      %v2161 = vpop.f32.mrb[0].mxu0
      %v2162 = vadd.f32 0.0, %v2161
      %v2163 = vpop.f32.mrb[0].mxu0
      %2164 = vmatprep.mubr.bf16.mxu0 %v1887
      %2165 = vmatmul.mubr.bf16.gmra.mrb[0].mxu0 %v1886
      %v2166 = vpop.f32.mrb[0].mxu0
      %v2167 = vadd.f32 0.0, %v2166
      %v2168 = vpop.f32.mrb[0].mxu0
      %v2169 = vpop.f32.mrb[0].mxu0
      %v2170 = vadd.f32 0.0, %v2169
      %v2171 = vpop.f32.mrb[0].mxu0
      %2172 = vmatprep.mubr.bf16.mxu0 %v1890
      %2173 = vmatmul.mubr.bf16.gmra.mrb[0].mxu0 %v1889
      %v2174 = vpop.f32.mrb[0].mxu0
      %v2175 = vadd.f32 0.0, %v2174
      %v2176 = vpop.f32.mrb[0].mxu0
      %v2177 = vpop.f32.mrb[0].mxu0
      %v2178 = vadd.f32 0.0, %v2177
      %v2179 = vpop.f32.mrb[0].mxu0
      %2180 = vmatprep.mubr.bf16.mxu0 %v1893
      %2181 = vmatmul.mubr.bf16.gmra.mrb[0].mxu0 %v1892
      %v2182 = vpop.f32.mrb[0].mxu0
      %v2183 = vadd.f32 0.0, %v2182
      %v2184 = vpop.f32.mrb[0].mxu0
      %v2185 = vpop.f32.mrb[0].mxu0
      %v2186 = vadd.f32 0.0, %v2185
      %v2187 = vpop.f32.mrb[0].mxu0
      %2188 = vmatprep.mubr.bf16.mxu0 %v1896
      %2189 = vmatmul.mubr.bf16.gmra.mrb[0].mxu0 %v1895
      %v2190 = vpop.f32.mrb[0].mxu0
      %v2191 = vadd.f32 0.0, %v2190
      %v2192 = vpop.f32.mrb[0].mxu0
      %v2193 = vpop.f32.mrb[0].mxu0
      %v2194 = vadd.f32 0.0, %v2193
      %v2195 = vpop.f32.mrb[0].mxu0
      %2196 = vmatprep.mubr.bf16.mxu0 %v1899
      %2197 = vmatmul.mubr.bf16.gmra.mrb[0].mxu0 %v1898
      %v2198 = vpop.f32.mrb[0].mxu0
      %v2199 = vadd.f32 0.0, %v2198
      %v2200 = vpop.f32.mrb[0].mxu0
      %v2201 = vpop.f32.mrb[0].mxu0
      %v2202 = vadd.f32 0.0, %v2201
      %v2203 = vpop.f32.mrb[0].mxu0
      %2204 = vmatprep.mubr.bf16.mxu0 %v1902
      %2205 = vmatmul.mubr.bf16.gmra.mrb[0].mxu0 %v1901
      %v2206 = vpop.f32.mrb[0].mxu0
      %v2207 = vadd.f32 0.0, %v2206
      %v2208 = vpop.f32.mrb[0].mxu0
      %v2209 = vpop.f32.mrb[0].mxu0
      %v2210 = vadd.f32 0.0, %v2209
      %v2211 = vpop.f32.mrb[0].mxu0
      %2212 = vmatprep.mubr.bf16.mxu0 %v1905
      %2213 = vmatmul.mubr.bf16.gmra.mrb[0].mxu0 %v1904
      %v2214 = vpop.f32.mrb[0].mxu0
      %v2215 = vadd.f32 0.0, %v2214
      %v2216 = vpop.f32.mrb[0].mxu0
      %v2217 = vpop.f32.mrb[0].mxu0
      %v2218 = vadd.f32 0.0, %v2217
      %v2219 = vpop.f32.mrb[0].mxu0
      %2220 = vmatprep.mubr.bf16.mxu0 %v1908
      %2221 = vmatmul.mubr.bf16.gmra.mrb[0].mxu0 %v1907
      %v2222 = vpop.f32.mrb[0].mxu0
      %v2223 = vadd.f32 0.0, %v2222
      %v2224 = vpop.f32.mrb[0].mxu0
      %v2225 = vpop.f32.mrb[0].mxu0
      %v2226 = vadd.f32 0.0, %v2225
      %v2227 = vpop.f32.mrb[0].mxu0
      %2228 = vmatprep.mubr.bf16.mxu0 %v1911
      %2229 = vmatmul.mubr.bf16.gmra.mrb[0].mxu0 %v1910
      %v2230 = vpop.f32.mrb[0].mxu0
      %v2231 = vadd.f32 0.0, %v2230
      %v2232 = vpop.f32.mrb[0].mxu0
      %v2233 = vpop.f32.mrb[0].mxu0
      %v2234 = vadd.f32 0.0, %v2233
      %v2235 = vpop.f32.mrb[0].mxu0
      %2236 = vmatprep.mubr.bf16.mxu0 %v1914
      %2237 = vmatmul.mubr.bf16.gmra.mrb[0].mxu0 %v1913
      %v2238 = vpop.f32.mrb[0].mxu0
      %v2239 = vadd.f32 0.0, %v2238
      %v2240 = vpop.f32.mrb[0].mxu0
      %v2241 = vpop.f32.mrb[0].mxu0
      %v2242 = vadd.f32 0.0, %v2241
      %v2243 = vpop.f32.mrb[0].mxu0
      %2244 = vmatprep.mubr.bf16.mxu0 %v1917
      %2245 = vmatmul.mubr.bf16.gmra.mrb[0].mxu0 %v1916
      %v2246 = vpop.f32.mrb[0].mxu0
      %v2247 = vadd.f32 0.0, %v2246
      %v2248 = vpop.f32.mrb[0].mxu0
      %v2249 = vpop.f32.mrb[0].mxu0
      %v2250 = vadd.f32 0.0, %v2249
      %v2251 = vpop.f32.mrb[0].mxu0
      %2252 = vmatprep.mubr.bf16.mxu0 %v1920
      %2253 = vmatmul.mubr.bf16.gmra.mrb[0].mxu0 %v1919
      %v2254 = vpop.f32.mrb[0].mxu0
      %v2255 = vadd.f32 0.0, %v2254
      %v2256 = vpop.f32.mrb[0].mxu0
      %v2257 = vpop.f32.mrb[0].mxu0
      %v2258 = vadd.f32 0.0, %v2257
      %v2259 = vpop.f32.mrb[0].mxu0
      %2260 = vmatprep.mubr.bf16.mxu0 %v1923
      %2261 = vmatmul.mubr.bf16.gmra.mrb[0].mxu0 %v1922
      %v2262 = vpop.f32.mrb[0].mxu0
      %v2263 = vadd.f32 0.0, %v2262
      %v2264 = vpop.f32.mrb[0].mxu0
      %v2265 = vpop.f32.mrb[0].mxu0
      %v2266 = vadd.f32 0.0, %v2265
      %v2267 = vpop.f32.mrb[0].mxu0
      %2268 = vmatprep.mubr.bf16.mxu0 %v1926
      %2269 = vmatmul.mubr.bf16.gmra.mrb[0].mxu0 %v1925
      %v2270 = vpop.f32.mrb[0].mxu0
      %v2271 = vadd.f32 0.0, %v2270
      %v2272 = vpop.f32.mrb[0].mxu0
      %v2273 = vpop.f32.mrb[0].mxu0
      %v2274 = vadd.f32 0.0, %v2273
      %v2275 = vpop.f32.mrb[0].mxu0
      %2276 = vmatprep.mubr.bf16.mxu0 %v1929
      %2277 = vmatmul.mubr.bf16.gmra.mrb[0].mxu0 %v1928
      %v2278 = vpop.f32.mrb[0].mxu0
      %v2279 = vadd.f32 0.0, %v2278
      %v2280 = vpop.f32.mrb[0].mxu0
      %v2281 = vpop.f32.mrb[0].mxu0
      %v2282 = vadd.f32 0.0, %v2281
      %v2283 = vpop.f32.mrb[0].mxu0
      %2284 = vdwg.mxu0
      %2285 = vmatprep.subr.bf16.mxu0 0
      %2286 = vmatpush1.bf16.msra.mxu0 %v2092
      %2287 = vmatprep.subr.bf16.mxu0 0
      %2288 = vmatpush1.bf16.msra.mxu0 %v2093
      %2289 = vmatprep.subr.bf16.mxu0 0
      %2290 = vmatpush1.bf16.msra.mxu0 %v2094
      %2291 = vmatprep.subr.bf16.mxu0 0
      %2292 = vmatpush1.bf16.msra.mxu0 %v2095
      %2293 = vmatprep.subr.bf16.mxu0 0
      %2294 = vmatpush1.bf16.msra.mxu0 %v2096
      %2295 = vmatprep.subr.bf16.mxu0 0
      %2296 = vmatpush1.bf16.msra.mxu0 %v2097
      %2297 = vmatprep.subr.bf16.mxu0 0
      %2298 = vmatpush1.bf16.msra.mxu0 %v2098
      %2299 = vmatprep.subr.bf16.mxu0 0
      %2300 = vmatpush1.bf16.msra.mxu0 %v2099
      %2301 = vmatprep.subr.bf16.mxu0 0
      %2302 = vmatpush1.bf16.msra.mxu0 0
      %2303 = vmatprep.subr.bf16.mxu0 0
      %2304 = vmatpush1.bf16.msra.mxu0 0
      %2305 = vmatprep.subr.bf16.mxu0 0
      %2306 = vmatpush1.bf16.msra.mxu0 0
      %2307 = vmatprep.subr.bf16.mxu0 0
      %2308 = vmatpush1.bf16.msra.mxu0 0
      %2309 = vmatprep.subr.bf16.mxu0 0
      %2310 = vmatpush1.bf16.msra.mxu0 0
      %2311 = vmatprep.subr.bf16.mxu0 0
      %2312 = vmatpush1.bf16.msra.mxu0 0
      %2313 = vmatprep.subr.bf16.mxu0 0
      %2314 = vmatpush1.bf16.msra.mxu0 0
      %2315 = vmatprep.subr.bf16.mxu0 0
      %2316 = vmatpush1.bf16.msra.mxu0 0
      %2317 = vmatprep.mubr.bf16.mxu0 0
      %2318 = vmatmul.mubr.bf16.gmra.mrb[0].mxu0 %v1885
      %v2319 = vpop.f32.mrb[0].mxu0
      %v2320 = vadd.f32 %v2159, %v2319
      %v2321 = vpop.f32.mrb[0].mxu0
      %v2322 = vpop.f32.mrb[0].mxu0
      %v2323 = vadd.f32 %v2162, %v2322
      %v2324 = vpop.f32.mrb[0].mxu0
      %2325 = vmatprep.mubr.bf16.mxu0 0
      %2326 = vmatmul.mubr.bf16.gmra.mrb[0].mxu0 %v1888
      %v2327 = vpop.f32.mrb[0].mxu0
      %v2328 = vadd.f32 %v2167, %v2327
      %v2329 = vpop.f32.mrb[0].mxu0
      %v2330 = vpop.f32.mrb[0].mxu0
      %v2331 = vadd.f32 %v2170, %v2330
      %v2332 = vpop.f32.mrb[0].mxu0
      %2333 = vmatprep.mubr.bf16.mxu0 0
      %2334 = vmatmul.mubr.bf16.gmra.mrb[0].mxu0 %v1891
      %v2335 = vpop.f32.mrb[0].mxu0
      %v2336 = vadd.f32 %v2175, %v2335
      %v2337 = vpop.f32.mrb[0].mxu0
      %v2338 = vpop.f32.mrb[0].mxu0
      %v2339 = vadd.f32 %v2178, %v2338
      %v2340 = vpop.f32.mrb[0].mxu0
      %2341 = vmatprep.mubr.bf16.mxu0 0
      %2342 = vmatmul.mubr.bf16.gmra.mrb[0].mxu0 %v1894
      %v2343 = vpop.f32.mrb[0].mxu0
      %v2344 = vadd.f32 %v2183, %v2343
      %v2345 = vpop.f32.mrb[0].mxu0
      %v2346 = vpop.f32.mrb[0].mxu0
      %v2347 = vadd.f32 %v2186, %v2346
      %v2348 = vpop.f32.mrb[0].mxu0
      %2349 = vmatprep.mubr.bf16.mxu0 0
      %2350 = vmatmul.mubr.bf16.gmra.mrb[0].mxu0 %v1897
      %v2351 = vpop.f32.mrb[0].mxu0
      %v2352 = vadd.f32 %v2191, %v2351
      %v2353 = vpop.f32.mrb[0].mxu0
      %v2354 = vpop.f32.mrb[0].mxu0
      %v2355 = vadd.f32 %v2194, %v2354
      %v2356 = vpop.f32.mrb[0].mxu0
      %2357 = vmatprep.mubr.bf16.mxu0 0
      %2358 = vmatmul.mubr.bf16.gmra.mrb[0].mxu0 %v1900
      %v2359 = vpop.f32.mrb[0].mxu0
      %v2360 = vadd.f32 %v2199, %v2359
      %v2361 = vpop.f32.mrb[0].mxu0
      %v2362 = vpop.f32.mrb[0].mxu0
      %v2363 = vadd.f32 %v2202, %v2362
      %v2364 = vpop.f32.mrb[0].mxu0
      %2365 = vmatprep.mubr.bf16.mxu0 0
      %2366 = vmatmul.mubr.bf16.gmra.mrb[0].mxu0 %v1903
      %v2367 = vpop.f32.mrb[0].mxu0
      %v2368 = vadd.f32 %v2207, %v2367
      %v2369 = vpop.f32.mrb[0].mxu0
      %v2370 = vpop.f32.mrb[0].mxu0
      %v2371 = vadd.f32 %v2210, %v2370
      %v2372 = vpop.f32.mrb[0].mxu0
      %2373 = vmatprep.mubr.bf16.mxu0 0
      %2374 = vmatmul.mubr.bf16.gmra.mrb[0].mxu0 %v1906
      %v2375 = vpop.f32.mrb[0].mxu0
      %v2376 = vadd.f32 %v2215, %v2375
      %v2377 = vpop.f32.mrb[0].mxu0
      %v2378 = vpop.f32.mrb[0].mxu0
      %v2379 = vadd.f32 %v2218, %v2378
      %v2380 = vpop.f32.mrb[0].mxu0
      %2381 = vmatprep.mubr.bf16.mxu0 0
      %2382 = vmatmul.mubr.bf16.gmra.mrb[0].mxu0 %v1909
      %v2383 = vpop.f32.mrb[0].mxu0
      %v2384 = vadd.f32 %v2223, %v2383
      %v2385 = vpop.f32.mrb[0].mxu0
      %v2386 = vpop.f32.mrb[0].mxu0
      %v2387 = vadd.f32 %v2226, %v2386
      %v2388 = vpop.f32.mrb[0].mxu0
      %2389 = vmatprep.mubr.bf16.mxu0 0
      %2390 = vmatmul.mubr.bf16.gmra.mrb[0].mxu0 %v1912
      %v2391 = vpop.f32.mrb[0].mxu0
      %v2392 = vadd.f32 %v2231, %v2391
      %v2393 = vpop.f32.mrb[0].mxu0
      %v2394 = vpop.f32.mrb[0].mxu0
      %v2395 = vadd.f32 %v2234, %v2394
      %v2396 = vpop.f32.mrb[0].mxu0
      %2397 = vmatprep.mubr.bf16.mxu0 0
      %2398 = vmatmul.mubr.bf16.gmra.mrb[0].mxu0 %v1915
      %v2399 = vpop.f32.mrb[0].mxu0
      %v2400 = vadd.f32 %v2239, %v2399
      %v2401 = vpop.f32.mrb[0].mxu0
      %v2402 = vpop.f32.mrb[0].mxu0
      %v2403 = vadd.f32 %v2242, %v2402
      %v2404 = vpop.f32.mrb[0].mxu0
      %2405 = vmatprep.mubr.bf16.mxu0 0
      %2406 = vmatmul.mubr.bf16.gmra.mrb[0].mxu0 %v1918
      %v2407 = vpop.f32.mrb[0].mxu0
      %v2408 = vadd.f32 %v2247, %v2407
      %v2409 = vpop.f32.mrb[0].mxu0
      %v2410 = vpop.f32.mrb[0].mxu0
      %v2411 = vadd.f32 %v2250, %v2410
      %v2412 = vpop.f32.mrb[0].mxu0
      %2413 = vmatprep.mubr.bf16.mxu0 0
      %2414 = vmatmul.mubr.bf16.gmra.mrb[0].mxu0 %v1921
      %v2415 = vpop.f32.mrb[0].mxu0
      %v2416 = vadd.f32 %v2255, %v2415
      %v2417 = vpop.f32.mrb[0].mxu0
      %v2418 = vpop.f32.mrb[0].mxu0
      %v2419 = vadd.f32 %v2258, %v2418
      %v2420 = vpop.f32.mrb[0].mxu0
      %2421 = vmatprep.mubr.bf16.mxu0 0
      %2422 = vmatmul.mubr.bf16.gmra.mrb[0].mxu0 %v1924
      %v2423 = vpop.f32.mrb[0].mxu0
      %v2424 = vadd.f32 %v2263, %v2423
      %v2425 = vpop.f32.mrb[0].mxu0
      %v2426 = vpop.f32.mrb[0].mxu0
      %v2427 = vadd.f32 %v2266, %v2426
      %v2428 = vpop.f32.mrb[0].mxu0
      %2429 = vmatprep.mubr.bf16.mxu0 0
      %2430 = vmatmul.mubr.bf16.gmra.mrb[0].mxu0 %v1927
      %v2431 = vpop.f32.mrb[0].mxu0
      %v2432 = vadd.f32 %v2271, %v2431
      %v2433 = vpop.f32.mrb[0].mxu0
      %v2434 = vpop.f32.mrb[0].mxu0
      %v2435 = vadd.f32 %v2274, %v2434
      %v2436 = vpop.f32.mrb[0].mxu0
      %2437 = vmatprep.mubr.bf16.mxu0 0
      %2438 = vmatmul.mubr.bf16.gmra.mrb[0].mxu0 %v1930
      %v2439 = vpop.f32.mrb[0].mxu0
      %v2440 = vadd.f32 %v2279, %v2439
      %v2441 = vpop.f32.mrb[0].mxu0
      %v2442 = vpop.f32.mrb[0].mxu0
      %v2443 = vadd.f32 %v2282, %v2442
      %v2444 = vpop.f32.mrb[0].mxu0
      %2445 = vdwg.mxu0
      %v2446 = vadd.f32 %v1756, %v2320
      %v2447 = vadd.f32 %v1759, %v2323
      %v2448 = vadd.f32 %v1764, %v2328
      %v2449 = vadd.f32 %v1767, %v2331
      %v2450 = vadd.f32 %v1772, %v2336
      %v2451 = vadd.f32 %v1775, %v2339
      %v2452 = vadd.f32 %v1780, %v2344
      %v2453 = vadd.f32 %v1783, %v2347
      %v2454 = vadd.f32 %v1788, %v2352
      %v2455 = vadd.f32 %v1791, %v2355
      %v2456 = vadd.f32 %v1796, %v2360
      %v2457 = vadd.f32 %v1799, %v2363
      %v2458 = vadd.f32 %v1804, %v2368
      %v2459 = vadd.f32 %v1807, %v2371
      %v2460 = vadd.f32 %v1812, %v2376
      %v2461 = vadd.f32 %v1815, %v2379
      %v2462 = vadd.f32 %v1820, %v2384
      %v2463 = vadd.f32 %v1823, %v2387
      %v2464 = vadd.f32 %v1828, %v2392
      %v2465 = vadd.f32 %v1831, %v2395
      %v2466 = vadd.f32 %v1836, %v2400
      %v2467 = vadd.f32 %v1839, %v2403
      %v2468 = vadd.f32 %v1844, %v2408
      %v2469 = vadd.f32 %v1847, %v2411
      %v2470 = vadd.f32 %v1852, %v2416
      %v2471 = vadd.f32 %v1855, %v2419
      %v2472 = vadd.f32 %v1860, %v2424
      %v2473 = vadd.f32 %v1863, %v2427
      %v2474 = vadd.f32 %v1868, %v2432
      %v2475 = vadd.f32 %v1871, %v2435
      %v2476 = vadd.f32 %v1876, %v2440
      %v2477 = vadd.f32 %v1879, %v2443
      %v2478 = vld [vmem:[%s2] sm:$0x1]
      %v2480 = vlaneseq
      %v2481 = vshrl.u32 %v2480, 7
      %v2482 = vsub.s32 0, %v2481
      %v2483 = vrot.slane %v2478, %v2482
      %v2485 = vadd.f32 %v2446, %v2483
      %v2486 = vadd.f32 %v2447, %v2483
      %v2487 = vadd.f32 %v2448, %v2483
      %v2488 = vadd.f32 %v2449, %v2483
      %v2489 = vadd.f32 %v2450, %v2483
      %v2490 = vadd.f32 %v2451, %v2483
      %v2491 = vadd.f32 %v2452, %v2483
      %v2492 = vadd.f32 %v2453, %v2483
      %v2493 = vadd.f32 %v2454, %v2483
      %v2494 = vadd.f32 %v2455, %v2483
      %v2495 = vadd.f32 %v2456, %v2483
      %v2496 = vadd.f32 %v2457, %v2483
      %v2497 = vadd.f32 %v2458, %v2483
      %v2498 = vadd.f32 %v2459, %v2483
      %v2499 = vadd.f32 %v2460, %v2483
      %v2500 = vadd.f32 %v2461, %v2483
      %v2501 = vadd.f32 %v2462, %v2483
      %v2502 = vadd.f32 %v2463, %v2483
      %v2503 = vadd.f32 %v2464, %v2483
      %v2504 = vadd.f32 %v2465, %v2483
      %v2505 = vadd.f32 %v2466, %v2483
      %v2506 = vadd.f32 %v2467, %v2483
      %v2507 = vadd.f32 %v2468, %v2483
      %v2508 = vadd.f32 %v2469, %v2483
      %v2509 = vadd.f32 %v2470, %v2483
      %v2510 = vadd.f32 %v2471, %v2483
      %v2511 = vadd.f32 %v2472, %v2483
      %v2512 = vadd.f32 %v2473, %v2483
      %v2513 = vadd.f32 %v2474, %v2483
      %v2514 = vadd.f32 %v2475, %v2483
      %v2515 = vadd.f32 %v2476, %v2483
      %v2516 = vadd.f32 %v2477, %v2483
      %v2517 = vmax.f32 %v2485, 0.0
      %v2518 = vmax.f32 %v2486, 0.0
      %v2519 = vmax.f32 %v2487, 0.0
      %v2520 = vmax.f32 %v2488, 0.0
      %v2521 = vmax.f32 %v2489, 0.0
      %v2522 = vmax.f32 %v2490, 0.0
      %v2523 = vmax.f32 %v2491, 0.0
      %v2524 = vmax.f32 %v2492, 0.0
      %v2525 = vmax.f32 %v2493, 0.0
      %v2526 = vmax.f32 %v2494, 0.0
      %v2527 = vmax.f32 %v2495, 0.0
      %v2528 = vmax.f32 %v2496, 0.0
      %v2529 = vmax.f32 %v2497, 0.0
      %v2530 = vmax.f32 %v2498, 0.0
      %v2531 = vmax.f32 %v2499, 0.0
      %v2532 = vmax.f32 %v2500, 0.0
      %v2533 = vmax.f32 %v2501, 0.0
      %v2534 = vmax.f32 %v2502, 0.0
      %v2535 = vmax.f32 %v2503, 0.0
      %v2536 = vmax.f32 %v2504, 0.0
      %v2537 = vmax.f32 %v2505, 0.0
      %v2538 = vmax.f32 %v2506, 0.0
      %v2539 = vmax.f32 %v2507, 0.0
      %v2540 = vmax.f32 %v2508, 0.0
      %v2541 = vmax.f32 %v2509, 0.0
      %v2542 = vmax.f32 %v2510, 0.0
      %v2543 = vmax.f32 %v2511, 0.0
      %v2544 = vmax.f32 %v2512, 0.0
      %v2545 = vmax.f32 %v2513, 0.0
      %v2546 = vmax.f32 %v2514, 0.0
      %v2547 = vmax.f32 %v2515, 0.0
      %v2548 = vmax.f32 %v2516, 0.0
      %v2549 = vpack.c.bf16 %v2518, %v2517
      %v2550 = vpack.c.bf16 %v2520, %v2519
      %v2551 = vpack.c.bf16 %v2522, %v2521
      %v2552 = vpack.c.bf16 %v2524, %v2523
      %v2553 = vpack.c.bf16 %v2526, %v2525
      %v2554 = vpack.c.bf16 %v2528, %v2527
      %v2555 = vpack.c.bf16 %v2530, %v2529
      %v2556 = vpack.c.bf16 %v2532, %v2531
      %v2557 = vpack.c.bf16 %v2534, %v2533
      %v2558 = vpack.c.bf16 %v2536, %v2535
      %v2559 = vpack.c.bf16 %v2538, %v2537
      %v2560 = vpack.c.bf16 %v2540, %v2539
      %v2561 = vpack.c.bf16 %v2542, %v2541
      %v2562 = vpack.c.bf16 %v2544, %v2543
      %v2563 = vpack.c.bf16 %v2546, %v2545
      %v2564 = vpack.c.bf16 %v2548, %v2547
      %2565 = vst [vmem:[#allocation3] sm:$0xff] 0
      %2566 = vst [vmem:[#allocation3 + $0x8] sm:$0xff] 0
      %2567 = vst [vmem:[#allocation3 + $0x10] sm:$0xff] 0
      %s2568 = scalar_lea.vmem [#allocation3], 408
      %2569 = vst [vmem:[%s2568] sm:$0xff] 0
      %2570 = vst [vmem:[%s2568 + $0x8] sm:$0xff] 0
      %2571 = vst [vmem:[%s2568 + $0x10] sm:$0xff] 0
      %s2572 = scalar_lea.vmem [#allocation3], 24
      %v2573 = vld [vmem:[%s2572] sm:$0x1]
      %v2574 = vsel %vm268, 0, %v2573
      %2575 = vst [vmem:[%s2572] sm:$0x1] %v2574
      %v2576 = vld [vmem:[%s2572 + $0x18] sm:$0x1]
      %v2577 = vsel %vm268, 0, %v2576
      %2578 = vst [vmem:[%s2572 + $0x18] sm:$0x1] %v2577
      %v2579 = vld [vmem:[%s2572 + $0x30] sm:$0x1]
      %v2580 = vsel %vm268, 0, %v2579
      %2581 = vst [vmem:[%s2572 + $0x30] sm:$0x1] %v2580
      %v2582 = vld [vmem:[%s2572 + $0x48] sm:$0x1]
      %v2583 = vsel %vm268, 0, %v2582
      %2584 = vst [vmem:[%s2572 + $0x48] sm:$0x1] %v2583
      %v2585 = vld [vmem:[%s2572 + $0x60] sm:$0x1]
      %v2586 = vsel %vm268, 0, %v2585
      %2587 = vst [vmem:[%s2572 + $0x60] sm:$0x1] %v2586
      %v2588 = vld [vmem:[%s2572 + $0x78] sm:$0x1]
      %v2589 = vsel %vm268, 0, %v2588
      %2590 = vst [vmem:[%s2572 + $0x78] sm:$0x1] %v2589
      %v2591 = vld [vmem:[%s2572 + $0x90] sm:$0x1]
      %v2592 = vsel %vm268, 0, %v2591
      %2593 = vst [vmem:[%s2572 + $0x90] sm:$0x1] %v2592
      %v2594 = vld [vmem:[%s2572 + $0xa8] sm:$0x1]
      %v2595 = vsel %vm268, 0, %v2594
      %2596 = vst [vmem:[%s2572 + $0xa8] sm:$0x1] %v2595
      %v2597 = vld [vmem:[%s2572 + $0xc0] sm:$0x1]
      %v2598 = vsel %vm268, 0, %v2597
      %2599 = vst [vmem:[%s2572 + $0xc0] sm:$0x1] %v2598
      %v2600 = vld [vmem:[%s2572 + $0xd8] sm:$0x1]
      %v2601 = vsel %vm268, 0, %v2600
      %2602 = vst [vmem:[%s2572 + $0xd8] sm:$0x1] %v2601
      %v2603 = vld [vmem:[%s2572 + $0xf0] sm:$0x1]
      %v2604 = vsel %vm268, 0, %v2603
      %2605 = vst [vmem:[%s2572 + $0xf0] sm:$0x1] %v2604
      %v2606 = vld [vmem:[%s2572 + $0x108] sm:$0x1]
      %v2607 = vsel %vm268, 0, %v2606
      %2608 = vst [vmem:[%s2572 + $0x108] sm:$0x1] %v2607
      %v2609 = vld [vmem:[%s2572 + $0x120] sm:$0x1]
      %v2610 = vsel %vm268, 0, %v2609
      %2611 = vst [vmem:[%s2572 + $0x120] sm:$0x1] %v2610
      %v2612 = vld [vmem:[%s2572 + $0x138] sm:$0x1]
      %v2613 = vsel %vm268, 0, %v2612
      %2614 = vst [vmem:[%s2572 + $0x138] sm:$0x1] %v2613
      %v2615 = vld [vmem:[%s2572 + $0x150] sm:$0x1]
      %v2616 = vsel %vm268, 0, %v2615
      %2617 = vst [vmem:[%s2572 + $0x150] sm:$0x1] %v2616
      %v2618 = vld [vmem:[%s2572 + $0x168] sm:$0x1]
      %v2619 = vsel %vm268, 0, %v2618
      %2620 = vst [vmem:[%s2572 + $0x168] sm:$0x1] %v2619
      %v2621 = vld [vmem:[%s2572 + $0x10] sm:$0x80]
      %v2622 = vsel %vm319, 0, %v2621
      %2623 = vst [vmem:[%s2572 + $0x10] sm:$0x80] %v2622
      %v2624 = vld [vmem:[%s2572 + $0x28] sm:$0x80]
      %v2625 = vsel %vm319, 0, %v2624
      %2626 = vst [vmem:[%s2572 + $0x28] sm:$0x80] %v2625
      %v2627 = vld [vmem:[%s2572 + $0x40] sm:$0x80]
      %v2628 = vsel %vm319, 0, %v2627
      %2629 = vst [vmem:[%s2572 + $0x40] sm:$0x80] %v2628
      %v2630 = vld [vmem:[%s2572 + $0x58] sm:$0x80]
      %v2631 = vsel %vm319, 0, %v2630
      %2632 = vst [vmem:[%s2572 + $0x58] sm:$0x80] %v2631
      %v2633 = vld [vmem:[%s2572 + $0x70] sm:$0x80]
      %v2634 = vsel %vm319, 0, %v2633
      %2635 = vst [vmem:[%s2572 + $0x70] sm:$0x80] %v2634
      %v2636 = vld [vmem:[%s2572 + $0x88] sm:$0x80]
      %v2637 = vsel %vm319, 0, %v2636
      %2638 = vst [vmem:[%s2572 + $0x88] sm:$0x80] %v2637
      %v2639 = vld [vmem:[%s2572 + $0xa0] sm:$0x80]
      %v2640 = vsel %vm319, 0, %v2639
      %2641 = vst [vmem:[%s2572 + $0xa0] sm:$0x80] %v2640
      %v2642 = vld [vmem:[%s2572 + $0xb8] sm:$0x80]
      %v2643 = vsel %vm319, 0, %v2642
      %2644 = vst [vmem:[%s2572 + $0xb8] sm:$0x80] %v2643
      %v2645 = vld [vmem:[%s2572 + $0xd0] sm:$0x80]
      %v2646 = vsel %vm319, 0, %v2645
      %2647 = vst [vmem:[%s2572 + $0xd0] sm:$0x80] %v2646
      %v2648 = vld [vmem:[%s2572 + $0xe8] sm:$0x80]
      %v2649 = vsel %vm319, 0, %v2648
      %2650 = vst [vmem:[%s2572 + $0xe8] sm:$0x80] %v2649
      %v2651 = vld [vmem:[%s2572 + $0x100] sm:$0x80]
      %v2652 = vsel %vm319, 0, %v2651
      %2653 = vst [vmem:[%s2572 + $0x100] sm:$0x80] %v2652
      %v2654 = vld [vmem:[%s2572 + $0x118] sm:$0x80]
      %v2655 = vsel %vm319, 0, %v2654
      %2656 = vst [vmem:[%s2572 + $0x118] sm:$0x80] %v2655
      %v2657 = vld [vmem:[%s2572 + $0x130] sm:$0x80]
      %v2658 = vsel %vm319, 0, %v2657
      %2659 = vst [vmem:[%s2572 + $0x130] sm:$0x80] %v2658
      %v2660 = vld [vmem:[%s2572 + $0x148] sm:$0x80]
      %v2661 = vsel %vm319, 0, %v2660
      %2662 = vst [vmem:[%s2572 + $0x148] sm:$0x80] %v2661
      %v2663 = vld [vmem:[%s2572 + $0x160] sm:$0x80]
      %v2664 = vsel %vm319, 0, %v2663
      %2665 = vst [vmem:[%s2572 + $0x160] sm:$0x80] %v2664
      %v2666 = vld [vmem:[%s2572 + $0x178] sm:$0x80]
      %v2667 = vsel %vm319, 0, %v2666
      %2668 = vst [vmem:[%s2572 + $0x178] sm:$0x80] %v2667
      %v2670 = vshrl.u32 %v2549, 16
      %v2672 = vrot.slane %v2670, 7
      %v2673 = vshll.u32 %v2549, 16
      %v2675 = vor.u32 %v2672, %v2673
      %v2677 = vshrl.u32 %v2550, 16
      %v2679 = vrot.slane %v2677, 7
      %v2680 = vshll.u32 %v2550, 16
      %v2682 = vor.u32 %v2679, %v2680
      %v2684 = vshrl.u32 %v2551, 16
      %v2686 = vrot.slane %v2684, 7
      %v2687 = vshll.u32 %v2551, 16
      %v2689 = vor.u32 %v2686, %v2687
      %v2691 = vshrl.u32 %v2552, 16
      %v2693 = vrot.slane %v2691, 7
      %v2694 = vshll.u32 %v2552, 16
      %v2696 = vor.u32 %v2693, %v2694
      %v2698 = vshrl.u32 %v2553, 16
      %v2700 = vrot.slane %v2698, 7
      %v2701 = vshll.u32 %v2553, 16
      %v2703 = vor.u32 %v2700, %v2701
      %v2705 = vshrl.u32 %v2554, 16
      %v2707 = vrot.slane %v2705, 7
      %v2708 = vshll.u32 %v2554, 16
      %v2710 = vor.u32 %v2707, %v2708
      %v2712 = vshrl.u32 %v2555, 16
      %v2714 = vrot.slane %v2712, 7
      %v2715 = vshll.u32 %v2555, 16
      %v2717 = vor.u32 %v2714, %v2715
      %v2719 = vshrl.u32 %v2556, 16
      %v2721 = vrot.slane %v2719, 7
      %v2722 = vshll.u32 %v2556, 16
      %v2724 = vor.u32 %v2721, %v2722
      %v2726 = vshrl.u32 %v2557, 16
      %v2728 = vrot.slane %v2726, 7
      %v2729 = vshll.u32 %v2557, 16
      %v2731 = vor.u32 %v2728, %v2729
      %v2733 = vshrl.u32 %v2558, 16
      %v2735 = vrot.slane %v2733, 7
      %v2736 = vshll.u32 %v2558, 16
      %v2738 = vor.u32 %v2735, %v2736
      %v2740 = vshrl.u32 %v2559, 16
      %v2742 = vrot.slane %v2740, 7
      %v2743 = vshll.u32 %v2559, 16
      %v2745 = vor.u32 %v2742, %v2743
      %v2747 = vshrl.u32 %v2560, 16
      %v2749 = vrot.slane %v2747, 7
      %v2750 = vshll.u32 %v2560, 16
      %v2752 = vor.u32 %v2749, %v2750
      %v2754 = vshrl.u32 %v2561, 16
      %v2756 = vrot.slane %v2754, 7
      %v2757 = vshll.u32 %v2561, 16
      %v2759 = vor.u32 %v2756, %v2757
      %v2761 = vshrl.u32 %v2562, 16
      %v2763 = vrot.slane %v2761, 7
      %v2764 = vshll.u32 %v2562, 16
      %v2766 = vor.u32 %v2763, %v2764
      %v2768 = vshrl.u32 %v2563, 16
      %v2770 = vrot.slane %v2768, 7
      %v2771 = vshll.u32 %v2563, 16
      %v2773 = vor.u32 %v2770, %v2771
      %v2775 = vshrl.u32 %v2564, 16
      %v2777 = vrot.slane %v2775, 7
      %v2778 = vshll.u32 %v2564, 16
      %v2780 = vor.u32 %v2777, %v2778
      %v2797 = vld [vmem:[%s2572] sm:$0xff]
      %v2798 = vsel %vm578, %v2675, %v2797
      %2799 = vst [vmem:[%s2572] sm:$0xff] %v2798
      %v2800 = vld [vmem:[%s2572 + $0x18] sm:$0xff]
      %v2801 = vsel %vm578, %v2682, %v2800
      %2802 = vst [vmem:[%s2572 + $0x18] sm:$0xff] %v2801
      %v2803 = vld [vmem:[%s2572 + $0x30] sm:$0xff]
      %v2804 = vsel %vm578, %v2689, %v2803
      %2805 = vst [vmem:[%s2572 + $0x30] sm:$0xff] %v2804
      %v2806 = vld [vmem:[%s2572 + $0x48] sm:$0xff]
      %v2807 = vsel %vm578, %v2696, %v2806
      %2808 = vst [vmem:[%s2572 + $0x48] sm:$0xff] %v2807
      %v2809 = vld [vmem:[%s2572 + $0x60] sm:$0xff]
      %v2810 = vsel %vm578, %v2703, %v2809
      %2811 = vst [vmem:[%s2572 + $0x60] sm:$0xff] %v2810
      %v2812 = vld [vmem:[%s2572 + $0x78] sm:$0xff]
      %v2813 = vsel %vm578, %v2710, %v2812
      %2814 = vst [vmem:[%s2572 + $0x78] sm:$0xff] %v2813
      %v2815 = vld [vmem:[%s2572 + $0x90] sm:$0xff]
      %v2816 = vsel %vm578, %v2717, %v2815
      %2817 = vst [vmem:[%s2572 + $0x90] sm:$0xff] %v2816
      %v2818 = vld [vmem:[%s2572 + $0xa8] sm:$0xff]
      %v2819 = vsel %vm578, %v2724, %v2818
      %2820 = vst [vmem:[%s2572 + $0xa8] sm:$0xff] %v2819
      %v2821 = vld [vmem:[%s2572 + $0xc0] sm:$0xff]
      %v2822 = vsel %vm578, %v2731, %v2821
      %2823 = vst [vmem:[%s2572 + $0xc0] sm:$0xff] %v2822
      %v2824 = vld [vmem:[%s2572 + $0xd8] sm:$0xff]
      %v2825 = vsel %vm578, %v2738, %v2824
      %2826 = vst [vmem:[%s2572 + $0xd8] sm:$0xff] %v2825
      %v2827 = vld [vmem:[%s2572 + $0xf0] sm:$0xff]
      %v2828 = vsel %vm578, %v2745, %v2827
      %2829 = vst [vmem:[%s2572 + $0xf0] sm:$0xff] %v2828
      %v2830 = vld [vmem:[%s2572 + $0x108] sm:$0xff]
      %v2831 = vsel %vm578, %v2752, %v2830
      %2832 = vst [vmem:[%s2572 + $0x108] sm:$0xff] %v2831
      %v2833 = vld [vmem:[%s2572 + $0x120] sm:$0xff]
      %v2834 = vsel %vm578, %v2759, %v2833
      %2835 = vst [vmem:[%s2572 + $0x120] sm:$0xff] %v2834
      %v2836 = vld [vmem:[%s2572 + $0x138] sm:$0xff]
      %v2837 = vsel %vm578, %v2766, %v2836
      %2838 = vst [vmem:[%s2572 + $0x138] sm:$0xff] %v2837
      %v2839 = vld [vmem:[%s2572 + $0x150] sm:$0xff]
      %v2840 = vsel %vm578, %v2773, %v2839
      %2841 = vst [vmem:[%s2572 + $0x150] sm:$0xff] %v2840
      %v2842 = vld [vmem:[%s2572 + $0x168] sm:$0xff]
      %v2843 = vsel %vm578, %v2780, %v2842
      %2844 = vst [vmem:[%s2572 + $0x168] sm:$0xff] %v2843
      %2845 = vst [vmem:[%s2572 + $0x8] sm:$0xff] %v2549
      %2846 = vst [vmem:[%s2572 + $0x20] sm:$0xff] %v2550
      %2847 = vst [vmem:[%s2572 + $0x38] sm:$0xff] %v2551
      %2848 = vst [vmem:[%s2572 + $0x50] sm:$0xff] %v2552
      %2849 = vst [vmem:[%s2572 + $0x68] sm:$0xff] %v2553
      %2850 = vst [vmem:[%s2572 + $0x80] sm:$0xff] %v2554
      %2851 = vst [vmem:[%s2572 + $0x98] sm:$0xff] %v2555
      %2852 = vst [vmem:[%s2572 + $0xb0] sm:$0xff] %v2556
      %2853 = vst [vmem:[%s2572 + $0xc8] sm:$0xff] %v2557
      %2854 = vst [vmem:[%s2572 + $0xe0] sm:$0xff] %v2558
      %2855 = vst [vmem:[%s2572 + $0xf8] sm:$0xff] %v2559
      %2856 = vst [vmem:[%s2572 + $0x110] sm:$0xff] %v2560
      %2857 = vst [vmem:[%s2572 + $0x128] sm:$0xff] %v2561
      %2858 = vst [vmem:[%s2572 + $0x140] sm:$0xff] %v2562
      %2859 = vst [vmem:[%s2572 + $0x158] sm:$0xff] %v2563
      %2860 = vst [vmem:[%s2572 + $0x170] sm:$0xff] %v2564
      %v2861 = vrot.slane %v2673, 1
      %v2862 = vor.u32 %v2670, %v2861
      %v2863 = vrot.slane %v2680, 1
      %v2864 = vor.u32 %v2677, %v2863
      %v2865 = vrot.slane %v2687, 1
      %v2866 = vor.u32 %v2684, %v2865
      %v2867 = vrot.slane %v2694, 1
      %v2868 = vor.u32 %v2691, %v2867
      %v2869 = vrot.slane %v2701, 1
      %v2870 = vor.u32 %v2698, %v2869
      %v2871 = vrot.slane %v2708, 1
      %v2872 = vor.u32 %v2705, %v2871
      %v2873 = vrot.slane %v2715, 1
      %v2874 = vor.u32 %v2712, %v2873
      %v2875 = vrot.slane %v2722, 1
      %v2876 = vor.u32 %v2719, %v2875
      %v2877 = vrot.slane %v2729, 1
      %v2878 = vor.u32 %v2726, %v2877
      %v2879 = vrot.slane %v2736, 1
      %v2880 = vor.u32 %v2733, %v2879
      %v2881 = vrot.slane %v2743, 1
      %v2882 = vor.u32 %v2740, %v2881
      %v2883 = vrot.slane %v2750, 1
      %v2884 = vor.u32 %v2747, %v2883
      %v2885 = vrot.slane %v2757, 1
      %v2886 = vor.u32 %v2754, %v2885
      %v2887 = vrot.slane %v2764, 1
      %v2888 = vor.u32 %v2761, %v2887
      %v2889 = vrot.slane %v2771, 1
      %v2890 = vor.u32 %v2768, %v2889
      %v2891 = vrot.slane %v2778, 1
      %v2892 = vor.u32 %v2775, %v2891
      %v2909 = vld [vmem:[%s2572 + $0x10] sm:$0xff]
      %v2910 = vsel %vm708, %v2862, %v2909
      %2911 = vst [vmem:[%s2572 + $0x10] sm:$0xff] %v2910
      %v2912 = vld [vmem:[%s2572 + $0x28] sm:$0xff]
      %v2913 = vsel %vm708, %v2864, %v2912
      %2914 = vst [vmem:[%s2572 + $0x28] sm:$0xff] %v2913
      %v2915 = vld [vmem:[%s2572 + $0x40] sm:$0xff]
      %v2916 = vsel %vm708, %v2866, %v2915
      %2917 = vst [vmem:[%s2572 + $0x40] sm:$0xff] %v2916
      %v2918 = vld [vmem:[%s2572 + $0x58] sm:$0xff]
      %v2919 = vsel %vm708, %v2868, %v2918
      %2920 = vst [vmem:[%s2572 + $0x58] sm:$0xff] %v2919
      %v2921 = vld [vmem:[%s2572 + $0x70] sm:$0xff]
      %v2922 = vsel %vm708, %v2870, %v2921
      %2923 = vst [vmem:[%s2572 + $0x70] sm:$0xff] %v2922
      %v2924 = vld [vmem:[%s2572 + $0x88] sm:$0xff]
      %v2925 = vsel %vm708, %v2872, %v2924
      %2926 = vst [vmem:[%s2572 + $0x88] sm:$0xff] %v2925
      %v2927 = vld [vmem:[%s2572 + $0xa0] sm:$0xff]
      %v2928 = vsel %vm708, %v2874, %v2927
      %2929 = vst [vmem:[%s2572 + $0xa0] sm:$0xff] %v2928
      %v2930 = vld [vmem:[%s2572 + $0xb8] sm:$0xff]
      %v2931 = vsel %vm708, %v2876, %v2930
      %2932 = vst [vmem:[%s2572 + $0xb8] sm:$0xff] %v2931
      %v2933 = vld [vmem:[%s2572 + $0xd0] sm:$0xff]
      %v2934 = vsel %vm708, %v2878, %v2933
      %2935 = vst [vmem:[%s2572 + $0xd0] sm:$0xff] %v2934
      %v2936 = vld [vmem:[%s2572 + $0xe8] sm:$0xff]
      %v2937 = vsel %vm708, %v2880, %v2936
      %2938 = vst [vmem:[%s2572 + $0xe8] sm:$0xff] %v2937
      %v2939 = vld [vmem:[%s2572 + $0x100] sm:$0xff]
      %v2940 = vsel %vm708, %v2882, %v2939
      %2941 = vst [vmem:[%s2572 + $0x100] sm:$0xff] %v2940
      %v2942 = vld [vmem:[%s2572 + $0x118] sm:$0xff]
      %v2943 = vsel %vm708, %v2884, %v2942
      %2944 = vst [vmem:[%s2572 + $0x118] sm:$0xff] %v2943
      %v2945 = vld [vmem:[%s2572 + $0x130] sm:$0xff]
      %v2946 = vsel %vm708, %v2886, %v2945
      %2947 = vst [vmem:[%s2572 + $0x130] sm:$0xff] %v2946
      %v2948 = vld [vmem:[%s2572 + $0x148] sm:$0xff]
      %v2949 = vsel %vm708, %v2888, %v2948
      %2950 = vst [vmem:[%s2572 + $0x148] sm:$0xff] %v2949
      %v2951 = vld [vmem:[%s2572 + $0x160] sm:$0xff]
      %v2952 = vsel %vm708, %v2890, %v2951
      %2953 = vst [vmem:[%s2572 + $0x160] sm:$0xff] %v2952
      %v2954 = vld [vmem:[%s2572 + $0x178] sm:$0xff]
      %v2955 = vsel %vm708, %v2892, %v2954
      %2956 = vst [vmem:[%s2572 + $0x178] sm:$0xff] %v2955
      %v2957 = vld [vmem:[#allocation3] sm:$0xff]
      %v2958 = vld [vmem:[#allocation3 + $0x8] sm:$0xff]
      %v2959 = vld [vmem:[#allocation3 + $0x10] sm:$0xff]
      %v2960 = vld [vmem:[#allocation3 + $0x18] sm:$0xff]
      %v2961 = vld [vmem:[#allocation3 + $0x20] sm:$0xff]
      %v2962 = vld [vmem:[#allocation3 + $0x28] sm:$0xff]
      %v2963 = vld [vmem:[#allocation3 + $0x30] sm:$0xff]
      %v2964 = vld [vmem:[#allocation3 + $0x38] sm:$0xff]
      %v2965 = vld [vmem:[#allocation3 + $0x40] sm:$0xff]
      %v2966 = vld [vmem:[#allocation3 + $0x48] sm:$0xff]
      %v2967 = vld [vmem:[#allocation3 + $0x50] sm:$0xff]
      %v2968 = vld [vmem:[#allocation3 + $0x58] sm:$0xff]
      %v2969 = vld [vmem:[#allocation3 + $0x60] sm:$0xff]
      %v2970 = vld [vmem:[#allocation3 + $0x68] sm:$0xff]
      %v2971 = vld [vmem:[#allocation3 + $0x70] sm:$0xff]
      %v2972 = vld [vmem:[#allocation3 + $0x78] sm:$0xff]
      %v2973 = vld [vmem:[#allocation3 + $0x80] sm:$0xff]
      %v2974 = vld [vmem:[#allocation3 + $0x88] sm:$0xff]
      %v2975 = vld [vmem:[#allocation3 + $0x90] sm:$0xff]
      %v2976 = vld [vmem:[#allocation3 + $0x98] sm:$0xff]
      %v2977 = vld [vmem:[#allocation3 + $0xa0] sm:$0xff]
      %v2978 = vld [vmem:[#allocation3 + $0xa8] sm:$0xff]
      %v2979 = vld [vmem:[#allocation3 + $0xb0] sm:$0xff]
      %v2980 = vld [vmem:[#allocation3 + $0xb8] sm:$0xff]
      %v2981 = vld [vmem:[#allocation3 + $0xc0] sm:$0xff]
      %v2982 = vld [vmem:[#allocation3 + $0xc8] sm:$0xff]
      %v2983 = vld [vmem:[#allocation3 + $0xd0] sm:$0xff]
      %v2984 = vld [vmem:[#allocation3 + $0xd8] sm:$0xff]
      %v2985 = vld [vmem:[#allocation3 + $0xe0] sm:$0xff]
      %v2986 = vld [vmem:[#allocation3 + $0xe8] sm:$0xff]
      %v2987 = vld [vmem:[#allocation3 + $0xf0] sm:$0xff]
      %v2988 = vld [vmem:[#allocation3 + $0xf8] sm:$0xff]
      %v2989 = vld [vmem:[#allocation3 + $0x100] sm:$0xff]
      %v2990 = vld [vmem:[#allocation3 + $0x108] sm:$0xff]
      %v2991 = vld [vmem:[#allocation3 + $0x110] sm:$0xff]
      %v2992 = vld [vmem:[#allocation3 + $0x118] sm:$0xff]
      %v2993 = vld [vmem:[#allocation3 + $0x120] sm:$0xff]
      %v2994 = vld [vmem:[#allocation3 + $0x128] sm:$0xff]
      %v2995 = vld [vmem:[#allocation3 + $0x130] sm:$0xff]
      %v2996 = vld [vmem:[#allocation3 + $0x138] sm:$0xff]
      %v2997 = vld [vmem:[#allocation3 + $0x140] sm:$0xff]
      %v2998 = vld [vmem:[#allocation3 + $0x148] sm:$0xff]
      %v2999 = vld [vmem:[#allocation3 + $0x150] sm:$0xff]
      %v3000 = vld [vmem:[#allocation3 + $0x158] sm:$0xff]
      %v3001 = vld [vmem:[#allocation3 + $0x160] sm:$0xff]
      %v3002 = vld [vmem:[#allocation3 + $0x168] sm:$0xff]
      %v3003 = vld [vmem:[#allocation3 + $0x170] sm:$0xff]
      %v3004 = vld [vmem:[#allocation3 + $0x178] sm:$0xff]
      %v3005 = vld [vmem:[%s3] sm:$0xf]
      %v3006 = vld [vmem:[%s3 + $0x4] sm:$0xf]
      %v3007 = vld [vmem:[%s3 + $0x8] sm:$0xf]
      %v3008 = vld [vmem:[%s3 + $0xc] sm:$0xf]
      %v3009 = vld [vmem:[%s3 + $0x10] sm:$0xf]
      %v3010 = vld [vmem:[%s3 + $0x14] sm:$0xf]
      %v3011 = vld [vmem:[%s3 + $0x18] sm:$0xf]
      %v3012 = vld [vmem:[%s3 + $0x1c] sm:$0xf]
      %v3013 = vld [vmem:[%s3 + $0x20] sm:$0xf]
      %v3014 = vld [vmem:[%s3 + $0x24] sm:$0xf]
      %v3015 = vld [vmem:[%s3 + $0x28] sm:$0xf]
      %v3016 = vld [vmem:[%s3 + $0x2c] sm:$0xf]
      %v3017 = vld [vmem:[%s3 + $0x30] sm:$0xf]
      %v3018 = vld [vmem:[%s3 + $0x34] sm:$0xf]
      %v3019 = vld [vmem:[%s3 + $0x38] sm:$0xf]
      %v3020 = vld [vmem:[%s3 + $0x3c] sm:$0xf]
      %v3021 = vld [vmem:[%s3 + $0x40] sm:$0xf]
      %v3022 = vld [vmem:[%s3 + $0x44] sm:$0xf]
      %v3023 = vld [vmem:[%s3 + $0x48] sm:$0xf]
      %v3024 = vld [vmem:[%s3 + $0x4c] sm:$0xf]
      %v3025 = vld [vmem:[%s3 + $0x50] sm:$0xf]
      %v3026 = vld [vmem:[%s3 + $0x54] sm:$0xf]
      %v3027 = vld [vmem:[%s3 + $0x58] sm:$0xf]
      %v3028 = vld [vmem:[%s3 + $0x5c] sm:$0xf]
      %v3029 = vld [vmem:[%s3 + $0x60] sm:$0xf]
      %v3030 = vld [vmem:[%s3 + $0x64] sm:$0xf]
      %v3031 = vld [vmem:[%s3 + $0x68] sm:$0xf]
      %v3032 = vld [vmem:[%s3 + $0x6c] sm:$0xf]
      %v3033 = vld [vmem:[%s3 + $0x70] sm:$0xf]
      %v3034 = vld [vmem:[%s3 + $0x74] sm:$0xf]
      %v3035 = vld [vmem:[%s3 + $0x78] sm:$0xf]
      %v3036 = vld [vmem:[%s3 + $0x7c] sm:$0xf]
      %v3037 = vld [vmem:[%s3 + $0x80] sm:$0xf]
      %v3038 = vld [vmem:[%s3 + $0x84] sm:$0xf]
      %v3039 = vld [vmem:[%s3 + $0x88] sm:$0xf]
      %v3040 = vld [vmem:[%s3 + $0x8c] sm:$0xf]
      %v3041 = vld [vmem:[%s3 + $0x90] sm:$0xf]
      %v3042 = vld [vmem:[%s3 + $0x94] sm:$0xf]
      %v3043 = vld [vmem:[%s3 + $0x98] sm:$0xf]
      %v3044 = vld [vmem:[%s3 + $0x9c] sm:$0xf]
      %v3045 = vld [vmem:[%s3 + $0xa0] sm:$0xf]
      %v3046 = vld [vmem:[%s3 + $0xa4] sm:$0xf]
      %v3047 = vld [vmem:[%s3 + $0xa8] sm:$0xf]
      %v3048 = vld [vmem:[%s3 + $0xac] sm:$0xf]
      %v3049 = vld [vmem:[%s3 + $0xb0] sm:$0xf]
      %v3050 = vld [vmem:[%s3 + $0xb4] sm:$0xf]
      %v3051 = vld [vmem:[%s3 + $0xb8] sm:$0xf]
      %v3052 = vld [vmem:[%s3 + $0xbc] sm:$0xf]
      %v3053 = vld [vmem:[%s2572] sm:$0xff]
      %v3054 = vld [vmem:[%s2572 + $0x8] sm:$0xff]
      %v3055 = vld [vmem:[%s2572 + $0x10] sm:$0xff]
      %v3056 = vld [vmem:[%s2572 + $0x18] sm:$0xff]
      %v3057 = vld [vmem:[%s2572 + $0x20] sm:$0xff]
      %v3058 = vld [vmem:[%s2572 + $0x28] sm:$0xff]
      %v3059 = vld [vmem:[%s2572 + $0x30] sm:$0xff]
      %v3060 = vld [vmem:[%s2572 + $0x38] sm:$0xff]
      %v3061 = vld [vmem:[%s2572 + $0x40] sm:$0xff]
      %v3062 = vld [vmem:[%s2572 + $0x48] sm:$0xff]
      %v3063 = vld [vmem:[%s2572 + $0x50] sm:$0xff]
      %v3064 = vld [vmem:[%s2572 + $0x58] sm:$0xff]
      %v3065 = vld [vmem:[%s2572 + $0x60] sm:$0xff]
      %v3066 = vld [vmem:[%s2572 + $0x68] sm:$0xff]
      %v3067 = vld [vmem:[%s2572 + $0x70] sm:$0xff]
      %v3068 = vld [vmem:[%s2572 + $0x78] sm:$0xff]
      %v3069 = vld [vmem:[%s2572 + $0x80] sm:$0xff]
      %v3070 = vld [vmem:[%s2572 + $0x88] sm:$0xff]
      %v3071 = vld [vmem:[%s2572 + $0x90] sm:$0xff]
      %v3072 = vld [vmem:[%s2572 + $0x98] sm:$0xff]
      %v3073 = vld [vmem:[%s2572 + $0xa0] sm:$0xff]
      %v3074 = vld [vmem:[%s2572 + $0xa8] sm:$0xff]
      %v3075 = vld [vmem:[%s2572 + $0xb0] sm:$0xff]
      %v3076 = vld [vmem:[%s2572 + $0xb8] sm:$0xff]
      %v3077 = vld [vmem:[%s2572 + $0xc0] sm:$0xff]
      %v3078 = vld [vmem:[%s2572 + $0xc8] sm:$0xff]
      %v3079 = vld [vmem:[%s2572 + $0xd0] sm:$0xff]
      %v3080 = vld [vmem:[%s2572 + $0xd8] sm:$0xff]
      %v3081 = vld [vmem:[%s2572 + $0xe0] sm:$0xff]
      %v3082 = vld [vmem:[%s2572 + $0xe8] sm:$0xff]
      %v3083 = vld [vmem:[%s2572 + $0xf0] sm:$0xff]
      %v3084 = vld [vmem:[%s2572 + $0xf8] sm:$0xff]
      %v3085 = vld [vmem:[%s2572 + $0x100] sm:$0xff]
      %v3086 = vld [vmem:[%s2572 + $0x108] sm:$0xff]
      %v3087 = vld [vmem:[%s2572 + $0x110] sm:$0xff]
      %v3088 = vld [vmem:[%s2572 + $0x118] sm:$0xff]
      %v3089 = vld [vmem:[%s2572 + $0x120] sm:$0xff]
      %v3090 = vld [vmem:[%s2572 + $0x128] sm:$0xff]
      %v3091 = vld [vmem:[%s2572 + $0x130] sm:$0xff]
      %v3092 = vld [vmem:[%s2572 + $0x138] sm:$0xff]
      %v3093 = vld [vmem:[%s2572 + $0x140] sm:$0xff]
      %v3094 = vld [vmem:[%s2572 + $0x148] sm:$0xff]
      %v3095 = vld [vmem:[%s2572 + $0x150] sm:$0xff]
      %v3096 = vld [vmem:[%s2572 + $0x158] sm:$0xff]
      %v3097 = vld [vmem:[%s2572 + $0x160] sm:$0xff]
      %v3098 = vld [vmem:[%s2572 + $0x168] sm:$0xff]
      %v3099 = vld [vmem:[%s2572 + $0x170] sm:$0xff]
      %v3100 = vld [vmem:[%s2572 + $0x178] sm:$0xff]
      %s3101 = scalar_lea.vmem %s3, 192
      %v3102 = vld [vmem:[%s3101] sm:$0xf]
      %v3103 = vld [vmem:[%s3101 + $0x4] sm:$0xf]
      %v3104 = vld [vmem:[%s3101 + $0x8] sm:$0xf]
      %v3105 = vld [vmem:[%s3101 + $0xc] sm:$0xf]
      %v3106 = vld [vmem:[%s3101 + $0x10] sm:$0xf]
      %v3107 = vld [vmem:[%s3101 + $0x14] sm:$0xf]
      %v3108 = vld [vmem:[%s3101 + $0x18] sm:$0xf]
      %v3109 = vld [vmem:[%s3101 + $0x1c] sm:$0xf]
      %v3110 = vld [vmem:[%s3101 + $0x20] sm:$0xf]
      %v3111 = vld [vmem:[%s3101 + $0x24] sm:$0xf]
      %v3112 = vld [vmem:[%s3101 + $0x28] sm:$0xf]
      %v3113 = vld [vmem:[%s3101 + $0x2c] sm:$0xf]
      %v3114 = vld [vmem:[%s3101 + $0x30] sm:$0xf]
      %v3115 = vld [vmem:[%s3101 + $0x34] sm:$0xf]
      %v3116 = vld [vmem:[%s3101 + $0x38] sm:$0xf]
      %v3117 = vld [vmem:[%s3101 + $0x3c] sm:$0xf]
      %v3118 = vld [vmem:[%s3101 + $0x40] sm:$0xf]
      %v3119 = vld [vmem:[%s3101 + $0x44] sm:$0xf]
      %v3120 = vld [vmem:[%s3101 + $0x48] sm:$0xf]
      %v3121 = vld [vmem:[%s3101 + $0x4c] sm:$0xf]
      %v3122 = vld [vmem:[%s3101 + $0x50] sm:$0xf]
      %v3123 = vld [vmem:[%s3101 + $0x54] sm:$0xf]
      %v3124 = vld [vmem:[%s3101 + $0x58] sm:$0xf]
      %v3125 = vld [vmem:[%s3101 + $0x5c] sm:$0xf]
      %v3126 = vld [vmem:[%s3101 + $0x60] sm:$0xf]
      %v3127 = vld [vmem:[%s3101 + $0x64] sm:$0xf]
      %v3128 = vld [vmem:[%s3101 + $0x68] sm:$0xf]
      %v3129 = vld [vmem:[%s3101 + $0x6c] sm:$0xf]
      %v3130 = vld [vmem:[%s3101 + $0x70] sm:$0xf]
      %v3131 = vld [vmem:[%s3101 + $0x74] sm:$0xf]
      %v3132 = vld [vmem:[%s3101 + $0x78] sm:$0xf]
      %v3133 = vld [vmem:[%s3101 + $0x7c] sm:$0xf]
      %v3134 = vld [vmem:[%s3101 + $0x80] sm:$0xf]
      %v3135 = vld [vmem:[%s3101 + $0x84] sm:$0xf]
      %v3136 = vld [vmem:[%s3101 + $0x88] sm:$0xf]
      %v3137 = vld [vmem:[%s3101 + $0x8c] sm:$0xf]
      %v3138 = vld [vmem:[%s3101 + $0x90] sm:$0xf]
      %v3139 = vld [vmem:[%s3101 + $0x94] sm:$0xf]
      %v3140 = vld [vmem:[%s3101 + $0x98] sm:$0xf]
      %v3141 = vld [vmem:[%s3101 + $0x9c] sm:$0xf]
      %v3142 = vld [vmem:[%s3101 + $0xa0] sm:$0xf]
      %v3143 = vld [vmem:[%s3101 + $0xa4] sm:$0xf]
      %v3144 = vld [vmem:[%s3101 + $0xa8] sm:$0xf]
      %v3145 = vld [vmem:[%s3101 + $0xac] sm:$0xf]
      %v3146 = vld [vmem:[%s3101 + $0xb0] sm:$0xf]
      %v3147 = vld [vmem:[%s3101 + $0xb4] sm:$0xf]
      %v3148 = vld [vmem:[%s3101 + $0xb8] sm:$0xf]
      %v3149 = vld [vmem:[%s3101 + $0xbc] sm:$0xf]
      %v3198 = vunpack.c.l.b16 %v3102
      %v3199 = vunpack.c.l.b16 %v3103
      %v3200 = vunpack.c.l.b16 %v3104
      %v3201 = vunpack.c.l.b16 %v3105
      %v3202 = vunpack.c.l.b16 %v3106
      %v3203 = vunpack.c.l.b16 %v3107
      %v3204 = vunpack.c.l.b16 %v3108
      %v3205 = vunpack.c.l.b16 %v3109
      %v3206 = vunpack.c.l.b16 %v3110
      %v3207 = vunpack.c.l.b16 %v3111
      %v3208 = vunpack.c.l.b16 %v3112
      %v3209 = vunpack.c.l.b16 %v3113
      %v3210 = vunpack.c.l.b16 %v3114
      %v3211 = vunpack.c.l.b16 %v3115
      %v3212 = vunpack.c.l.b16 %v3116
      %v3213 = vunpack.c.l.b16 %v3117
      %v3214 = vunpack.c.l.b16 %v3118
      %v3215 = vunpack.c.l.b16 %v3119
      %v3216 = vunpack.c.l.b16 %v3120
      %v3217 = vunpack.c.l.b16 %v3121
      %v3218 = vunpack.c.l.b16 %v3122
      %v3219 = vunpack.c.l.b16 %v3123
      %v3220 = vunpack.c.l.b16 %v3124
      %v3221 = vunpack.c.l.b16 %v3125
      %v3222 = vunpack.c.l.b16 %v3126
      %v3223 = vunpack.c.l.b16 %v3127
      %v3224 = vunpack.c.l.b16 %v3128
      %v3225 = vunpack.c.l.b16 %v3129
      %v3226 = vunpack.c.l.b16 %v3130
      %v3227 = vunpack.c.l.b16 %v3131
      %v3228 = vunpack.c.l.b16 %v3132
      %v3229 = vunpack.c.l.b16 %v3133
      %v3230 = vunpack.c.l.b16 %v3134
      %v3231 = vunpack.c.l.b16 %v3135
      %v3232 = vunpack.c.l.b16 %v3136
      %v3233 = vunpack.c.l.b16 %v3137
      %v3234 = vunpack.c.l.b16 %v3138
      %v3235 = vunpack.c.l.b16 %v3139
      %v3236 = vunpack.c.l.b16 %v3140
      %v3237 = vunpack.c.l.b16 %v3141
      %v3238 = vunpack.c.l.b16 %v3142
      %v3239 = vunpack.c.l.b16 %v3143
      %v3240 = vunpack.c.l.b16 %v3144
      %v3241 = vunpack.c.l.b16 %v3145
      %v3242 = vunpack.c.l.b16 %v3146
      %v3243 = vunpack.c.l.b16 %v3147
      %v3244 = vunpack.c.l.b16 %v3148
      %v3245 = vunpack.c.l.b16 %v3149
      %v3246 = vpack.c.b16 %v3199, %v3198
      %v3247 = vpack.c.b16 %v3201, %v3200
      %v3248 = vpack.c.b16 %v3203, %v3202
      %v3249 = vpack.c.b16 %v3205, %v3204
      %v3250 = vpack.c.b16 %v3207, %v3206
      %v3251 = vpack.c.b16 %v3209, %v3208
      %v3252 = vpack.c.b16 %v3211, %v3210
      %v3253 = vpack.c.b16 %v3213, %v3212
      %v3254 = vpack.c.b16 %v3215, %v3214
      %v3255 = vpack.c.b16 %v3217, %v3216
      %v3256 = vpack.c.b16 %v3219, %v3218
      %v3257 = vpack.c.b16 %v3221, %v3220
      %v3258 = vpack.c.b16 %v3223, %v3222
      %v3259 = vpack.c.b16 %v3225, %v3224
      %v3260 = vpack.c.b16 %v3227, %v3226
      %v3261 = vpack.c.b16 %v3229, %v3228
      %v3262 = vpack.c.b16 %v3231, %v3230
      %v3263 = vpack.c.b16 %v3233, %v3232
      %v3264 = vpack.c.b16 %v3235, %v3234
      %v3265 = vpack.c.b16 %v3237, %v3236
      %v3266 = vpack.c.b16 %v3239, %v3238
      %v3267 = vpack.c.b16 %v3241, %v3240
      %v3268 = vpack.c.b16 %v3243, %v3242
      %v3269 = vpack.c.b16 %v3245, %v3244
      %3294 = vmatprep.subr.bf16.mxu0 0
      %3295 = vmatpush1.bf16.msra.mxu0 %v3246
      %3296 = vmatprep.subr.bf16.mxu0 0
      %3297 = vmatpush1.bf16.msra.mxu0 %v3247
      %3298 = vmatprep.subr.bf16.mxu0 0
      %3299 = vmatpush1.bf16.msra.mxu0 %v3248
      %3300 = vmatprep.subr.bf16.mxu0 0
      %3301 = vmatpush1.bf16.msra.mxu0 %v3249
      %3302 = vmatprep.subr.bf16.mxu0 0
      %3303 = vmatpush1.bf16.msra.mxu0 %v3250
      %3304 = vmatprep.subr.bf16.mxu0 0
      %3305 = vmatpush1.bf16.msra.mxu0 %v3251
      %3306 = vmatprep.subr.bf16.mxu0 0
      %3307 = vmatpush1.bf16.msra.mxu0 %v3252
      %3308 = vmatprep.subr.bf16.mxu0 0
      %3309 = vmatpush1.bf16.msra.mxu0 %v3253
      %3310 = vmatprep.subr.bf16.mxu0 0
      %3311 = vmatpush1.bf16.msra.mxu0 %v3254
      %3312 = vmatprep.subr.bf16.mxu0 0
      %3313 = vmatpush1.bf16.msra.mxu0 %v3255
      %3314 = vmatprep.subr.bf16.mxu0 0
      %3315 = vmatpush1.bf16.msra.mxu0 %v3256
      %3316 = vmatprep.subr.bf16.mxu0 0
      %3317 = vmatpush1.bf16.msra.mxu0 %v3257
      %3318 = vmatprep.subr.bf16.mxu0 0
      %3319 = vmatpush1.bf16.msra.mxu0 %v3258
      %3320 = vmatprep.subr.bf16.mxu0 0
      %3321 = vmatpush1.bf16.msra.mxu0 %v3259
      %3322 = vmatprep.subr.bf16.mxu0 0
      %3323 = vmatpush1.bf16.msra.mxu0 %v3260
      %3324 = vmatprep.subr.bf16.mxu0 0
      %3325 = vmatpush1.bf16.msra.mxu0 %v3261
      %3326 = vmatprep.mubr.bf16.mxu0 %v3054
      %3327 = vmatmul.mubr.bf16.gmra.mrb[0].mxu0 %v3053
      %v3328 = vpop.f32.mrb[0].mxu0
      %v3329 = vadd.f32 0.0, %v3328
      %v3330 = vpop.f32.mrb[0].mxu0
      %v3331 = vpop.f32.mrb[0].mxu0
      %v3332 = vadd.f32 0.0, %v3331
      %v3333 = vpop.f32.mrb[0].mxu0
      %3334 = vmatprep.mubr.bf16.mxu0 %v3057
      %3335 = vmatmul.mubr.bf16.gmra.mrb[0].mxu0 %v3056
      %v3336 = vpop.f32.mrb[0].mxu0
      %v3337 = vadd.f32 0.0, %v3336
      %v3338 = vpop.f32.mrb[0].mxu0
      %v3339 = vpop.f32.mrb[0].mxu0
      %v3340 = vadd.f32 0.0, %v3339
      %v3341 = vpop.f32.mrb[0].mxu0
      %3342 = vmatprep.mubr.bf16.mxu0 %v3060
      %3343 = vmatmul.mubr.bf16.gmra.mrb[0].mxu0 %v3059
      %v3344 = vpop.f32.mrb[0].mxu0
      %v3345 = vadd.f32 0.0, %v3344
      %v3346 = vpop.f32.mrb[0].mxu0
      %v3347 = vpop.f32.mrb[0].mxu0
      %v3348 = vadd.f32 0.0, %v3347
      %v3349 = vpop.f32.mrb[0].mxu0
      %3350 = vmatprep.mubr.bf16.mxu0 %v3063
      %3351 = vmatmul.mubr.bf16.gmra.mrb[0].mxu0 %v3062
      %v3352 = vpop.f32.mrb[0].mxu0
      %v3353 = vadd.f32 0.0, %v3352
      %v3354 = vpop.f32.mrb[0].mxu0
      %v3355 = vpop.f32.mrb[0].mxu0
      %v3356 = vadd.f32 0.0, %v3355
      %v3357 = vpop.f32.mrb[0].mxu0
      %3358 = vmatprep.mubr.bf16.mxu0 %v3066
      %3359 = vmatmul.mubr.bf16.gmra.mrb[0].mxu0 %v3065
      %v3360 = vpop.f32.mrb[0].mxu0
      %v3361 = vadd.f32 0.0, %v3360
      %v3362 = vpop.f32.mrb[0].mxu0
      %v3363 = vpop.f32.mrb[0].mxu0
      %v3364 = vadd.f32 0.0, %v3363
      %v3365 = vpop.f32.mrb[0].mxu0
      %3366 = vmatprep.mubr.bf16.mxu0 %v3069
      %3367 = vmatmul.mubr.bf16.gmra.mrb[0].mxu0 %v3068
      %v3368 = vpop.f32.mrb[0].mxu0
      %v3369 = vadd.f32 0.0, %v3368
      %v3370 = vpop.f32.mrb[0].mxu0
      %v3371 = vpop.f32.mrb[0].mxu0
      %v3372 = vadd.f32 0.0, %v3371
      %v3373 = vpop.f32.mrb[0].mxu0
      %3374 = vmatprep.mubr.bf16.mxu0 %v3072
      %3375 = vmatmul.mubr.bf16.gmra.mrb[0].mxu0 %v3071
      %v3376 = vpop.f32.mrb[0].mxu0
      %v3377 = vadd.f32 0.0, %v3376
      %v3378 = vpop.f32.mrb[0].mxu0
      %v3379 = vpop.f32.mrb[0].mxu0
      %v3380 = vadd.f32 0.0, %v3379
      %v3381 = vpop.f32.mrb[0].mxu0
      %3382 = vmatprep.mubr.bf16.mxu0 %v3075
      %3383 = vmatmul.mubr.bf16.gmra.mrb[0].mxu0 %v3074
      %v3384 = vpop.f32.mrb[0].mxu0
      %v3385 = vadd.f32 0.0, %v3384
      %v3386 = vpop.f32.mrb[0].mxu0
      %v3387 = vpop.f32.mrb[0].mxu0
      %v3388 = vadd.f32 0.0, %v3387
      %v3389 = vpop.f32.mrb[0].mxu0
      %3390 = vmatprep.mubr.bf16.mxu0 %v3078
      %3391 = vmatmul.mubr.bf16.gmra.mrb[0].mxu0 %v3077
      %v3392 = vpop.f32.mrb[0].mxu0
      %v3393 = vadd.f32 0.0, %v3392
      %v3394 = vpop.f32.mrb[0].mxu0
      %v3395 = vpop.f32.mrb[0].mxu0
      %v3396 = vadd.f32 0.0, %v3395
      %v3397 = vpop.f32.mrb[0].mxu0
      %3398 = vmatprep.mubr.bf16.mxu0 %v3081
      %3399 = vmatmul.mubr.bf16.gmra.mrb[0].mxu0 %v3080
      %v3400 = vpop.f32.mrb[0].mxu0
      %v3401 = vadd.f32 0.0, %v3400
      %v3402 = vpop.f32.mrb[0].mxu0
      %v3403 = vpop.f32.mrb[0].mxu0
      %v3404 = vadd.f32 0.0, %v3403
      %v3405 = vpop.f32.mrb[0].mxu0
      %3406 = vmatprep.mubr.bf16.mxu0 %v3084
      %3407 = vmatmul.mubr.bf16.gmra.mrb[0].mxu0 %v3083
      %v3408 = vpop.f32.mrb[0].mxu0
      %v3409 = vadd.f32 0.0, %v3408
      %v3410 = vpop.f32.mrb[0].mxu0
      %v3411 = vpop.f32.mrb[0].mxu0
      %v3412 = vadd.f32 0.0, %v3411
      %v3413 = vpop.f32.mrb[0].mxu0
      %3414 = vmatprep.mubr.bf16.mxu0 %v3087
      %3415 = vmatmul.mubr.bf16.gmra.mrb[0].mxu0 %v3086
      %v3416 = vpop.f32.mrb[0].mxu0
      %v3417 = vadd.f32 0.0, %v3416
      %v3418 = vpop.f32.mrb[0].mxu0
      %v3419 = vpop.f32.mrb[0].mxu0
      %v3420 = vadd.f32 0.0, %v3419
      %v3421 = vpop.f32.mrb[0].mxu0
      %3422 = vmatprep.mubr.bf16.mxu0 %v3090
      %3423 = vmatmul.mubr.bf16.gmra.mrb[0].mxu0 %v3089
      %v3424 = vpop.f32.mrb[0].mxu0
      %v3425 = vadd.f32 0.0, %v3424
      %v3426 = vpop.f32.mrb[0].mxu0
      %v3427 = vpop.f32.mrb[0].mxu0
      %v3428 = vadd.f32 0.0, %v3427
      %v3429 = vpop.f32.mrb[0].mxu0
      %3430 = vmatprep.mubr.bf16.mxu0 %v3093
      %3431 = vmatmul.mubr.bf16.gmra.mrb[0].mxu0 %v3092
      %v3432 = vpop.f32.mrb[0].mxu0
      %v3433 = vadd.f32 0.0, %v3432
      %v3434 = vpop.f32.mrb[0].mxu0
      %v3435 = vpop.f32.mrb[0].mxu0
      %v3436 = vadd.f32 0.0, %v3435
      %v3437 = vpop.f32.mrb[0].mxu0
      %3438 = vmatprep.mubr.bf16.mxu0 %v3096
      %3439 = vmatmul.mubr.bf16.gmra.mrb[0].mxu0 %v3095
      %v3440 = vpop.f32.mrb[0].mxu0
      %v3441 = vadd.f32 0.0, %v3440
      %v3442 = vpop.f32.mrb[0].mxu0
      %v3443 = vpop.f32.mrb[0].mxu0
      %v3444 = vadd.f32 0.0, %v3443
      %v3445 = vpop.f32.mrb[0].mxu0
      %3446 = vmatprep.mubr.bf16.mxu0 %v3099
      %3447 = vmatmul.mubr.bf16.gmra.mrb[0].mxu0 %v3098
      %v3448 = vpop.f32.mrb[0].mxu0
      %v3449 = vadd.f32 0.0, %v3448
      %v3450 = vpop.f32.mrb[0].mxu0
      %v3451 = vpop.f32.mrb[0].mxu0
      %v3452 = vadd.f32 0.0, %v3451
      %v3453 = vpop.f32.mrb[0].mxu0
      %3454 = vdwg.mxu0
      %3455 = vmatprep.subr.bf16.mxu0 0
      %3456 = vmatpush1.bf16.msra.mxu0 %v3262
      %3457 = vmatprep.subr.bf16.mxu0 0
      %3458 = vmatpush1.bf16.msra.mxu0 %v3263
      %3459 = vmatprep.subr.bf16.mxu0 0
      %3460 = vmatpush1.bf16.msra.mxu0 %v3264
      %3461 = vmatprep.subr.bf16.mxu0 0
      %3462 = vmatpush1.bf16.msra.mxu0 %v3265
      %3463 = vmatprep.subr.bf16.mxu0 0
      %3464 = vmatpush1.bf16.msra.mxu0 %v3266
      %3465 = vmatprep.subr.bf16.mxu0 0
      %3466 = vmatpush1.bf16.msra.mxu0 %v3267
      %3467 = vmatprep.subr.bf16.mxu0 0
      %3468 = vmatpush1.bf16.msra.mxu0 %v3268
      %3469 = vmatprep.subr.bf16.mxu0 0
      %3470 = vmatpush1.bf16.msra.mxu0 %v3269
      %3471 = vmatprep.subr.bf16.mxu0 0
      %3472 = vmatpush1.bf16.msra.mxu0 0
      %3473 = vmatprep.subr.bf16.mxu0 0
      %3474 = vmatpush1.bf16.msra.mxu0 0
      %3475 = vmatprep.subr.bf16.mxu0 0
      %3476 = vmatpush1.bf16.msra.mxu0 0
      %3477 = vmatprep.subr.bf16.mxu0 0
      %3478 = vmatpush1.bf16.msra.mxu0 0
      %3479 = vmatprep.subr.bf16.mxu0 0
      %3480 = vmatpush1.bf16.msra.mxu0 0
      %3481 = vmatprep.subr.bf16.mxu0 0
      %3482 = vmatpush1.bf16.msra.mxu0 0
      %3483 = vmatprep.subr.bf16.mxu0 0
      %3484 = vmatpush1.bf16.msra.mxu0 0
      %3485 = vmatprep.subr.bf16.mxu0 0
      %3486 = vmatpush1.bf16.msra.mxu0 0
      %3487 = vmatprep.mubr.bf16.mxu0 0
      %3488 = vmatmul.mubr.bf16.gmra.mrb[0].mxu0 %v3055
      %v3489 = vpop.f32.mrb[0].mxu0
      %v3490 = vadd.f32 %v3329, %v3489
      %v3491 = vpop.f32.mrb[0].mxu0
      %v3492 = vpop.f32.mrb[0].mxu0
      %v3493 = vadd.f32 %v3332, %v3492
      %v3494 = vpop.f32.mrb[0].mxu0
      %3495 = vmatprep.mubr.bf16.mxu0 0
      %3496 = vmatmul.mubr.bf16.gmra.mrb[0].mxu0 %v3058
      %v3497 = vpop.f32.mrb[0].mxu0
      %v3498 = vadd.f32 %v3337, %v3497
      %v3499 = vpop.f32.mrb[0].mxu0
      %v3500 = vpop.f32.mrb[0].mxu0
      %v3501 = vadd.f32 %v3340, %v3500
      %v3502 = vpop.f32.mrb[0].mxu0
      %3503 = vmatprep.mubr.bf16.mxu0 0
      %3504 = vmatmul.mubr.bf16.gmra.mrb[0].mxu0 %v3061
      %v3505 = vpop.f32.mrb[0].mxu0
      %v3506 = vadd.f32 %v3345, %v3505
      %v3507 = vpop.f32.mrb[0].mxu0
      %v3508 = vpop.f32.mrb[0].mxu0
      %v3509 = vadd.f32 %v3348, %v3508
      %v3510 = vpop.f32.mrb[0].mxu0
      %3511 = vmatprep.mubr.bf16.mxu0 0
      %3512 = vmatmul.mubr.bf16.gmra.mrb[0].mxu0 %v3064
      %v3513 = vpop.f32.mrb[0].mxu0
      %v3514 = vadd.f32 %v3353, %v3513
      %v3515 = vpop.f32.mrb[0].mxu0
      %v3516 = vpop.f32.mrb[0].mxu0
      %v3517 = vadd.f32 %v3356, %v3516
      %v3518 = vpop.f32.mrb[0].mxu0
      %3519 = vmatprep.mubr.bf16.mxu0 0
      %3520 = vmatmul.mubr.bf16.gmra.mrb[0].mxu0 %v3067
      %v3521 = vpop.f32.mrb[0].mxu0
      %v3522 = vadd.f32 %v3361, %v3521
      %v3523 = vpop.f32.mrb[0].mxu0
      %v3524 = vpop.f32.mrb[0].mxu0
      %v3525 = vadd.f32 %v3364, %v3524
      %v3526 = vpop.f32.mrb[0].mxu0
      %3527 = vmatprep.mubr.bf16.mxu0 0
      %3528 = vmatmul.mubr.bf16.gmra.mrb[0].mxu0 %v3070
      %v3529 = vpop.f32.mrb[0].mxu0
      %v3530 = vadd.f32 %v3369, %v3529
      %v3531 = vpop.f32.mrb[0].mxu0
      %v3532 = vpop.f32.mrb[0].mxu0
      %v3533 = vadd.f32 %v3372, %v3532
      %v3534 = vpop.f32.mrb[0].mxu0
      %3535 = vmatprep.mubr.bf16.mxu0 0
      %3536 = vmatmul.mubr.bf16.gmra.mrb[0].mxu0 %v3073
      %v3537 = vpop.f32.mrb[0].mxu0
      %v3538 = vadd.f32 %v3377, %v3537
      %v3539 = vpop.f32.mrb[0].mxu0
      %v3540 = vpop.f32.mrb[0].mxu0
      %v3541 = vadd.f32 %v3380, %v3540
      %v3542 = vpop.f32.mrb[0].mxu0
      %3543 = vmatprep.mubr.bf16.mxu0 0
      %3544 = vmatmul.mubr.bf16.gmra.mrb[0].mxu0 %v3076
      %v3545 = vpop.f32.mrb[0].mxu0
      %v3546 = vadd.f32 %v3385, %v3545
      %v3547 = vpop.f32.mrb[0].mxu0
      %v3548 = vpop.f32.mrb[0].mxu0
      %v3549 = vadd.f32 %v3388, %v3548
      %v3550 = vpop.f32.mrb[0].mxu0
      %3551 = vmatprep.mubr.bf16.mxu0 0
      %3552 = vmatmul.mubr.bf16.gmra.mrb[0].mxu0 %v3079
      %v3553 = vpop.f32.mrb[0].mxu0
      %v3554 = vadd.f32 %v3393, %v3553
      %v3555 = vpop.f32.mrb[0].mxu0
      %v3556 = vpop.f32.mrb[0].mxu0
      %v3557 = vadd.f32 %v3396, %v3556
      %v3558 = vpop.f32.mrb[0].mxu0
      %3559 = vmatprep.mubr.bf16.mxu0 0
      %3560 = vmatmul.mubr.bf16.gmra.mrb[0].mxu0 %v3082
      %v3561 = vpop.f32.mrb[0].mxu0
      %v3562 = vadd.f32 %v3401, %v3561
      %v3563 = vpop.f32.mrb[0].mxu0
      %v3564 = vpop.f32.mrb[0].mxu0
      %v3565 = vadd.f32 %v3404, %v3564
      %v3566 = vpop.f32.mrb[0].mxu0
      %3567 = vmatprep.mubr.bf16.mxu0 0
      %3568 = vmatmul.mubr.bf16.gmra.mrb[0].mxu0 %v3085
      %v3569 = vpop.f32.mrb[0].mxu0
      %v3570 = vadd.f32 %v3409, %v3569
      %v3571 = vpop.f32.mrb[0].mxu0
      %v3572 = vpop.f32.mrb[0].mxu0
      %v3573 = vadd.f32 %v3412, %v3572
      %v3574 = vpop.f32.mrb[0].mxu0
      %3575 = vmatprep.mubr.bf16.mxu0 0
      %3576 = vmatmul.mubr.bf16.gmra.mrb[0].mxu0 %v3088
      %v3577 = vpop.f32.mrb[0].mxu0
      %v3578 = vadd.f32 %v3417, %v3577
      %v3579 = vpop.f32.mrb[0].mxu0
      %v3580 = vpop.f32.mrb[0].mxu0
      %v3581 = vadd.f32 %v3420, %v3580
      %v3582 = vpop.f32.mrb[0].mxu0
      %3583 = vmatprep.mubr.bf16.mxu0 0
      %3584 = vmatmul.mubr.bf16.gmra.mrb[0].mxu0 %v3091
      %v3585 = vpop.f32.mrb[0].mxu0
      %v3586 = vadd.f32 %v3425, %v3585
      %v3587 = vpop.f32.mrb[0].mxu0
      %v3588 = vpop.f32.mrb[0].mxu0
      %v3589 = vadd.f32 %v3428, %v3588
      %v3590 = vpop.f32.mrb[0].mxu0
      %3591 = vmatprep.mubr.bf16.mxu0 0
      %3592 = vmatmul.mubr.bf16.gmra.mrb[0].mxu0 %v3094
      %v3593 = vpop.f32.mrb[0].mxu0
      %v3594 = vadd.f32 %v3433, %v3593
      %v3595 = vpop.f32.mrb[0].mxu0
      %v3596 = vpop.f32.mrb[0].mxu0
      %v3597 = vadd.f32 %v3436, %v3596
      %v3598 = vpop.f32.mrb[0].mxu0
      %3599 = vmatprep.mubr.bf16.mxu0 0
      %3600 = vmatmul.mubr.bf16.gmra.mrb[0].mxu0 %v3097
      %v3601 = vpop.f32.mrb[0].mxu0
      %v3602 = vadd.f32 %v3441, %v3601
      %v3603 = vpop.f32.mrb[0].mxu0
      %v3604 = vpop.f32.mrb[0].mxu0
      %v3605 = vadd.f32 %v3444, %v3604
      %v3606 = vpop.f32.mrb[0].mxu0
      %3607 = vmatprep.mubr.bf16.mxu0 0
      %3608 = vmatmul.mubr.bf16.gmra.mrb[0].mxu0 %v3100
      %v3609 = vpop.f32.mrb[0].mxu0
      %v3610 = vadd.f32 %v3449, %v3609
      %v3611 = vpop.f32.mrb[0].mxu0
      %v3612 = vpop.f32.mrb[0].mxu0
      %v3613 = vadd.f32 %v3452, %v3612
      %v3614 = vpop.f32.mrb[0].mxu0
      %3615 = vdwg.mxu0
      %v3664 = vunpack.c.l.b16 %v3005
      %v3665 = vunpack.c.l.b16 %v3006
      %v3666 = vunpack.c.l.b16 %v3007
      %v3667 = vunpack.c.l.b16 %v3008
      %v3668 = vunpack.c.l.b16 %v3009
      %v3669 = vunpack.c.l.b16 %v3010
      %v3670 = vunpack.c.l.b16 %v3011
      %v3671 = vunpack.c.l.b16 %v3012
      %v3672 = vunpack.c.l.b16 %v3013
      %v3673 = vunpack.c.l.b16 %v3014
      %v3674 = vunpack.c.l.b16 %v3015
      %v3675 = vunpack.c.l.b16 %v3016
      %v3676 = vunpack.c.l.b16 %v3017
      %v3677 = vunpack.c.l.b16 %v3018
      %v3678 = vunpack.c.l.b16 %v3019
      %v3679 = vunpack.c.l.b16 %v3020
      %v3680 = vunpack.c.l.b16 %v3021
      %v3681 = vunpack.c.l.b16 %v3022
      %v3682 = vunpack.c.l.b16 %v3023
      %v3683 = vunpack.c.l.b16 %v3024
      %v3684 = vunpack.c.l.b16 %v3025
      %v3685 = vunpack.c.l.b16 %v3026
      %v3686 = vunpack.c.l.b16 %v3027
      %v3687 = vunpack.c.l.b16 %v3028
      %v3688 = vunpack.c.l.b16 %v3029
      %v3689 = vunpack.c.l.b16 %v3030
      %v3690 = vunpack.c.l.b16 %v3031
      %v3691 = vunpack.c.l.b16 %v3032
      %v3692 = vunpack.c.l.b16 %v3033
      %v3693 = vunpack.c.l.b16 %v3034
      %v3694 = vunpack.c.l.b16 %v3035
      %v3695 = vunpack.c.l.b16 %v3036
      %v3696 = vunpack.c.l.b16 %v3037
      %v3697 = vunpack.c.l.b16 %v3038
      %v3698 = vunpack.c.l.b16 %v3039
      %v3699 = vunpack.c.l.b16 %v3040
      %v3700 = vunpack.c.l.b16 %v3041
      %v3701 = vunpack.c.l.b16 %v3042
      %v3702 = vunpack.c.l.b16 %v3043
      %v3703 = vunpack.c.l.b16 %v3044
      %v3704 = vunpack.c.l.b16 %v3045
      %v3705 = vunpack.c.l.b16 %v3046
      %v3706 = vunpack.c.l.b16 %v3047
      %v3707 = vunpack.c.l.b16 %v3048
      %v3708 = vunpack.c.l.b16 %v3049
      %v3709 = vunpack.c.l.b16 %v3050
      %v3710 = vunpack.c.l.b16 %v3051
      %v3711 = vunpack.c.l.b16 %v3052
      %v3712 = vpack.c.b16 %v3665, %v3664
      %v3713 = vpack.c.b16 %v3667, %v3666
      %v3714 = vpack.c.b16 %v3669, %v3668
      %v3715 = vpack.c.b16 %v3671, %v3670
      %v3716 = vpack.c.b16 %v3673, %v3672
      %v3717 = vpack.c.b16 %v3675, %v3674
      %v3718 = vpack.c.b16 %v3677, %v3676
      %v3719 = vpack.c.b16 %v3679, %v3678
      %v3720 = vpack.c.b16 %v3681, %v3680
      %v3721 = vpack.c.b16 %v3683, %v3682
      %v3722 = vpack.c.b16 %v3685, %v3684
      %v3723 = vpack.c.b16 %v3687, %v3686
      %v3724 = vpack.c.b16 %v3689, %v3688
      %v3725 = vpack.c.b16 %v3691, %v3690
      %v3726 = vpack.c.b16 %v3693, %v3692
      %v3727 = vpack.c.b16 %v3695, %v3694
      %v3728 = vpack.c.b16 %v3697, %v3696
      %v3729 = vpack.c.b16 %v3699, %v3698
      %v3730 = vpack.c.b16 %v3701, %v3700
      %v3731 = vpack.c.b16 %v3703, %v3702
      %v3732 = vpack.c.b16 %v3705, %v3704
      %v3733 = vpack.c.b16 %v3707, %v3706
      %v3734 = vpack.c.b16 %v3709, %v3708
      %v3735 = vpack.c.b16 %v3711, %v3710
      %3760 = vmatprep.subr.bf16.mxu0 0
      %3761 = vmatpush1.bf16.msra.mxu0 %v3712
      %3762 = vmatprep.subr.bf16.mxu0 0
      %3763 = vmatpush1.bf16.msra.mxu0 %v3713
      %3764 = vmatprep.subr.bf16.mxu0 0
      %3765 = vmatpush1.bf16.msra.mxu0 %v3714
      %3766 = vmatprep.subr.bf16.mxu0 0
      %3767 = vmatpush1.bf16.msra.mxu0 %v3715
      %3768 = vmatprep.subr.bf16.mxu0 0
      %3769 = vmatpush1.bf16.msra.mxu0 %v3716
      %3770 = vmatprep.subr.bf16.mxu0 0
      %3771 = vmatpush1.bf16.msra.mxu0 %v3717
      %3772 = vmatprep.subr.bf16.mxu0 0
      %3773 = vmatpush1.bf16.msra.mxu0 %v3718
      %3774 = vmatprep.subr.bf16.mxu0 0
      %3775 = vmatpush1.bf16.msra.mxu0 %v3719
      %3776 = vmatprep.subr.bf16.mxu0 0
      %3777 = vmatpush1.bf16.msra.mxu0 %v3720
      %3778 = vmatprep.subr.bf16.mxu0 0
      %3779 = vmatpush1.bf16.msra.mxu0 %v3721
      %3780 = vmatprep.subr.bf16.mxu0 0
      %3781 = vmatpush1.bf16.msra.mxu0 %v3722
      %3782 = vmatprep.subr.bf16.mxu0 0
      %3783 = vmatpush1.bf16.msra.mxu0 %v3723
      %3784 = vmatprep.subr.bf16.mxu0 0
      %3785 = vmatpush1.bf16.msra.mxu0 %v3724
      %3786 = vmatprep.subr.bf16.mxu0 0
      %3787 = vmatpush1.bf16.msra.mxu0 %v3725
      %3788 = vmatprep.subr.bf16.mxu0 0
      %3789 = vmatpush1.bf16.msra.mxu0 %v3726
      %3790 = vmatprep.subr.bf16.mxu0 0
      %3791 = vmatpush1.bf16.msra.mxu0 %v3727
      %3792 = vmatprep.mubr.bf16.mxu0 %v2958
      %3793 = vmatmul.mubr.bf16.gmra.mrb[0].mxu0 %v2957
      %v3794 = vpop.f32.mrb[0].mxu0
      %v3795 = vadd.f32 %v3490, %v3794
      %v3796 = vpop.f32.mrb[0].mxu0
      %v3797 = vpop.f32.mrb[0].mxu0
      %v3798 = vadd.f32 %v3493, %v3797
      %v3799 = vpop.f32.mrb[0].mxu0
      %3800 = vmatprep.mubr.bf16.mxu0 %v2961
      %3801 = vmatmul.mubr.bf16.gmra.mrb[0].mxu0 %v2960
      %v3802 = vpop.f32.mrb[0].mxu0
      %v3803 = vadd.f32 %v3498, %v3802
      %v3804 = vpop.f32.mrb[0].mxu0
      %v3805 = vpop.f32.mrb[0].mxu0
      %v3806 = vadd.f32 %v3501, %v3805
      %v3807 = vpop.f32.mrb[0].mxu0
      %3808 = vmatprep.mubr.bf16.mxu0 %v2964
      %3809 = vmatmul.mubr.bf16.gmra.mrb[0].mxu0 %v2963
      %v3810 = vpop.f32.mrb[0].mxu0
      %v3811 = vadd.f32 %v3506, %v3810
      %v3812 = vpop.f32.mrb[0].mxu0
      %v3813 = vpop.f32.mrb[0].mxu0
      %v3814 = vadd.f32 %v3509, %v3813
      %v3815 = vpop.f32.mrb[0].mxu0
      %3816 = vmatprep.mubr.bf16.mxu0 %v2967
      %3817 = vmatmul.mubr.bf16.gmra.mrb[0].mxu0 %v2966
      %v3818 = vpop.f32.mrb[0].mxu0
      %v3819 = vadd.f32 %v3514, %v3818
      %v3820 = vpop.f32.mrb[0].mxu0
      %v3821 = vpop.f32.mrb[0].mxu0
      %v3822 = vadd.f32 %v3517, %v3821
      %v3823 = vpop.f32.mrb[0].mxu0
      %3824 = vmatprep.mubr.bf16.mxu0 %v2970
      %3825 = vmatmul.mubr.bf16.gmra.mrb[0].mxu0 %v2969
      %v3826 = vpop.f32.mrb[0].mxu0
      %v3827 = vadd.f32 %v3522, %v3826
      %v3828 = vpop.f32.mrb[0].mxu0
      %v3829 = vpop.f32.mrb[0].mxu0
      %v3830 = vadd.f32 %v3525, %v3829
      %v3831 = vpop.f32.mrb[0].mxu0
      %3832 = vmatprep.mubr.bf16.mxu0 %v2973
      %3833 = vmatmul.mubr.bf16.gmra.mrb[0].mxu0 %v2972
      %v3834 = vpop.f32.mrb[0].mxu0
      %v3835 = vadd.f32 %v3530, %v3834
      %v3836 = vpop.f32.mrb[0].mxu0
      %v3837 = vpop.f32.mrb[0].mxu0
      %v3838 = vadd.f32 %v3533, %v3837
      %v3839 = vpop.f32.mrb[0].mxu0
      %3840 = vmatprep.mubr.bf16.mxu0 %v2976
      %3841 = vmatmul.mubr.bf16.gmra.mrb[0].mxu0 %v2975
      %v3842 = vpop.f32.mrb[0].mxu0
      %v3843 = vadd.f32 %v3538, %v3842
      %v3844 = vpop.f32.mrb[0].mxu0
      %v3845 = vpop.f32.mrb[0].mxu0
      %v3846 = vadd.f32 %v3541, %v3845
      %v3847 = vpop.f32.mrb[0].mxu0
      %3848 = vmatprep.mubr.bf16.mxu0 %v2979
      %3849 = vmatmul.mubr.bf16.gmra.mrb[0].mxu0 %v2978
      %v3850 = vpop.f32.mrb[0].mxu0
      %v3851 = vadd.f32 %v3546, %v3850
      %v3852 = vpop.f32.mrb[0].mxu0
      %v3853 = vpop.f32.mrb[0].mxu0
      %v3854 = vadd.f32 %v3549, %v3853
      %v3855 = vpop.f32.mrb[0].mxu0
      %3856 = vmatprep.mubr.bf16.mxu0 %v2982
      %3857 = vmatmul.mubr.bf16.gmra.mrb[0].mxu0 %v2981
      %v3858 = vpop.f32.mrb[0].mxu0
      %v3859 = vadd.f32 %v3554, %v3858
      %v3860 = vpop.f32.mrb[0].mxu0
      %v3861 = vpop.f32.mrb[0].mxu0
      %v3862 = vadd.f32 %v3557, %v3861
      %v3863 = vpop.f32.mrb[0].mxu0
      %3864 = vmatprep.mubr.bf16.mxu0 %v2985
      %3865 = vmatmul.mubr.bf16.gmra.mrb[0].mxu0 %v2984
      %v3866 = vpop.f32.mrb[0].mxu0
      %v3867 = vadd.f32 %v3562, %v3866
      %v3868 = vpop.f32.mrb[0].mxu0
      %v3869 = vpop.f32.mrb[0].mxu0
      %v3870 = vadd.f32 %v3565, %v3869
      %v3871 = vpop.f32.mrb[0].mxu0
      %3872 = vmatprep.mubr.bf16.mxu0 %v2988
      %3873 = vmatmul.mubr.bf16.gmra.mrb[0].mxu0 %v2987
      %v3874 = vpop.f32.mrb[0].mxu0
      %v3875 = vadd.f32 %v3570, %v3874
      %v3876 = vpop.f32.mrb[0].mxu0
      %v3877 = vpop.f32.mrb[0].mxu0
      %v3878 = vadd.f32 %v3573, %v3877
      %v3879 = vpop.f32.mrb[0].mxu0
      %3880 = vmatprep.mubr.bf16.mxu0 %v2991
      %3881 = vmatmul.mubr.bf16.gmra.mrb[0].mxu0 %v2990
      %v3882 = vpop.f32.mrb[0].mxu0
      %v3883 = vadd.f32 %v3578, %v3882
      %v3884 = vpop.f32.mrb[0].mxu0
      %v3885 = vpop.f32.mrb[0].mxu0
      %v3886 = vadd.f32 %v3581, %v3885
      %v3887 = vpop.f32.mrb[0].mxu0
      %3888 = vmatprep.mubr.bf16.mxu0 %v2994
      %3889 = vmatmul.mubr.bf16.gmra.mrb[0].mxu0 %v2993
      %v3890 = vpop.f32.mrb[0].mxu0
      %v3891 = vadd.f32 %v3586, %v3890
      %v3892 = vpop.f32.mrb[0].mxu0
      %v3893 = vpop.f32.mrb[0].mxu0
      %v3894 = vadd.f32 %v3589, %v3893
      %v3895 = vpop.f32.mrb[0].mxu0
      %3896 = vmatprep.mubr.bf16.mxu0 %v2997
      %3897 = vmatmul.mubr.bf16.gmra.mrb[0].mxu0 %v2996
      %v3898 = vpop.f32.mrb[0].mxu0
      %v3899 = vadd.f32 %v3594, %v3898
      %v3900 = vpop.f32.mrb[0].mxu0
      %v3901 = vpop.f32.mrb[0].mxu0
      %v3902 = vadd.f32 %v3597, %v3901
      %v3903 = vpop.f32.mrb[0].mxu0
      %3904 = vmatprep.mubr.bf16.mxu0 %v3000
      %3905 = vmatmul.mubr.bf16.gmra.mrb[0].mxu0 %v2999
      %v3906 = vpop.f32.mrb[0].mxu0
      %v3907 = vadd.f32 %v3602, %v3906
      %v3908 = vpop.f32.mrb[0].mxu0
      %v3909 = vpop.f32.mrb[0].mxu0
      %v3910 = vadd.f32 %v3605, %v3909
      %v3911 = vpop.f32.mrb[0].mxu0
      %3912 = vmatprep.mubr.bf16.mxu0 %v3003
      %3913 = vmatmul.mubr.bf16.gmra.mrb[0].mxu0 %v3002
      %v3914 = vpop.f32.mrb[0].mxu0
      %v3915 = vadd.f32 %v3610, %v3914
      %v3916 = vpop.f32.mrb[0].mxu0
      %v3917 = vpop.f32.mrb[0].mxu0
      %v3918 = vadd.f32 %v3613, %v3917
      %v3919 = vpop.f32.mrb[0].mxu0
      %3920 = vdwg.mxu0
      %3921 = vmatprep.subr.bf16.mxu0 0
      %3922 = vmatpush1.bf16.msra.mxu0 %v3728
      %3923 = vmatprep.subr.bf16.mxu0 0
      %3924 = vmatpush1.bf16.msra.mxu0 %v3729
      %3925 = vmatprep.subr.bf16.mxu0 0
      %3926 = vmatpush1.bf16.msra.mxu0 %v3730
      %3927 = vmatprep.subr.bf16.mxu0 0
      %3928 = vmatpush1.bf16.msra.mxu0 %v3731
      %3929 = vmatprep.subr.bf16.mxu0 0
      %3930 = vmatpush1.bf16.msra.mxu0 %v3732
      %3931 = vmatprep.subr.bf16.mxu0 0
      %3932 = vmatpush1.bf16.msra.mxu0 %v3733
      %3933 = vmatprep.subr.bf16.mxu0 0
      %3934 = vmatpush1.bf16.msra.mxu0 %v3734
      %3935 = vmatprep.subr.bf16.mxu0 0
      %3936 = vmatpush1.bf16.msra.mxu0 %v3735
      %3937 = vmatprep.subr.bf16.mxu0 0
      %3938 = vmatpush1.bf16.msra.mxu0 0
      %3939 = vmatprep.subr.bf16.mxu0 0
      %3940 = vmatpush1.bf16.msra.mxu0 0
      %3941 = vmatprep.subr.bf16.mxu0 0
      %3942 = vmatpush1.bf16.msra.mxu0 0
      %3943 = vmatprep.subr.bf16.mxu0 0
      %3944 = vmatpush1.bf16.msra.mxu0 0
      %3945 = vmatprep.subr.bf16.mxu0 0
      %3946 = vmatpush1.bf16.msra.mxu0 0
      %3947 = vmatprep.subr.bf16.mxu0 0
      %3948 = vmatpush1.bf16.msra.mxu0 0
      %3949 = vmatprep.subr.bf16.mxu0 0
      %3950 = vmatpush1.bf16.msra.mxu0 0
      %3951 = vmatprep.subr.bf16.mxu0 0
      %3952 = vmatpush1.bf16.msra.mxu0 0
      %3953 = vmatprep.mubr.bf16.mxu0 0
      %3954 = vmatmul.mubr.bf16.gmra.mrb[0].mxu0 %v2959
      %v3955 = vpop.f32.mrb[0].mxu0
      %v3956 = vadd.f32 %v3795, %v3955
      %v3957 = vpop.f32.mrb[0].mxu0
      %v3958 = vpop.f32.mrb[0].mxu0
      %v3959 = vadd.f32 %v3798, %v3958
      %v3960 = vpop.f32.mrb[0].mxu0
      %3961 = vmatprep.mubr.bf16.mxu0 0
      %3962 = vmatmul.mubr.bf16.gmra.mrb[0].mxu0 %v2962
      %v3963 = vpop.f32.mrb[0].mxu0
      %v3964 = vadd.f32 %v3803, %v3963
      %v3965 = vpop.f32.mrb[0].mxu0
      %v3966 = vpop.f32.mrb[0].mxu0
      %v3967 = vadd.f32 %v3806, %v3966
      %v3968 = vpop.f32.mrb[0].mxu0
      %3969 = vmatprep.mubr.bf16.mxu0 0
      %3970 = vmatmul.mubr.bf16.gmra.mrb[0].mxu0 %v2965
      %v3971 = vpop.f32.mrb[0].mxu0
      %v3972 = vadd.f32 %v3811, %v3971
      %v3973 = vpop.f32.mrb[0].mxu0
      %v3974 = vpop.f32.mrb[0].mxu0
      %v3975 = vadd.f32 %v3814, %v3974
      %v3976 = vpop.f32.mrb[0].mxu0
      %3977 = vmatprep.mubr.bf16.mxu0 0
      %3978 = vmatmul.mubr.bf16.gmra.mrb[0].mxu0 %v2968
      %v3979 = vpop.f32.mrb[0].mxu0
      %v3980 = vadd.f32 %v3819, %v3979
      %v3981 = vpop.f32.mrb[0].mxu0
      %v3982 = vpop.f32.mrb[0].mxu0
      %v3983 = vadd.f32 %v3822, %v3982
      %v3984 = vpop.f32.mrb[0].mxu0
      %3985 = vmatprep.mubr.bf16.mxu0 0
      %3986 = vmatmul.mubr.bf16.gmra.mrb[0].mxu0 %v2971
      %v3987 = vpop.f32.mrb[0].mxu0
      %v3988 = vadd.f32 %v3827, %v3987
      %v3989 = vpop.f32.mrb[0].mxu0
      %v3990 = vpop.f32.mrb[0].mxu0
      %v3991 = vadd.f32 %v3830, %v3990
      %v3992 = vpop.f32.mrb[0].mxu0
      %3993 = vmatprep.mubr.bf16.mxu0 0
      %3994 = vmatmul.mubr.bf16.gmra.mrb[0].mxu0 %v2974
      %v3995 = vpop.f32.mrb[0].mxu0
      %v3996 = vadd.f32 %v3835, %v3995
      %v3997 = vpop.f32.mrb[0].mxu0
      %v3998 = vpop.f32.mrb[0].mxu0
      %v3999 = vadd.f32 %v3838, %v3998
      %v4000 = vpop.f32.mrb[0].mxu0
      %4001 = vmatprep.mubr.bf16.mxu0 0
      %4002 = vmatmul.mubr.bf16.gmra.mrb[0].mxu0 %v2977
      %v4003 = vpop.f32.mrb[0].mxu0
      %v4004 = vadd.f32 %v3843, %v4003
      %v4005 = vpop.f32.mrb[0].mxu0
      %v4006 = vpop.f32.mrb[0].mxu0
      %v4007 = vadd.f32 %v3846, %v4006
      %v4008 = vpop.f32.mrb[0].mxu0
      %4009 = vmatprep.mubr.bf16.mxu0 0
      %4010 = vmatmul.mubr.bf16.gmra.mrb[0].mxu0 %v2980
      %v4011 = vpop.f32.mrb[0].mxu0
      %v4012 = vadd.f32 %v3851, %v4011
      %v4013 = vpop.f32.mrb[0].mxu0
      %v4014 = vpop.f32.mrb[0].mxu0
      %v4015 = vadd.f32 %v3854, %v4014
      %v4016 = vpop.f32.mrb[0].mxu0
      %4017 = vmatprep.mubr.bf16.mxu0 0
      %4018 = vmatmul.mubr.bf16.gmra.mrb[0].mxu0 %v2983
      %v4019 = vpop.f32.mrb[0].mxu0
      %v4020 = vadd.f32 %v3859, %v4019
      %v4021 = vpop.f32.mrb[0].mxu0
      %v4022 = vpop.f32.mrb[0].mxu0
      %v4023 = vadd.f32 %v3862, %v4022
      %v4024 = vpop.f32.mrb[0].mxu0
      %4025 = vmatprep.mubr.bf16.mxu0 0
      %4026 = vmatmul.mubr.bf16.gmra.mrb[0].mxu0 %v2986
      %v4027 = vpop.f32.mrb[0].mxu0
      %v4028 = vadd.f32 %v3867, %v4027
      %v4029 = vpop.f32.mrb[0].mxu0
      %v4030 = vpop.f32.mrb[0].mxu0
      %v4031 = vadd.f32 %v3870, %v4030
      %v4032 = vpop.f32.mrb[0].mxu0
      %4033 = vmatprep.mubr.bf16.mxu0 0
      %4034 = vmatmul.mubr.bf16.gmra.mrb[0].mxu0 %v2989
      %v4035 = vpop.f32.mrb[0].mxu0
      %v4036 = vadd.f32 %v3875, %v4035
      %v4037 = vpop.f32.mrb[0].mxu0
      %v4038 = vpop.f32.mrb[0].mxu0
      %v4039 = vadd.f32 %v3878, %v4038
      %v4040 = vpop.f32.mrb[0].mxu0
      %4041 = vmatprep.mubr.bf16.mxu0 0
      %4042 = vmatmul.mubr.bf16.gmra.mrb[0].mxu0 %v2992
      %v4043 = vpop.f32.mrb[0].mxu0
      %v4044 = vadd.f32 %v3883, %v4043
      %v4045 = vpop.f32.mrb[0].mxu0
      %v4046 = vpop.f32.mrb[0].mxu0
      %v4047 = vadd.f32 %v3886, %v4046
      %v4048 = vpop.f32.mrb[0].mxu0
      %4049 = vmatprep.mubr.bf16.mxu0 0
      %4050 = vmatmul.mubr.bf16.gmra.mrb[0].mxu0 %v2995
      %v4051 = vpop.f32.mrb[0].mxu0
      %v4052 = vadd.f32 %v3891, %v4051
      %v4053 = vpop.f32.mrb[0].mxu0
      %v4054 = vpop.f32.mrb[0].mxu0
      %v4055 = vadd.f32 %v3894, %v4054
      %v4056 = vpop.f32.mrb[0].mxu0
      %4057 = vmatprep.mubr.bf16.mxu0 0
      %4058 = vmatmul.mubr.bf16.gmra.mrb[0].mxu0 %v2998
      %v4059 = vpop.f32.mrb[0].mxu0
      %v4060 = vadd.f32 %v3899, %v4059
      %v4061 = vpop.f32.mrb[0].mxu0
      %v4062 = vpop.f32.mrb[0].mxu0
      %v4063 = vadd.f32 %v3902, %v4062
      %v4064 = vpop.f32.mrb[0].mxu0
      %4065 = vmatprep.mubr.bf16.mxu0 0
      %4066 = vmatmul.mubr.bf16.gmra.mrb[0].mxu0 %v3001
      %v4067 = vpop.f32.mrb[0].mxu0
      %v4068 = vadd.f32 %v3907, %v4067
      %v4069 = vpop.f32.mrb[0].mxu0
      %v4070 = vpop.f32.mrb[0].mxu0
      %v4071 = vadd.f32 %v3910, %v4070
      %v4072 = vpop.f32.mrb[0].mxu0
      %4073 = vmatprep.mubr.bf16.mxu0 0
      %4074 = vmatmul.mubr.bf16.gmra.mrb[0].mxu0 %v3004
      %v4075 = vpop.f32.mrb[0].mxu0
      %v4076 = vadd.f32 %v3915, %v4075
      %v4077 = vpop.f32.mrb[0].mxu0
      %v4078 = vpop.f32.mrb[0].mxu0
      %v4079 = vadd.f32 %v3918, %v4078
      %v4080 = vpop.f32.mrb[0].mxu0
      %4081 = vdwg.mxu0
      %s4082 = scalar_lea.vmem [#allocation3], 48
      %v4083 = vld [vmem:[%s4082] sm:$0xff]
      %v4084 = vld [vmem:[%s4082 + $0x8] sm:$0xff]
      %v4085 = vld [vmem:[%s4082 + $0x10] sm:$0xff]
      %v4086 = vld [vmem:[%s4082 + $0x18] sm:$0xff]
      %v4087 = vld [vmem:[%s4082 + $0x20] sm:$0xff]
      %v4088 = vld [vmem:[%s4082 + $0x28] sm:$0xff]
      %v4089 = vld [vmem:[%s4082 + $0x30] sm:$0xff]
      %v4090 = vld [vmem:[%s4082 + $0x38] sm:$0xff]
      %v4091 = vld [vmem:[%s4082 + $0x40] sm:$0xff]
      %v4092 = vld [vmem:[%s4082 + $0x48] sm:$0xff]
      %v4093 = vld [vmem:[%s4082 + $0x50] sm:$0xff]
      %v4094 = vld [vmem:[%s4082 + $0x58] sm:$0xff]
      %v4095 = vld [vmem:[%s4082 + $0x60] sm:$0xff]
      %v4096 = vld [vmem:[%s4082 + $0x68] sm:$0xff]
      %v4097 = vld [vmem:[%s4082 + $0x70] sm:$0xff]
      %v4098 = vld [vmem:[%s4082 + $0x78] sm:$0xff]
      %v4099 = vld [vmem:[%s4082 + $0x80] sm:$0xff]
      %v4100 = vld [vmem:[%s4082 + $0x88] sm:$0xff]
      %v4101 = vld [vmem:[%s4082 + $0x90] sm:$0xff]
      %v4102 = vld [vmem:[%s4082 + $0x98] sm:$0xff]
      %v4103 = vld [vmem:[%s4082 + $0xa0] sm:$0xff]
      %v4104 = vld [vmem:[%s4082 + $0xa8] sm:$0xff]
      %v4105 = vld [vmem:[%s4082 + $0xb0] sm:$0xff]
      %v4106 = vld [vmem:[%s4082 + $0xb8] sm:$0xff]
      %v4107 = vld [vmem:[%s4082 + $0xc0] sm:$0xff]
      %v4108 = vld [vmem:[%s4082 + $0xc8] sm:$0xff]
      %v4109 = vld [vmem:[%s4082 + $0xd0] sm:$0xff]
      %v4110 = vld [vmem:[%s4082 + $0xd8] sm:$0xff]
      %v4111 = vld [vmem:[%s4082 + $0xe0] sm:$0xff]
      %v4112 = vld [vmem:[%s4082 + $0xe8] sm:$0xff]
      %v4113 = vld [vmem:[%s4082 + $0xf0] sm:$0xff]
      %v4114 = vld [vmem:[%s4082 + $0xf8] sm:$0xff]
      %v4115 = vld [vmem:[%s4082 + $0x100] sm:$0xff]
      %v4116 = vld [vmem:[%s4082 + $0x108] sm:$0xff]
      %v4117 = vld [vmem:[%s4082 + $0x110] sm:$0xff]
      %v4118 = vld [vmem:[%s4082 + $0x118] sm:$0xff]
      %v4119 = vld [vmem:[%s4082 + $0x120] sm:$0xff]
      %v4120 = vld [vmem:[%s4082 + $0x128] sm:$0xff]
      %v4121 = vld [vmem:[%s4082 + $0x130] sm:$0xff]
      %v4122 = vld [vmem:[%s4082 + $0x138] sm:$0xff]
      %v4123 = vld [vmem:[%s4082 + $0x140] sm:$0xff]
      %v4124 = vld [vmem:[%s4082 + $0x148] sm:$0xff]
      %v4125 = vld [vmem:[%s4082 + $0x150] sm:$0xff]
      %v4126 = vld [vmem:[%s4082 + $0x158] sm:$0xff]
      %v4127 = vld [vmem:[%s4082 + $0x160] sm:$0xff]
      %v4128 = vld [vmem:[%s4082 + $0x168] sm:$0xff]
      %v4129 = vld [vmem:[%s4082 + $0x170] sm:$0xff]
      %v4130 = vld [vmem:[%s4082 + $0x178] sm:$0xff]
      %s4131 = scalar_lea.vmem %s3, 384
      %v4132 = vld [vmem:[%s4131] sm:$0xf]
      %v4133 = vld [vmem:[%s4131 + $0x4] sm:$0xf]
      %v4134 = vld [vmem:[%s4131 + $0x8] sm:$0xf]
      %v4135 = vld [vmem:[%s4131 + $0xc] sm:$0xf]
      %v4136 = vld [vmem:[%s4131 + $0x10] sm:$0xf]
      %v4137 = vld [vmem:[%s4131 + $0x14] sm:$0xf]
      %v4138 = vld [vmem:[%s4131 + $0x18] sm:$0xf]
      %v4139 = vld [vmem:[%s4131 + $0x1c] sm:$0xf]
      %v4140 = vld [vmem:[%s4131 + $0x20] sm:$0xf]
      %v4141 = vld [vmem:[%s4131 + $0x24] sm:$0xf]
      %v4142 = vld [vmem:[%s4131 + $0x28] sm:$0xf]
      %v4143 = vld [vmem:[%s4131 + $0x2c] sm:$0xf]
      %v4144 = vld [vmem:[%s4131 + $0x30] sm:$0xf]
      %v4145 = vld [vmem:[%s4131 + $0x34] sm:$0xf]
      %v4146 = vld [vmem:[%s4131 + $0x38] sm:$0xf]
      %v4147 = vld [vmem:[%s4131 + $0x3c] sm:$0xf]
      %v4148 = vld [vmem:[%s4131 + $0x40] sm:$0xf]
      %v4149 = vld [vmem:[%s4131 + $0x44] sm:$0xf]
      %v4150 = vld [vmem:[%s4131 + $0x48] sm:$0xf]
      %v4151 = vld [vmem:[%s4131 + $0x4c] sm:$0xf]
      %v4152 = vld [vmem:[%s4131 + $0x50] sm:$0xf]
      %v4153 = vld [vmem:[%s4131 + $0x54] sm:$0xf]
      %v4154 = vld [vmem:[%s4131 + $0x58] sm:$0xf]
      %v4155 = vld [vmem:[%s4131 + $0x5c] sm:$0xf]
      %v4156 = vld [vmem:[%s4131 + $0x60] sm:$0xf]
      %v4157 = vld [vmem:[%s4131 + $0x64] sm:$0xf]
      %v4158 = vld [vmem:[%s4131 + $0x68] sm:$0xf]
      %v4159 = vld [vmem:[%s4131 + $0x6c] sm:$0xf]
      %v4160 = vld [vmem:[%s4131 + $0x70] sm:$0xf]
      %v4161 = vld [vmem:[%s4131 + $0x74] sm:$0xf]
      %v4162 = vld [vmem:[%s4131 + $0x78] sm:$0xf]
      %v4163 = vld [vmem:[%s4131 + $0x7c] sm:$0xf]
      %v4164 = vld [vmem:[%s4131 + $0x80] sm:$0xf]
      %v4165 = vld [vmem:[%s4131 + $0x84] sm:$0xf]
      %v4166 = vld [vmem:[%s4131 + $0x88] sm:$0xf]
      %v4167 = vld [vmem:[%s4131 + $0x8c] sm:$0xf]
      %v4168 = vld [vmem:[%s4131 + $0x90] sm:$0xf]
      %v4169 = vld [vmem:[%s4131 + $0x94] sm:$0xf]
      %v4170 = vld [vmem:[%s4131 + $0x98] sm:$0xf]
      %v4171 = vld [vmem:[%s4131 + $0x9c] sm:$0xf]
      %v4172 = vld [vmem:[%s4131 + $0xa0] sm:$0xf]
      %v4173 = vld [vmem:[%s4131 + $0xa4] sm:$0xf]
      %v4174 = vld [vmem:[%s4131 + $0xa8] sm:$0xf]
      %v4175 = vld [vmem:[%s4131 + $0xac] sm:$0xf]
      %v4176 = vld [vmem:[%s4131 + $0xb0] sm:$0xf]
      %v4177 = vld [vmem:[%s4131 + $0xb4] sm:$0xf]
      %v4178 = vld [vmem:[%s4131 + $0xb8] sm:$0xf]
      %v4179 = vld [vmem:[%s4131 + $0xbc] sm:$0xf]
      %v4228 = vunpack.c.l.b16 %v4132
      %v4229 = vunpack.c.l.b16 %v4133
      %v4230 = vunpack.c.l.b16 %v4134
      %v4231 = vunpack.c.l.b16 %v4135
      %v4232 = vunpack.c.l.b16 %v4136
      %v4233 = vunpack.c.l.b16 %v4137
      %v4234 = vunpack.c.l.b16 %v4138
      %v4235 = vunpack.c.l.b16 %v4139
      %v4236 = vunpack.c.l.b16 %v4140
      %v4237 = vunpack.c.l.b16 %v4141
      %v4238 = vunpack.c.l.b16 %v4142
      %v4239 = vunpack.c.l.b16 %v4143
      %v4240 = vunpack.c.l.b16 %v4144
      %v4241 = vunpack.c.l.b16 %v4145
      %v4242 = vunpack.c.l.b16 %v4146
      %v4243 = vunpack.c.l.b16 %v4147
      %v4244 = vunpack.c.l.b16 %v4148
      %v4245 = vunpack.c.l.b16 %v4149
      %v4246 = vunpack.c.l.b16 %v4150
      %v4247 = vunpack.c.l.b16 %v4151
      %v4248 = vunpack.c.l.b16 %v4152
      %v4249 = vunpack.c.l.b16 %v4153
      %v4250 = vunpack.c.l.b16 %v4154
      %v4251 = vunpack.c.l.b16 %v4155
      %v4252 = vunpack.c.l.b16 %v4156
      %v4253 = vunpack.c.l.b16 %v4157
      %v4254 = vunpack.c.l.b16 %v4158
      %v4255 = vunpack.c.l.b16 %v4159
      %v4256 = vunpack.c.l.b16 %v4160
      %v4257 = vunpack.c.l.b16 %v4161
      %v4258 = vunpack.c.l.b16 %v4162
      %v4259 = vunpack.c.l.b16 %v4163
      %v4260 = vunpack.c.l.b16 %v4164
      %v4261 = vunpack.c.l.b16 %v4165
      %v4262 = vunpack.c.l.b16 %v4166
      %v4263 = vunpack.c.l.b16 %v4167
      %v4264 = vunpack.c.l.b16 %v4168
      %v4265 = vunpack.c.l.b16 %v4169
      %v4266 = vunpack.c.l.b16 %v4170
      %v4267 = vunpack.c.l.b16 %v4171
      %v4268 = vunpack.c.l.b16 %v4172
      %v4269 = vunpack.c.l.b16 %v4173
      %v4270 = vunpack.c.l.b16 %v4174
      %v4271 = vunpack.c.l.b16 %v4175
      %v4272 = vunpack.c.l.b16 %v4176
      %v4273 = vunpack.c.l.b16 %v4177
      %v4274 = vunpack.c.l.b16 %v4178
      %v4275 = vunpack.c.l.b16 %v4179
      %v4276 = vpack.c.b16 %v4229, %v4228
      %v4277 = vpack.c.b16 %v4231, %v4230
      %v4278 = vpack.c.b16 %v4233, %v4232
      %v4279 = vpack.c.b16 %v4235, %v4234
      %v4280 = vpack.c.b16 %v4237, %v4236
      %v4281 = vpack.c.b16 %v4239, %v4238
      %v4282 = vpack.c.b16 %v4241, %v4240
      %v4283 = vpack.c.b16 %v4243, %v4242
      %v4284 = vpack.c.b16 %v4245, %v4244
      %v4285 = vpack.c.b16 %v4247, %v4246
      %v4286 = vpack.c.b16 %v4249, %v4248
      %v4287 = vpack.c.b16 %v4251, %v4250
      %v4288 = vpack.c.b16 %v4253, %v4252
      %v4289 = vpack.c.b16 %v4255, %v4254
      %v4290 = vpack.c.b16 %v4257, %v4256
      %v4291 = vpack.c.b16 %v4259, %v4258
      %v4292 = vpack.c.b16 %v4261, %v4260
      %v4293 = vpack.c.b16 %v4263, %v4262
      %v4294 = vpack.c.b16 %v4265, %v4264
      %v4295 = vpack.c.b16 %v4267, %v4266
      %v4296 = vpack.c.b16 %v4269, %v4268
      %v4297 = vpack.c.b16 %v4271, %v4270
      %v4298 = vpack.c.b16 %v4273, %v4272
      %v4299 = vpack.c.b16 %v4275, %v4274
      %4324 = vmatprep.subr.bf16.mxu0 0
      %4325 = vmatpush1.bf16.msra.mxu0 %v4276
      %4326 = vmatprep.subr.bf16.mxu0 0
      %4327 = vmatpush1.bf16.msra.mxu0 %v4277
      %4328 = vmatprep.subr.bf16.mxu0 0
      %4329 = vmatpush1.bf16.msra.mxu0 %v4278
      %4330 = vmatprep.subr.bf16.mxu0 0
      %4331 = vmatpush1.bf16.msra.mxu0 %v4279
      %4332 = vmatprep.subr.bf16.mxu0 0
      %4333 = vmatpush1.bf16.msra.mxu0 %v4280
      %4334 = vmatprep.subr.bf16.mxu0 0
      %4335 = vmatpush1.bf16.msra.mxu0 %v4281
      %4336 = vmatprep.subr.bf16.mxu0 0
      %4337 = vmatpush1.bf16.msra.mxu0 %v4282
      %4338 = vmatprep.subr.bf16.mxu0 0
      %4339 = vmatpush1.bf16.msra.mxu0 %v4283
      %4340 = vmatprep.subr.bf16.mxu0 0
      %4341 = vmatpush1.bf16.msra.mxu0 %v4284
      %4342 = vmatprep.subr.bf16.mxu0 0
      %4343 = vmatpush1.bf16.msra.mxu0 %v4285
      %4344 = vmatprep.subr.bf16.mxu0 0
      %4345 = vmatpush1.bf16.msra.mxu0 %v4286
      %4346 = vmatprep.subr.bf16.mxu0 0
      %4347 = vmatpush1.bf16.msra.mxu0 %v4287
      %4348 = vmatprep.subr.bf16.mxu0 0
      %4349 = vmatpush1.bf16.msra.mxu0 %v4288
      %4350 = vmatprep.subr.bf16.mxu0 0
      %4351 = vmatpush1.bf16.msra.mxu0 %v4289
      %4352 = vmatprep.subr.bf16.mxu0 0
      %4353 = vmatpush1.bf16.msra.mxu0 %v4290
      %4354 = vmatprep.subr.bf16.mxu0 0
      %4355 = vmatpush1.bf16.msra.mxu0 %v4291
      %4356 = vmatprep.mubr.bf16.mxu0 %v4084
      %4357 = vmatmul.mubr.bf16.gmra.mrb[0].mxu0 %v4083
      %v4358 = vpop.f32.mrb[0].mxu0
      %v4359 = vadd.f32 0.0, %v4358
      %v4360 = vpop.f32.mrb[0].mxu0
      %v4361 = vpop.f32.mrb[0].mxu0
      %v4362 = vadd.f32 0.0, %v4361
      %v4363 = vpop.f32.mrb[0].mxu0
      %4364 = vmatprep.mubr.bf16.mxu0 %v4087
      %4365 = vmatmul.mubr.bf16.gmra.mrb[0].mxu0 %v4086
      %v4366 = vpop.f32.mrb[0].mxu0
      %v4367 = vadd.f32 0.0, %v4366
      %v4368 = vpop.f32.mrb[0].mxu0
      %v4369 = vpop.f32.mrb[0].mxu0
      %v4370 = vadd.f32 0.0, %v4369
      %v4371 = vpop.f32.mrb[0].mxu0
      %4372 = vmatprep.mubr.bf16.mxu0 %v4090
      %4373 = vmatmul.mubr.bf16.gmra.mrb[0].mxu0 %v4089
      %v4374 = vpop.f32.mrb[0].mxu0
      %v4375 = vadd.f32 0.0, %v4374
      %v4376 = vpop.f32.mrb[0].mxu0
      %v4377 = vpop.f32.mrb[0].mxu0
      %v4378 = vadd.f32 0.0, %v4377
      %v4379 = vpop.f32.mrb[0].mxu0
      %4380 = vmatprep.mubr.bf16.mxu0 %v4093
      %4381 = vmatmul.mubr.bf16.gmra.mrb[0].mxu0 %v4092
      %v4382 = vpop.f32.mrb[0].mxu0
      %v4383 = vadd.f32 0.0, %v4382
      %v4384 = vpop.f32.mrb[0].mxu0
      %v4385 = vpop.f32.mrb[0].mxu0
      %v4386 = vadd.f32 0.0, %v4385
      %v4387 = vpop.f32.mrb[0].mxu0
      %4388 = vmatprep.mubr.bf16.mxu0 %v4096
      %4389 = vmatmul.mubr.bf16.gmra.mrb[0].mxu0 %v4095
      %v4390 = vpop.f32.mrb[0].mxu0
      %v4391 = vadd.f32 0.0, %v4390
      %v4392 = vpop.f32.mrb[0].mxu0
      %v4393 = vpop.f32.mrb[0].mxu0
      %v4394 = vadd.f32 0.0, %v4393
      %v4395 = vpop.f32.mrb[0].mxu0
      %4396 = vmatprep.mubr.bf16.mxu0 %v4099
      %4397 = vmatmul.mubr.bf16.gmra.mrb[0].mxu0 %v4098
      %v4398 = vpop.f32.mrb[0].mxu0
      %v4399 = vadd.f32 0.0, %v4398
      %v4400 = vpop.f32.mrb[0].mxu0
      %v4401 = vpop.f32.mrb[0].mxu0
      %v4402 = vadd.f32 0.0, %v4401
      %v4403 = vpop.f32.mrb[0].mxu0
      %4404 = vmatprep.mubr.bf16.mxu0 %v4102
      %4405 = vmatmul.mubr.bf16.gmra.mrb[0].mxu0 %v4101
      %v4406 = vpop.f32.mrb[0].mxu0
      %v4407 = vadd.f32 0.0, %v4406
      %v4408 = vpop.f32.mrb[0].mxu0
      %v4409 = vpop.f32.mrb[0].mxu0
      %v4410 = vadd.f32 0.0, %v4409
      %v4411 = vpop.f32.mrb[0].mxu0
      %4412 = vmatprep.mubr.bf16.mxu0 %v4105
      %4413 = vmatmul.mubr.bf16.gmra.mrb[0].mxu0 %v4104
      %v4414 = vpop.f32.mrb[0].mxu0
      %v4415 = vadd.f32 0.0, %v4414
      %v4416 = vpop.f32.mrb[0].mxu0
      %v4417 = vpop.f32.mrb[0].mxu0
      %v4418 = vadd.f32 0.0, %v4417
      %v4419 = vpop.f32.mrb[0].mxu0
      %4420 = vmatprep.mubr.bf16.mxu0 %v4108
      %4421 = vmatmul.mubr.bf16.gmra.mrb[0].mxu0 %v4107
      %v4422 = vpop.f32.mrb[0].mxu0
      %v4423 = vadd.f32 0.0, %v4422
      %v4424 = vpop.f32.mrb[0].mxu0
      %v4425 = vpop.f32.mrb[0].mxu0
      %v4426 = vadd.f32 0.0, %v4425
      %v4427 = vpop.f32.mrb[0].mxu0
      %4428 = vmatprep.mubr.bf16.mxu0 %v4111
      %4429 = vmatmul.mubr.bf16.gmra.mrb[0].mxu0 %v4110
      %v4430 = vpop.f32.mrb[0].mxu0
      %v4431 = vadd.f32 0.0, %v4430
      %v4432 = vpop.f32.mrb[0].mxu0
      %v4433 = vpop.f32.mrb[0].mxu0
      %v4434 = vadd.f32 0.0, %v4433
      %v4435 = vpop.f32.mrb[0].mxu0
      %4436 = vmatprep.mubr.bf16.mxu0 %v4114
      %4437 = vmatmul.mubr.bf16.gmra.mrb[0].mxu0 %v4113
      %v4438 = vpop.f32.mrb[0].mxu0
      %v4439 = vadd.f32 0.0, %v4438
      %v4440 = vpop.f32.mrb[0].mxu0
      %v4441 = vpop.f32.mrb[0].mxu0
      %v4442 = vadd.f32 0.0, %v4441
      %v4443 = vpop.f32.mrb[0].mxu0
      %4444 = vmatprep.mubr.bf16.mxu0 %v4117
      %4445 = vmatmul.mubr.bf16.gmra.mrb[0].mxu0 %v4116
      %v4446 = vpop.f32.mrb[0].mxu0
      %v4447 = vadd.f32 0.0, %v4446
      %v4448 = vpop.f32.mrb[0].mxu0
      %v4449 = vpop.f32.mrb[0].mxu0
      %v4450 = vadd.f32 0.0, %v4449
      %v4451 = vpop.f32.mrb[0].mxu0
      %4452 = vmatprep.mubr.bf16.mxu0 %v4120
      %4453 = vmatmul.mubr.bf16.gmra.mrb[0].mxu0 %v4119
      %v4454 = vpop.f32.mrb[0].mxu0
      %v4455 = vadd.f32 0.0, %v4454
      %v4456 = vpop.f32.mrb[0].mxu0
      %v4457 = vpop.f32.mrb[0].mxu0
      %v4458 = vadd.f32 0.0, %v4457
      %v4459 = vpop.f32.mrb[0].mxu0
      %4460 = vmatprep.mubr.bf16.mxu0 %v4123
      %4461 = vmatmul.mubr.bf16.gmra.mrb[0].mxu0 %v4122
      %v4462 = vpop.f32.mrb[0].mxu0
      %v4463 = vadd.f32 0.0, %v4462
      %v4464 = vpop.f32.mrb[0].mxu0
      %v4465 = vpop.f32.mrb[0].mxu0
      %v4466 = vadd.f32 0.0, %v4465
      %v4467 = vpop.f32.mrb[0].mxu0
      %4468 = vmatprep.mubr.bf16.mxu0 %v4126
      %4469 = vmatmul.mubr.bf16.gmra.mrb[0].mxu0 %v4125
      %v4470 = vpop.f32.mrb[0].mxu0
      %v4471 = vadd.f32 0.0, %v4470
      %v4472 = vpop.f32.mrb[0].mxu0
      %v4473 = vpop.f32.mrb[0].mxu0
      %v4474 = vadd.f32 0.0, %v4473
      %v4475 = vpop.f32.mrb[0].mxu0
      %4476 = vmatprep.mubr.bf16.mxu0 %v4129
      %4477 = vmatmul.mubr.bf16.gmra.mrb[0].mxu0 %v4128
      %v4478 = vpop.f32.mrb[0].mxu0
      %v4479 = vadd.f32 0.0, %v4478
      %v4480 = vpop.f32.mrb[0].mxu0
      %v4481 = vpop.f32.mrb[0].mxu0
      %v4482 = vadd.f32 0.0, %v4481
      %v4483 = vpop.f32.mrb[0].mxu0
      %4484 = vdwg.mxu0
      %4485 = vmatprep.subr.bf16.mxu0 0
      %4486 = vmatpush1.bf16.msra.mxu0 %v4292
      %4487 = vmatprep.subr.bf16.mxu0 0
      %4488 = vmatpush1.bf16.msra.mxu0 %v4293
      %4489 = vmatprep.subr.bf16.mxu0 0
      %4490 = vmatpush1.bf16.msra.mxu0 %v4294
      %4491 = vmatprep.subr.bf16.mxu0 0
      %4492 = vmatpush1.bf16.msra.mxu0 %v4295
      %4493 = vmatprep.subr.bf16.mxu0 0
      %4494 = vmatpush1.bf16.msra.mxu0 %v4296
      %4495 = vmatprep.subr.bf16.mxu0 0
      %4496 = vmatpush1.bf16.msra.mxu0 %v4297
      %4497 = vmatprep.subr.bf16.mxu0 0
      %4498 = vmatpush1.bf16.msra.mxu0 %v4298
      %4499 = vmatprep.subr.bf16.mxu0 0
      %4500 = vmatpush1.bf16.msra.mxu0 %v4299
      %4501 = vmatprep.subr.bf16.mxu0 0
      %4502 = vmatpush1.bf16.msra.mxu0 0
      %4503 = vmatprep.subr.bf16.mxu0 0
      %4504 = vmatpush1.bf16.msra.mxu0 0
      %4505 = vmatprep.subr.bf16.mxu0 0
      %4506 = vmatpush1.bf16.msra.mxu0 0
      %4507 = vmatprep.subr.bf16.mxu0 0
      %4508 = vmatpush1.bf16.msra.mxu0 0
      %4509 = vmatprep.subr.bf16.mxu0 0
      %4510 = vmatpush1.bf16.msra.mxu0 0
      %4511 = vmatprep.subr.bf16.mxu0 0
      %4512 = vmatpush1.bf16.msra.mxu0 0
      %4513 = vmatprep.subr.bf16.mxu0 0
      %4514 = vmatpush1.bf16.msra.mxu0 0
      %4515 = vmatprep.subr.bf16.mxu0 0
      %4516 = vmatpush1.bf16.msra.mxu0 0
      %4517 = vmatprep.mubr.bf16.mxu0 0
      %4518 = vmatmul.mubr.bf16.gmra.mrb[0].mxu0 %v4085
      %v4519 = vpop.f32.mrb[0].mxu0
      %v4520 = vadd.f32 %v4359, %v4519
      %v4521 = vpop.f32.mrb[0].mxu0
      %v4522 = vpop.f32.mrb[0].mxu0
      %v4523 = vadd.f32 %v4362, %v4522
      %v4524 = vpop.f32.mrb[0].mxu0
      %4525 = vmatprep.mubr.bf16.mxu0 0
      %4526 = vmatmul.mubr.bf16.gmra.mrb[0].mxu0 %v4088
      %v4527 = vpop.f32.mrb[0].mxu0
      %v4528 = vadd.f32 %v4367, %v4527
      %v4529 = vpop.f32.mrb[0].mxu0
      %v4530 = vpop.f32.mrb[0].mxu0
      %v4531 = vadd.f32 %v4370, %v4530
      %v4532 = vpop.f32.mrb[0].mxu0
      %4533 = vmatprep.mubr.bf16.mxu0 0
      %4534 = vmatmul.mubr.bf16.gmra.mrb[0].mxu0 %v4091
      %v4535 = vpop.f32.mrb[0].mxu0
      %v4536 = vadd.f32 %v4375, %v4535
      %v4537 = vpop.f32.mrb[0].mxu0
      %v4538 = vpop.f32.mrb[0].mxu0
      %v4539 = vadd.f32 %v4378, %v4538
      %v4540 = vpop.f32.mrb[0].mxu0
      %4541 = vmatprep.mubr.bf16.mxu0 0
      %4542 = vmatmul.mubr.bf16.gmra.mrb[0].mxu0 %v4094
      %v4543 = vpop.f32.mrb[0].mxu0
      %v4544 = vadd.f32 %v4383, %v4543
      %v4545 = vpop.f32.mrb[0].mxu0
      %v4546 = vpop.f32.mrb[0].mxu0
      %v4547 = vadd.f32 %v4386, %v4546
      %v4548 = vpop.f32.mrb[0].mxu0
      %4549 = vmatprep.mubr.bf16.mxu0 0
      %4550 = vmatmul.mubr.bf16.gmra.mrb[0].mxu0 %v4097
      %v4551 = vpop.f32.mrb[0].mxu0
      %v4552 = vadd.f32 %v4391, %v4551
      %v4553 = vpop.f32.mrb[0].mxu0
      %v4554 = vpop.f32.mrb[0].mxu0
      %v4555 = vadd.f32 %v4394, %v4554
      %v4556 = vpop.f32.mrb[0].mxu0
      %4557 = vmatprep.mubr.bf16.mxu0 0
      %4558 = vmatmul.mubr.bf16.gmra.mrb[0].mxu0 %v4100
      %v4559 = vpop.f32.mrb[0].mxu0
      %v4560 = vadd.f32 %v4399, %v4559
      %v4561 = vpop.f32.mrb[0].mxu0
      %v4562 = vpop.f32.mrb[0].mxu0
      %v4563 = vadd.f32 %v4402, %v4562
      %v4564 = vpop.f32.mrb[0].mxu0
      %4565 = vmatprep.mubr.bf16.mxu0 0
      %4566 = vmatmul.mubr.bf16.gmra.mrb[0].mxu0 %v4103
      %v4567 = vpop.f32.mrb[0].mxu0
      %v4568 = vadd.f32 %v4407, %v4567
      %v4569 = vpop.f32.mrb[0].mxu0
      %v4570 = vpop.f32.mrb[0].mxu0
      %v4571 = vadd.f32 %v4410, %v4570
      %v4572 = vpop.f32.mrb[0].mxu0
      %4573 = vmatprep.mubr.bf16.mxu0 0
      %4574 = vmatmul.mubr.bf16.gmra.mrb[0].mxu0 %v4106
      %v4575 = vpop.f32.mrb[0].mxu0
      %v4576 = vadd.f32 %v4415, %v4575
      %v4577 = vpop.f32.mrb[0].mxu0
      %v4578 = vpop.f32.mrb[0].mxu0
      %v4579 = vadd.f32 %v4418, %v4578
      %v4580 = vpop.f32.mrb[0].mxu0
      %4581 = vmatprep.mubr.bf16.mxu0 0
      %4582 = vmatmul.mubr.bf16.gmra.mrb[0].mxu0 %v4109
      %v4583 = vpop.f32.mrb[0].mxu0
      %v4584 = vadd.f32 %v4423, %v4583
      %v4585 = vpop.f32.mrb[0].mxu0
      %v4586 = vpop.f32.mrb[0].mxu0
      %v4587 = vadd.f32 %v4426, %v4586
      %v4588 = vpop.f32.mrb[0].mxu0
      %4589 = vmatprep.mubr.bf16.mxu0 0
      %4590 = vmatmul.mubr.bf16.gmra.mrb[0].mxu0 %v4112
      %v4591 = vpop.f32.mrb[0].mxu0
      %v4592 = vadd.f32 %v4431, %v4591
      %v4593 = vpop.f32.mrb[0].mxu0
      %v4594 = vpop.f32.mrb[0].mxu0
      %v4595 = vadd.f32 %v4434, %v4594
      %v4596 = vpop.f32.mrb[0].mxu0
      %4597 = vmatprep.mubr.bf16.mxu0 0
      %4598 = vmatmul.mubr.bf16.gmra.mrb[0].mxu0 %v4115
      %v4599 = vpop.f32.mrb[0].mxu0
      %v4600 = vadd.f32 %v4439, %v4599
      %v4601 = vpop.f32.mrb[0].mxu0
      %v4602 = vpop.f32.mrb[0].mxu0
      %v4603 = vadd.f32 %v4442, %v4602
      %v4604 = vpop.f32.mrb[0].mxu0
      %4605 = vmatprep.mubr.bf16.mxu0 0
      %4606 = vmatmul.mubr.bf16.gmra.mrb[0].mxu0 %v4118
      %v4607 = vpop.f32.mrb[0].mxu0
      %v4608 = vadd.f32 %v4447, %v4607
      %v4609 = vpop.f32.mrb[0].mxu0
      %v4610 = vpop.f32.mrb[0].mxu0
      %v4611 = vadd.f32 %v4450, %v4610
      %v4612 = vpop.f32.mrb[0].mxu0
      %4613 = vmatprep.mubr.bf16.mxu0 0
      %4614 = vmatmul.mubr.bf16.gmra.mrb[0].mxu0 %v4121
      %v4615 = vpop.f32.mrb[0].mxu0
      %v4616 = vadd.f32 %v4455, %v4615
      %v4617 = vpop.f32.mrb[0].mxu0
      %v4618 = vpop.f32.mrb[0].mxu0
      %v4619 = vadd.f32 %v4458, %v4618
      %v4620 = vpop.f32.mrb[0].mxu0
      %4621 = vmatprep.mubr.bf16.mxu0 0
      %4622 = vmatmul.mubr.bf16.gmra.mrb[0].mxu0 %v4124
      %v4623 = vpop.f32.mrb[0].mxu0
      %v4624 = vadd.f32 %v4463, %v4623
      %v4625 = vpop.f32.mrb[0].mxu0
      %v4626 = vpop.f32.mrb[0].mxu0
      %v4627 = vadd.f32 %v4466, %v4626
      %v4628 = vpop.f32.mrb[0].mxu0
      %4629 = vmatprep.mubr.bf16.mxu0 0
      %4630 = vmatmul.mubr.bf16.gmra.mrb[0].mxu0 %v4127
      %v4631 = vpop.f32.mrb[0].mxu0
      %v4632 = vadd.f32 %v4471, %v4631
      %v4633 = vpop.f32.mrb[0].mxu0
      %v4634 = vpop.f32.mrb[0].mxu0
      %v4635 = vadd.f32 %v4474, %v4634
      %v4636 = vpop.f32.mrb[0].mxu0
      %4637 = vmatprep.mubr.bf16.mxu0 0
      %4638 = vmatmul.mubr.bf16.gmra.mrb[0].mxu0 %v4130
      %v4639 = vpop.f32.mrb[0].mxu0
      %v4640 = vadd.f32 %v4479, %v4639
      %v4641 = vpop.f32.mrb[0].mxu0
      %v4642 = vpop.f32.mrb[0].mxu0
      %v4643 = vadd.f32 %v4482, %v4642
      %v4644 = vpop.f32.mrb[0].mxu0
      %4645 = vdwg.mxu0
      %v4646 = vadd.f32 %v3956, %v4520
      %v4647 = vadd.f32 %v3959, %v4523
      %v4648 = vadd.f32 %v3964, %v4528
      %v4649 = vadd.f32 %v3967, %v4531
      %v4650 = vadd.f32 %v3972, %v4536
      %v4651 = vadd.f32 %v3975, %v4539
      %v4652 = vadd.f32 %v3980, %v4544
      %v4653 = vadd.f32 %v3983, %v4547
      %v4654 = vadd.f32 %v3988, %v4552
      %v4655 = vadd.f32 %v3991, %v4555
      %v4656 = vadd.f32 %v3996, %v4560
      %v4657 = vadd.f32 %v3999, %v4563
      %v4658 = vadd.f32 %v4004, %v4568
      %v4659 = vadd.f32 %v4007, %v4571
      %v4660 = vadd.f32 %v4012, %v4576
      %v4661 = vadd.f32 %v4015, %v4579
      %v4662 = vadd.f32 %v4020, %v4584
      %v4663 = vadd.f32 %v4023, %v4587
      %v4664 = vadd.f32 %v4028, %v4592
      %v4665 = vadd.f32 %v4031, %v4595
      %v4666 = vadd.f32 %v4036, %v4600
      %v4667 = vadd.f32 %v4039, %v4603
      %v4668 = vadd.f32 %v4044, %v4608
      %v4669 = vadd.f32 %v4047, %v4611
      %v4670 = vadd.f32 %v4052, %v4616
      %v4671 = vadd.f32 %v4055, %v4619
      %v4672 = vadd.f32 %v4060, %v4624
      %v4673 = vadd.f32 %v4063, %v4627
      %v4674 = vadd.f32 %v4068, %v4632
      %v4675 = vadd.f32 %v4071, %v4635
      %v4676 = vadd.f32 %v4076, %v4640
      %v4677 = vadd.f32 %v4079, %v4643
      %v4678 = vld [vmem:[%s4] sm:$0x1]
      %v4680 = vlaneseq
      %v4681 = vshrl.u32 %v4680, 7
      %v4682 = vsub.s32 0, %v4681
      %v4683 = vrot.slane %v4678, %v4682
      %v4685 = vadd.f32 %v4646, %v4683
      %v4686 = vadd.f32 %v4647, %v4683
      %v4687 = vadd.f32 %v4648, %v4683
      %v4688 = vadd.f32 %v4649, %v4683
      %v4689 = vadd.f32 %v4650, %v4683
      %v4690 = vadd.f32 %v4651, %v4683
      %v4691 = vadd.f32 %v4652, %v4683
      %v4692 = vadd.f32 %v4653, %v4683
      %v4693 = vadd.f32 %v4654, %v4683
      %v4694 = vadd.f32 %v4655, %v4683
      %v4695 = vadd.f32 %v4656, %v4683
      %v4696 = vadd.f32 %v4657, %v4683
      %v4697 = vadd.f32 %v4658, %v4683
      %v4698 = vadd.f32 %v4659, %v4683
      %v4699 = vadd.f32 %v4660, %v4683
      %v4700 = vadd.f32 %v4661, %v4683
      %v4701 = vadd.f32 %v4662, %v4683
      %v4702 = vadd.f32 %v4663, %v4683
      %v4703 = vadd.f32 %v4664, %v4683
      %v4704 = vadd.f32 %v4665, %v4683
      %v4705 = vadd.f32 %v4666, %v4683
      %v4706 = vadd.f32 %v4667, %v4683
      %v4707 = vadd.f32 %v4668, %v4683
      %v4708 = vadd.f32 %v4669, %v4683
      %v4709 = vadd.f32 %v4670, %v4683
      %v4710 = vadd.f32 %v4671, %v4683
      %v4711 = vadd.f32 %v4672, %v4683
      %v4712 = vadd.f32 %v4673, %v4683
      %v4713 = vadd.f32 %v4674, %v4683
      %v4714 = vadd.f32 %v4675, %v4683
      %v4715 = vadd.f32 %v4676, %v4683
      %v4716 = vadd.f32 %v4677, %v4683
      %v4717 = vmax.f32 %v4685, 0.0
      %v4718 = vmax.f32 %v4686, 0.0
      %v4719 = vmax.f32 %v4687, 0.0
      %v4720 = vmax.f32 %v4688, 0.0
      %v4721 = vmax.f32 %v4689, 0.0
      %v4722 = vmax.f32 %v4690, 0.0
      %v4723 = vmax.f32 %v4691, 0.0
      %v4724 = vmax.f32 %v4692, 0.0
      %v4725 = vmax.f32 %v4693, 0.0
      %v4726 = vmax.f32 %v4694, 0.0
      %v4727 = vmax.f32 %v4695, 0.0
      %v4728 = vmax.f32 %v4696, 0.0
      %v4729 = vmax.f32 %v4697, 0.0
      %v4730 = vmax.f32 %v4698, 0.0
      %v4731 = vmax.f32 %v4699, 0.0
      %v4732 = vmax.f32 %v4700, 0.0
      %v4733 = vmax.f32 %v4701, 0.0
      %v4734 = vmax.f32 %v4702, 0.0
      %v4735 = vmax.f32 %v4703, 0.0
      %v4736 = vmax.f32 %v4704, 0.0
      %v4737 = vmax.f32 %v4705, 0.0
      %v4738 = vmax.f32 %v4706, 0.0
      %v4739 = vmax.f32 %v4707, 0.0
      %v4740 = vmax.f32 %v4708, 0.0
      %v4741 = vmax.f32 %v4709, 0.0
      %v4742 = vmax.f32 %v4710, 0.0
      %v4743 = vmax.f32 %v4711, 0.0
      %v4744 = vmax.f32 %v4712, 0.0
      %v4745 = vmax.f32 %v4713, 0.0
      %v4746 = vmax.f32 %v4714, 0.0
      %v4747 = vmax.f32 %v4715, 0.0
      %v4748 = vmax.f32 %v4716, 0.0
      %v4749 = vmax.f32 %v4717, %v4719
      %v4750 = vmax.f32 %v4718, %v4720
      %v4751 = vmax.f32 %v4721, %v4723
      %v4752 = vmax.f32 %v4722, %v4724
      %v4753 = vmax.f32 %v4725, %v4727
      %v4754 = vmax.f32 %v4726, %v4728
      %v4755 = vmax.f32 %v4729, %v4731
      %v4756 = vmax.f32 %v4730, %v4732
      %v4757 = vmax.f32 %v4733, %v4735
      %v4758 = vmax.f32 %v4734, %v4736
      %v4759 = vmax.f32 %v4737, %v4739
      %v4760 = vmax.f32 %v4738, %v4740
      %v4761 = vmax.f32 %v4741, %v4743
      %v4762 = vmax.f32 %v4742, %v4744
      %v4763 = vmax.f32 %v4745, %v4747
      %v4764 = vmax.f32 %v4746, %v4748
      %v4781 = vcombine.high %v4749, %v4749
      %v4783 = vunpack.c.l.s4 1983009808
      %v4784 = vunpack.c.0.s8 %v4783
      %v4785 = vlaneseq
      %v4786 = vshrl.u32 %v4785, 7
      %v4787 = vsub.s32 %v4784, %v4786
      %v4788 = vrot.slane %v4749, %v4787
      %v4790 = vunpack.c.l.s4 1983009808
      %v4791 = vunpack.c.0.s8 %v4790
      %v4792 = vlaneseq
      %v4793 = vshrl.u32 %v4792, 7
      %v4794 = vsub.s32 %v4791, %v4793
      %v4795 = vrot.slane %v4781, %v4794
      %v4796 = vcombine.high %v4788, %v4788
      %v4797 = vcombine.high %v4795, %v4795
      %v4798 = vcombine.high %v4750, %v4750
      %v4800 = vunpack.c.l.s4 1983009808
      %v4801 = vunpack.c.0.s8 %v4800
      %v4802 = vlaneseq
      %v4803 = vshrl.u32 %v4802, 7
      %v4804 = vsub.s32 %v4801, %v4803
      %v4805 = vrot.slane %v4750, %v4804
      %v4807 = vunpack.c.l.s4 1983009808
      %v4808 = vunpack.c.0.s8 %v4807
      %v4809 = vlaneseq
      %v4810 = vshrl.u32 %v4809, 7
      %v4811 = vsub.s32 %v4808, %v4810
      %v4812 = vrot.slane %v4798, %v4811
      %v4813 = vcombine.high %v4805, %v4805
      %v4814 = vcombine.high %v4812, %v4812
      %v4815 = vcombine.high %v4751, %v4751
      %v4817 = vunpack.c.l.s4 1983009808
      %v4818 = vunpack.c.0.s8 %v4817
      %v4819 = vlaneseq
      %v4820 = vshrl.u32 %v4819, 7
      %v4821 = vsub.s32 %v4818, %v4820
      %v4822 = vrot.slane %v4751, %v4821
      %v4824 = vunpack.c.l.s4 1983009808
      %v4825 = vunpack.c.0.s8 %v4824
      %v4826 = vlaneseq
      %v4827 = vshrl.u32 %v4826, 7
      %v4828 = vsub.s32 %v4825, %v4827
      %v4829 = vrot.slane %v4815, %v4828
      %v4830 = vcombine.high %v4822, %v4822
      %v4831 = vcombine.high %v4829, %v4829
      %v4832 = vcombine.high %v4752, %v4752
      %v4834 = vunpack.c.l.s4 1983009808
      %v4835 = vunpack.c.0.s8 %v4834
      %v4836 = vlaneseq
      %v4837 = vshrl.u32 %v4836, 7
      %v4838 = vsub.s32 %v4835, %v4837
      %v4839 = vrot.slane %v4752, %v4838
      %v4841 = vunpack.c.l.s4 1983009808
      %v4842 = vunpack.c.0.s8 %v4841
      %v4843 = vlaneseq
      %v4844 = vshrl.u32 %v4843, 7
      %v4845 = vsub.s32 %v4842, %v4844
      %v4846 = vrot.slane %v4832, %v4845
      %v4847 = vcombine.high %v4839, %v4839
      %v4848 = vcombine.high %v4846, %v4846
      %v4849 = vcombine.high %v4753, %v4753
      %v4851 = vunpack.c.l.s4 1983009808
      %v4852 = vunpack.c.0.s8 %v4851
      %v4853 = vlaneseq
      %v4854 = vshrl.u32 %v4853, 7
      %v4855 = vsub.s32 %v4852, %v4854
      %v4856 = vrot.slane %v4753, %v4855
      %v4858 = vunpack.c.l.s4 1983009808
      %v4859 = vunpack.c.0.s8 %v4858
      %v4860 = vlaneseq
      %v4861 = vshrl.u32 %v4860, 7
      %v4862 = vsub.s32 %v4859, %v4861
      %v4863 = vrot.slane %v4849, %v4862
      %v4864 = vcombine.high %v4856, %v4856
      %v4865 = vcombine.high %v4863, %v4863
      %v4866 = vcombine.high %v4754, %v4754
      %v4868 = vunpack.c.l.s4 1983009808
      %v4869 = vunpack.c.0.s8 %v4868
      %v4870 = vlaneseq
      %v4871 = vshrl.u32 %v4870, 7
      %v4872 = vsub.s32 %v4869, %v4871
      %v4873 = vrot.slane %v4754, %v4872
      %v4875 = vunpack.c.l.s4 1983009808
      %v4876 = vunpack.c.0.s8 %v4875
      %v4877 = vlaneseq
      %v4878 = vshrl.u32 %v4877, 7
      %v4879 = vsub.s32 %v4876, %v4878
      %v4880 = vrot.slane %v4866, %v4879
      %v4881 = vcombine.high %v4873, %v4873
      %v4882 = vcombine.high %v4880, %v4880
      %v4883 = vcombine.high %v4755, %v4755
      %v4885 = vunpack.c.l.s4 1983009808
      %v4886 = vunpack.c.0.s8 %v4885
      %v4887 = vlaneseq
      %v4888 = vshrl.u32 %v4887, 7
      %v4889 = vsub.s32 %v4886, %v4888
      %v4890 = vrot.slane %v4755, %v4889
      %v4892 = vunpack.c.l.s4 1983009808
      %v4893 = vunpack.c.0.s8 %v4892
      %v4894 = vlaneseq
      %v4895 = vshrl.u32 %v4894, 7
      %v4896 = vsub.s32 %v4893, %v4895
      %v4897 = vrot.slane %v4883, %v4896
      %v4898 = vcombine.high %v4890, %v4890
      %v4899 = vcombine.high %v4897, %v4897
      %v4900 = vcombine.high %v4756, %v4756
      %v4902 = vunpack.c.l.s4 1983009808
      %v4903 = vunpack.c.0.s8 %v4902
      %v4904 = vlaneseq
      %v4905 = vshrl.u32 %v4904, 7
      %v4906 = vsub.s32 %v4903, %v4905
      %v4907 = vrot.slane %v4756, %v4906
      %v4909 = vunpack.c.l.s4 1983009808
      %v4910 = vunpack.c.0.s8 %v4909
      %v4911 = vlaneseq
      %v4912 = vshrl.u32 %v4911, 7
      %v4913 = vsub.s32 %v4910, %v4912
      %v4914 = vrot.slane %v4900, %v4913
      %v4915 = vcombine.high %v4907, %v4907
      %v4916 = vcombine.high %v4914, %v4914
      %v4917 = vcombine.high %v4757, %v4757
      %v4919 = vunpack.c.l.s4 1983009808
      %v4920 = vunpack.c.0.s8 %v4919
      %v4921 = vlaneseq
      %v4922 = vshrl.u32 %v4921, 7
      %v4923 = vsub.s32 %v4920, %v4922
      %v4924 = vrot.slane %v4757, %v4923
      %v4926 = vunpack.c.l.s4 1983009808
      %v4927 = vunpack.c.0.s8 %v4926
      %v4928 = vlaneseq
      %v4929 = vshrl.u32 %v4928, 7
      %v4930 = vsub.s32 %v4927, %v4929
      %v4931 = vrot.slane %v4917, %v4930
      %v4932 = vcombine.high %v4924, %v4924
      %v4933 = vcombine.high %v4931, %v4931
      %v4934 = vcombine.high %v4758, %v4758
      %v4936 = vunpack.c.l.s4 1983009808
      %v4937 = vunpack.c.0.s8 %v4936
      %v4938 = vlaneseq
      %v4939 = vshrl.u32 %v4938, 7
      %v4940 = vsub.s32 %v4937, %v4939
      %v4941 = vrot.slane %v4758, %v4940
      %v4943 = vunpack.c.l.s4 1983009808
      %v4944 = vunpack.c.0.s8 %v4943
      %v4945 = vlaneseq
      %v4946 = vshrl.u32 %v4945, 7
      %v4947 = vsub.s32 %v4944, %v4946
      %v4948 = vrot.slane %v4934, %v4947
      %v4949 = vcombine.high %v4941, %v4941
      %v4950 = vcombine.high %v4948, %v4948
      %v4951 = vcombine.high %v4759, %v4759
      %v4953 = vunpack.c.l.s4 1983009808
      %v4954 = vunpack.c.0.s8 %v4953
      %v4955 = vlaneseq
      %v4956 = vshrl.u32 %v4955, 7
      %v4957 = vsub.s32 %v4954, %v4956
      %v4958 = vrot.slane %v4759, %v4957
      %v4960 = vunpack.c.l.s4 1983009808
      %v4961 = vunpack.c.0.s8 %v4960
      %v4962 = vlaneseq
      %v4963 = vshrl.u32 %v4962, 7
      %v4964 = vsub.s32 %v4961, %v4963
      %v4965 = vrot.slane %v4951, %v4964
      %v4966 = vcombine.high %v4958, %v4958
      %v4967 = vcombine.high %v4965, %v4965
      %v4968 = vcombine.high %v4760, %v4760
      %v4970 = vunpack.c.l.s4 1983009808
      %v4971 = vunpack.c.0.s8 %v4970
      %v4972 = vlaneseq
      %v4973 = vshrl.u32 %v4972, 7
      %v4974 = vsub.s32 %v4971, %v4973
      %v4975 = vrot.slane %v4760, %v4974
      %v4977 = vunpack.c.l.s4 1983009808
      %v4978 = vunpack.c.0.s8 %v4977
      %v4979 = vlaneseq
      %v4980 = vshrl.u32 %v4979, 7
      %v4981 = vsub.s32 %v4978, %v4980
      %v4982 = vrot.slane %v4968, %v4981
      %v4983 = vcombine.high %v4975, %v4975
      %v4984 = vcombine.high %v4982, %v4982
      %v4985 = vcombine.high %v4761, %v4761
      %v4987 = vunpack.c.l.s4 1983009808
      %v4988 = vunpack.c.0.s8 %v4987
      %v4989 = vlaneseq
      %v4990 = vshrl.u32 %v4989, 7
      %v4991 = vsub.s32 %v4988, %v4990
      %v4992 = vrot.slane %v4761, %v4991
      %v4994 = vunpack.c.l.s4 1983009808
      %v4995 = vunpack.c.0.s8 %v4994
      %v4996 = vlaneseq
      %v4997 = vshrl.u32 %v4996, 7
      %v4998 = vsub.s32 %v4995, %v4997
      %v4999 = vrot.slane %v4985, %v4998
      %v5000 = vcombine.high %v4992, %v4992
      %v5001 = vcombine.high %v4999, %v4999
      %v5002 = vcombine.high %v4762, %v4762
      %v5004 = vunpack.c.l.s4 1983009808
      %v5005 = vunpack.c.0.s8 %v5004
      %v5006 = vlaneseq
      %v5007 = vshrl.u32 %v5006, 7
      %v5008 = vsub.s32 %v5005, %v5007
      %v5009 = vrot.slane %v4762, %v5008
      %v5011 = vunpack.c.l.s4 1983009808
      %v5012 = vunpack.c.0.s8 %v5011
      %v5013 = vlaneseq
      %v5014 = vshrl.u32 %v5013, 7
      %v5015 = vsub.s32 %v5012, %v5014
      %v5016 = vrot.slane %v5002, %v5015
      %v5017 = vcombine.high %v5009, %v5009
      %v5018 = vcombine.high %v5016, %v5016
      %v5019 = vcombine.high %v4763, %v4763
      %v5021 = vunpack.c.l.s4 1983009808
      %v5022 = vunpack.c.0.s8 %v5021
      %v5023 = vlaneseq
      %v5024 = vshrl.u32 %v5023, 7
      %v5025 = vsub.s32 %v5022, %v5024
      %v5026 = vrot.slane %v4763, %v5025
      %v5028 = vunpack.c.l.s4 1983009808
      %v5029 = vunpack.c.0.s8 %v5028
      %v5030 = vlaneseq
      %v5031 = vshrl.u32 %v5030, 7
      %v5032 = vsub.s32 %v5029, %v5031
      %v5033 = vrot.slane %v5019, %v5032
      %v5034 = vcombine.high %v5026, %v5026
      %v5035 = vcombine.high %v5033, %v5033
      %v5036 = vcombine.high %v4764, %v4764
      %v5038 = vunpack.c.l.s4 1983009808
      %v5039 = vunpack.c.0.s8 %v5038
      %v5040 = vlaneseq
      %v5041 = vshrl.u32 %v5040, 7
      %v5042 = vsub.s32 %v5039, %v5041
      %v5043 = vrot.slane %v4764, %v5042
      %v5045 = vunpack.c.l.s4 1983009808
      %v5046 = vunpack.c.0.s8 %v5045
      %v5047 = vlaneseq
      %v5048 = vshrl.u32 %v5047, 7
      %v5049 = vsub.s32 %v5046, %v5048
      %v5050 = vrot.slane %v5036, %v5049
      %v5051 = vcombine.high %v5043, %v5043
      %v5052 = vcombine.high %v5050, %v5050
      %v5117 = vrot.slane %v4788, 7
      %v5118 = vrot.slane %v5117, 2
      %v5119 = vrot.slane %v4796, 7
      %v5120 = vrot.slane %v5119, 2
      %v5121 = vrot.slane %v4795, 7
      %v5122 = vrot.slane %v5121, 2
      %v5123 = vrot.slane %v4797, 7
      %v5124 = vrot.slane %v5123, 2
      %v5125 = vrot.slane %v4805, 7
      %v5126 = vrot.slane %v5125, 2
      %v5127 = vrot.slane %v4813, 7
      %v5128 = vrot.slane %v5127, 2
      %v5129 = vrot.slane %v4812, 7
      %v5130 = vrot.slane %v5129, 2
      %v5131 = vrot.slane %v4814, 7
      %v5132 = vrot.slane %v5131, 2
      %v5133 = vrot.slane %v4822, 7
      %v5134 = vrot.slane %v5133, 2
      %v5135 = vrot.slane %v4830, 7
      %v5136 = vrot.slane %v5135, 2
      %v5137 = vrot.slane %v4829, 7
      %v5138 = vrot.slane %v5137, 2
      %v5139 = vrot.slane %v4831, 7
      %v5140 = vrot.slane %v5139, 2
      %v5141 = vrot.slane %v4839, 7
      %v5142 = vrot.slane %v5141, 2
      %v5143 = vrot.slane %v4847, 7
      %v5144 = vrot.slane %v5143, 2
      %v5145 = vrot.slane %v4846, 7
      %v5146 = vrot.slane %v5145, 2
      %v5147 = vrot.slane %v4848, 7
      %v5148 = vrot.slane %v5147, 2
      %v5149 = vrot.slane %v4856, 7
      %v5150 = vrot.slane %v5149, 2
      %v5151 = vrot.slane %v4864, 7
      %v5152 = vrot.slane %v5151, 2
      %v5153 = vrot.slane %v4863, 7
      %v5154 = vrot.slane %v5153, 2
      %v5155 = vrot.slane %v4865, 7
      %v5156 = vrot.slane %v5155, 2
      %v5157 = vrot.slane %v4873, 7
      %v5158 = vrot.slane %v5157, 2
      %v5159 = vrot.slane %v4881, 7
      %v5160 = vrot.slane %v5159, 2
      %v5161 = vrot.slane %v4880, 7
      %v5162 = vrot.slane %v5161, 2
      %v5163 = vrot.slane %v4882, 7
      %v5164 = vrot.slane %v5163, 2
      %v5165 = vrot.slane %v4890, 7
      %v5166 = vrot.slane %v5165, 2
      %v5167 = vrot.slane %v4898, 7
      %v5168 = vrot.slane %v5167, 2
      %v5169 = vrot.slane %v4897, 7
      %v5170 = vrot.slane %v5169, 2
      %v5171 = vrot.slane %v4899, 7
      %v5172 = vrot.slane %v5171, 2
      %v5173 = vrot.slane %v4907, 7
      %v5174 = vrot.slane %v5173, 2
      %v5175 = vrot.slane %v4915, 7
      %v5176 = vrot.slane %v5175, 2
      %v5177 = vrot.slane %v4914, 7
      %v5178 = vrot.slane %v5177, 2
      %v5179 = vrot.slane %v4916, 7
      %v5180 = vrot.slane %v5179, 2
      %v5181 = vrot.slane %v4924, 7
      %v5182 = vrot.slane %v5181, 2
      %v5183 = vrot.slane %v4932, 7
      %v5184 = vrot.slane %v5183, 2
      %v5185 = vrot.slane %v4931, 7
      %v5186 = vrot.slane %v5185, 2
      %v5187 = vrot.slane %v4933, 7
      %v5188 = vrot.slane %v5187, 2
      %v5189 = vrot.slane %v4941, 7
      %v5190 = vrot.slane %v5189, 2
      %v5191 = vrot.slane %v4949, 7
      %v5192 = vrot.slane %v5191, 2
      %v5193 = vrot.slane %v4948, 7
      %v5194 = vrot.slane %v5193, 2
      %v5195 = vrot.slane %v4950, 7
      %v5196 = vrot.slane %v5195, 2
      %v5197 = vrot.slane %v4958, 7
      %v5198 = vrot.slane %v5197, 2
      %v5199 = vrot.slane %v4966, 7
      %v5200 = vrot.slane %v5199, 2
      %v5201 = vrot.slane %v4965, 7
      %v5202 = vrot.slane %v5201, 2
      %v5203 = vrot.slane %v4967, 7
      %v5204 = vrot.slane %v5203, 2
      %v5205 = vrot.slane %v4975, 7
      %v5206 = vrot.slane %v5205, 2
      %v5207 = vrot.slane %v4983, 7
      %v5208 = vrot.slane %v5207, 2
      %v5209 = vrot.slane %v4982, 7
      %v5210 = vrot.slane %v5209, 2
      %v5211 = vrot.slane %v4984, 7
      %v5212 = vrot.slane %v5211, 2
      %v5213 = vrot.slane %v4992, 7
      %v5214 = vrot.slane %v5213, 2
      %v5215 = vrot.slane %v5000, 7
      %v5216 = vrot.slane %v5215, 2
      %v5217 = vrot.slane %v4999, 7
      %v5218 = vrot.slane %v5217, 2
      %v5219 = vrot.slane %v5001, 7
      %v5220 = vrot.slane %v5219, 2
      %v5221 = vrot.slane %v5009, 7
      %v5222 = vrot.slane %v5221, 2
      %v5223 = vrot.slane %v5017, 7
      %v5224 = vrot.slane %v5223, 2
      %v5225 = vrot.slane %v5016, 7
      %v5226 = vrot.slane %v5225, 2
      %v5227 = vrot.slane %v5018, 7
      %v5228 = vrot.slane %v5227, 2
      %v5229 = vrot.slane %v5026, 7
      %v5230 = vrot.slane %v5229, 2
      %v5231 = vrot.slane %v5034, 7
      %v5232 = vrot.slane %v5231, 2
      %v5233 = vrot.slane %v5033, 7
      %v5234 = vrot.slane %v5233, 2
      %v5235 = vrot.slane %v5035, 7
      %v5236 = vrot.slane %v5235, 2
      %v5237 = vrot.slane %v5043, 7
      %v5238 = vrot.slane %v5237, 2
      %v5239 = vrot.slane %v5051, 7
      %v5240 = vrot.slane %v5239, 2
      %v5241 = vrot.slane %v5050, 7
      %v5242 = vrot.slane %v5241, 2
      %v5243 = vrot.slane %v5052, 7
      %v5244 = vrot.slane %v5243, 2
      %v5309 = vmax.f32 %v4788, %v5118
      %v5310 = vmax.f32 %v4796, %v5120
      %v5311 = vmax.f32 %v4795, %v5122
      %v5312 = vmax.f32 %v4797, %v5124
      %v5313 = vmax.f32 %v4805, %v5126
      %v5314 = vmax.f32 %v4813, %v5128
      %v5315 = vmax.f32 %v4812, %v5130
      %v5316 = vmax.f32 %v4814, %v5132
      %v5317 = vmax.f32 %v4822, %v5134
      %v5318 = vmax.f32 %v4830, %v5136
      %v5319 = vmax.f32 %v4829, %v5138
      %v5320 = vmax.f32 %v4831, %v5140
      %v5321 = vmax.f32 %v4839, %v5142
      %v5322 = vmax.f32 %v4847, %v5144
      %v5323 = vmax.f32 %v4846, %v5146
      %v5324 = vmax.f32 %v4848, %v5148
      %v5325 = vmax.f32 %v4856, %v5150
      %v5326 = vmax.f32 %v4864, %v5152
      %v5327 = vmax.f32 %v4863, %v5154
      %v5328 = vmax.f32 %v4865, %v5156
      %v5329 = vmax.f32 %v4873, %v5158
      %v5330 = vmax.f32 %v4881, %v5160
      %v5331 = vmax.f32 %v4880, %v5162
      %v5332 = vmax.f32 %v4882, %v5164
      %v5333 = vmax.f32 %v4890, %v5166
      %v5334 = vmax.f32 %v4898, %v5168
      %v5335 = vmax.f32 %v4897, %v5170
      %v5336 = vmax.f32 %v4899, %v5172
      %v5337 = vmax.f32 %v4907, %v5174
      %v5338 = vmax.f32 %v4915, %v5176
      %v5339 = vmax.f32 %v4914, %v5178
      %v5340 = vmax.f32 %v4916, %v5180
      %v5341 = vmax.f32 %v4924, %v5182
      %v5342 = vmax.f32 %v4932, %v5184
      %v5343 = vmax.f32 %v4931, %v5186
      %v5344 = vmax.f32 %v4933, %v5188
      %v5345 = vmax.f32 %v4941, %v5190
      %v5346 = vmax.f32 %v4949, %v5192
      %v5347 = vmax.f32 %v4948, %v5194
      %v5348 = vmax.f32 %v4950, %v5196
      %v5349 = vmax.f32 %v4958, %v5198
      %v5350 = vmax.f32 %v4966, %v5200
      %v5351 = vmax.f32 %v4965, %v5202
      %v5352 = vmax.f32 %v4967, %v5204
      %v5353 = vmax.f32 %v4975, %v5206
      %v5354 = vmax.f32 %v4983, %v5208
      %v5355 = vmax.f32 %v4982, %v5210
      %v5356 = vmax.f32 %v4984, %v5212
      %v5357 = vmax.f32 %v4992, %v5214
      %v5358 = vmax.f32 %v5000, %v5216
      %v5359 = vmax.f32 %v4999, %v5218
      %v5360 = vmax.f32 %v5001, %v5220
      %v5361 = vmax.f32 %v5009, %v5222
      %v5362 = vmax.f32 %v5017, %v5224
      %v5363 = vmax.f32 %v5016, %v5226
      %v5364 = vmax.f32 %v5018, %v5228
      %v5365 = vmax.f32 %v5026, %v5230
      %v5366 = vmax.f32 %v5034, %v5232
      %v5367 = vmax.f32 %v5033, %v5234
      %v5368 = vmax.f32 %v5035, %v5236
      %v5369 = vmax.f32 %v5043, %v5238
      %v5370 = vmax.f32 %v5051, %v5240
      %v5371 = vmax.f32 %v5050, %v5242
      %v5372 = vmax.f32 %v5052, %v5244
      %v5437 = vlaneseq
      %v5438 = vshrl.u32 %v5437, 7
      %v5439 = vsub.s32 0, %v5438
      %v5440 = vrot.slane %v5309, %v5439
      %v5441 = vlaneseq
      %v5442 = vshrl.u32 %v5441, 7
      %v5443 = vsub.s32 0, %v5442
      %v5444 = vrot.slane %v5310, %v5443
      %v5445 = vlaneseq
      %v5446 = vshrl.u32 %v5445, 7
      %v5447 = vsub.s32 0, %v5446
      %v5448 = vrot.slane %v5311, %v5447
      %v5449 = vlaneseq
      %v5450 = vshrl.u32 %v5449, 7
      %v5451 = vsub.s32 0, %v5450
      %v5452 = vrot.slane %v5312, %v5451
      %v5453 = vlaneseq
      %v5454 = vshrl.u32 %v5453, 7
      %v5455 = vsub.s32 0, %v5454
      %v5456 = vrot.slane %v5313, %v5455
      %v5457 = vlaneseq
      %v5458 = vshrl.u32 %v5457, 7
      %v5459 = vsub.s32 0, %v5458
      %v5460 = vrot.slane %v5314, %v5459
      %v5461 = vlaneseq
      %v5462 = vshrl.u32 %v5461, 7
      %v5463 = vsub.s32 0, %v5462
      %v5464 = vrot.slane %v5315, %v5463
      %v5465 = vlaneseq
      %v5466 = vshrl.u32 %v5465, 7
      %v5467 = vsub.s32 0, %v5466
      %v5468 = vrot.slane %v5316, %v5467
      %v5469 = vlaneseq
      %v5470 = vshrl.u32 %v5469, 7
      %v5471 = vsub.s32 0, %v5470
      %v5472 = vrot.slane %v5317, %v5471
      %v5473 = vlaneseq
      %v5474 = vshrl.u32 %v5473, 7
      %v5475 = vsub.s32 0, %v5474
      %v5476 = vrot.slane %v5318, %v5475
      %v5477 = vlaneseq
      %v5478 = vshrl.u32 %v5477, 7
      %v5479 = vsub.s32 0, %v5478
      %v5480 = vrot.slane %v5319, %v5479
      %v5481 = vlaneseq
      %v5482 = vshrl.u32 %v5481, 7
      %v5483 = vsub.s32 0, %v5482
      %v5484 = vrot.slane %v5320, %v5483
      %v5485 = vlaneseq
      %v5486 = vshrl.u32 %v5485, 7
      %v5487 = vsub.s32 0, %v5486
      %v5488 = vrot.slane %v5321, %v5487
      %v5489 = vlaneseq
      %v5490 = vshrl.u32 %v5489, 7
      %v5491 = vsub.s32 0, %v5490
      %v5492 = vrot.slane %v5322, %v5491
      %v5493 = vlaneseq
      %v5494 = vshrl.u32 %v5493, 7
      %v5495 = vsub.s32 0, %v5494
      %v5496 = vrot.slane %v5323, %v5495
      %v5497 = vlaneseq
      %v5498 = vshrl.u32 %v5497, 7
      %v5499 = vsub.s32 0, %v5498
      %v5500 = vrot.slane %v5324, %v5499
      %v5501 = vlaneseq
      %v5502 = vshrl.u32 %v5501, 7
      %v5503 = vsub.s32 0, %v5502
      %v5504 = vrot.slane %v5325, %v5503
      %v5505 = vlaneseq
      %v5506 = vshrl.u32 %v5505, 7
      %v5507 = vsub.s32 0, %v5506
      %v5508 = vrot.slane %v5326, %v5507
      %v5509 = vlaneseq
      %v5510 = vshrl.u32 %v5509, 7
      %v5511 = vsub.s32 0, %v5510
      %v5512 = vrot.slane %v5327, %v5511
      %v5513 = vlaneseq
      %v5514 = vshrl.u32 %v5513, 7
      %v5515 = vsub.s32 0, %v5514
      %v5516 = vrot.slane %v5328, %v5515
      %v5517 = vlaneseq
      %v5518 = vshrl.u32 %v5517, 7
      %v5519 = vsub.s32 0, %v5518
      %v5520 = vrot.slane %v5329, %v5519
      %v5521 = vlaneseq
      %v5522 = vshrl.u32 %v5521, 7
      %v5523 = vsub.s32 0, %v5522
      %v5524 = vrot.slane %v5330, %v5523
      %v5525 = vlaneseq
      %v5526 = vshrl.u32 %v5525, 7
      %v5527 = vsub.s32 0, %v5526
      %v5528 = vrot.slane %v5331, %v5527
      %v5529 = vlaneseq
      %v5530 = vshrl.u32 %v5529, 7
      %v5531 = vsub.s32 0, %v5530
      %v5532 = vrot.slane %v5332, %v5531
      %v5533 = vlaneseq
      %v5534 = vshrl.u32 %v5533, 7
      %v5535 = vsub.s32 0, %v5534
      %v5536 = vrot.slane %v5333, %v5535
      %v5537 = vlaneseq
      %v5538 = vshrl.u32 %v5537, 7
      %v5539 = vsub.s32 0, %v5538
      %v5540 = vrot.slane %v5334, %v5539
      %v5541 = vlaneseq
      %v5542 = vshrl.u32 %v5541, 7
      %v5543 = vsub.s32 0, %v5542
      %v5544 = vrot.slane %v5335, %v5543
      %v5545 = vlaneseq
      %v5546 = vshrl.u32 %v5545, 7
      %v5547 = vsub.s32 0, %v5546
      %v5548 = vrot.slane %v5336, %v5547
      %v5549 = vlaneseq
      %v5550 = vshrl.u32 %v5549, 7
      %v5551 = vsub.s32 0, %v5550
      %v5552 = vrot.slane %v5337, %v5551
      %v5553 = vlaneseq
      %v5554 = vshrl.u32 %v5553, 7
      %v5555 = vsub.s32 0, %v5554
      %v5556 = vrot.slane %v5338, %v5555
      %v5557 = vlaneseq
      %v5558 = vshrl.u32 %v5557, 7
      %v5559 = vsub.s32 0, %v5558
      %v5560 = vrot.slane %v5339, %v5559
      %v5561 = vlaneseq
      %v5562 = vshrl.u32 %v5561, 7
      %v5563 = vsub.s32 0, %v5562
      %v5564 = vrot.slane %v5340, %v5563
      %v5565 = vlaneseq
      %v5566 = vshrl.u32 %v5565, 7
      %v5567 = vsub.s32 0, %v5566
      %v5568 = vrot.slane %v5341, %v5567
      %v5569 = vlaneseq
      %v5570 = vshrl.u32 %v5569, 7
      %v5571 = vsub.s32 0, %v5570
      %v5572 = vrot.slane %v5342, %v5571
      %v5573 = vlaneseq
      %v5574 = vshrl.u32 %v5573, 7
      %v5575 = vsub.s32 0, %v5574
      %v5576 = vrot.slane %v5343, %v5575
      %v5577 = vlaneseq
      %v5578 = vshrl.u32 %v5577, 7
      %v5579 = vsub.s32 0, %v5578
      %v5580 = vrot.slane %v5344, %v5579
      %v5581 = vlaneseq
      %v5582 = vshrl.u32 %v5581, 7
      %v5583 = vsub.s32 0, %v5582
      %v5584 = vrot.slane %v5345, %v5583
      %v5585 = vlaneseq
      %v5586 = vshrl.u32 %v5585, 7
      %v5587 = vsub.s32 0, %v5586
      %v5588 = vrot.slane %v5346, %v5587
      %v5589 = vlaneseq
      %v5590 = vshrl.u32 %v5589, 7
      %v5591 = vsub.s32 0, %v5590
      %v5592 = vrot.slane %v5347, %v5591
      %v5593 = vlaneseq
      %v5594 = vshrl.u32 %v5593, 7
      %v5595 = vsub.s32 0, %v5594
      %v5596 = vrot.slane %v5348, %v5595
      %v5597 = vlaneseq
      %v5598 = vshrl.u32 %v5597, 7
      %v5599 = vsub.s32 0, %v5598
      %v5600 = vrot.slane %v5349, %v5599
      %v5601 = vlaneseq
      %v5602 = vshrl.u32 %v5601, 7
      %v5603 = vsub.s32 0, %v5602
      %v5604 = vrot.slane %v5350, %v5603
      %v5605 = vlaneseq
      %v5606 = vshrl.u32 %v5605, 7
      %v5607 = vsub.s32 0, %v5606
      %v5608 = vrot.slane %v5351, %v5607
      %v5609 = vlaneseq
      %v5610 = vshrl.u32 %v5609, 7
      %v5611 = vsub.s32 0, %v5610
      %v5612 = vrot.slane %v5352, %v5611
      %v5613 = vlaneseq
      %v5614 = vshrl.u32 %v5613, 7
      %v5615 = vsub.s32 0, %v5614
      %v5616 = vrot.slane %v5353, %v5615
      %v5617 = vlaneseq
      %v5618 = vshrl.u32 %v5617, 7
      %v5619 = vsub.s32 0, %v5618
      %v5620 = vrot.slane %v5354, %v5619
      %v5621 = vlaneseq
      %v5622 = vshrl.u32 %v5621, 7
      %v5623 = vsub.s32 0, %v5622
      %v5624 = vrot.slane %v5355, %v5623
      %v5625 = vlaneseq
      %v5626 = vshrl.u32 %v5625, 7
      %v5627 = vsub.s32 0, %v5626
      %v5628 = vrot.slane %v5356, %v5627
      %v5629 = vlaneseq
      %v5630 = vshrl.u32 %v5629, 7
      %v5631 = vsub.s32 0, %v5630
      %v5632 = vrot.slane %v5357, %v5631
      %v5633 = vlaneseq
      %v5634 = vshrl.u32 %v5633, 7
      %v5635 = vsub.s32 0, %v5634
      %v5636 = vrot.slane %v5358, %v5635
      %v5637 = vlaneseq
      %v5638 = vshrl.u32 %v5637, 7
      %v5639 = vsub.s32 0, %v5638
      %v5640 = vrot.slane %v5359, %v5639
      %v5641 = vlaneseq
      %v5642 = vshrl.u32 %v5641, 7
      %v5643 = vsub.s32 0, %v5642
      %v5644 = vrot.slane %v5360, %v5643
      %v5645 = vlaneseq
      %v5646 = vshrl.u32 %v5645, 7
      %v5647 = vsub.s32 0, %v5646
      %v5648 = vrot.slane %v5361, %v5647
      %v5649 = vlaneseq
      %v5650 = vshrl.u32 %v5649, 7
      %v5651 = vsub.s32 0, %v5650
      %v5652 = vrot.slane %v5362, %v5651
      %v5653 = vlaneseq
      %v5654 = vshrl.u32 %v5653, 7
      %v5655 = vsub.s32 0, %v5654
      %v5656 = vrot.slane %v5363, %v5655
      %v5657 = vlaneseq
      %v5658 = vshrl.u32 %v5657, 7
      %v5659 = vsub.s32 0, %v5658
      %v5660 = vrot.slane %v5364, %v5659
      %v5661 = vlaneseq
      %v5662 = vshrl.u32 %v5661, 7
      %v5663 = vsub.s32 0, %v5662
      %v5664 = vrot.slane %v5365, %v5663
      %v5665 = vlaneseq
      %v5666 = vshrl.u32 %v5665, 7
      %v5667 = vsub.s32 0, %v5666
      %v5668 = vrot.slane %v5366, %v5667
      %v5669 = vlaneseq
      %v5670 = vshrl.u32 %v5669, 7
      %v5671 = vsub.s32 0, %v5670
      %v5672 = vrot.slane %v5367, %v5671
      %v5673 = vlaneseq
      %v5674 = vshrl.u32 %v5673, 7
      %v5675 = vsub.s32 0, %v5674
      %v5676 = vrot.slane %v5368, %v5675
      %v5677 = vlaneseq
      %v5678 = vshrl.u32 %v5677, 7
      %v5679 = vsub.s32 0, %v5678
      %v5680 = vrot.slane %v5369, %v5679
      %v5681 = vlaneseq
      %v5682 = vshrl.u32 %v5681, 7
      %v5683 = vsub.s32 0, %v5682
      %v5684 = vrot.slane %v5370, %v5683
      %v5685 = vlaneseq
      %v5686 = vshrl.u32 %v5685, 7
      %v5687 = vsub.s32 0, %v5686
      %v5688 = vrot.slane %v5371, %v5687
      %v5689 = vlaneseq
      %v5690 = vshrl.u32 %v5689, 7
      %v5691 = vsub.s32 0, %v5690
      %v5692 = vrot.slane %v5372, %v5691
      %vm5693 = vcmask 1041409
      %v5694 = vsel %vm5693, %v5444, %v5440
      %vm5695 = vcmask 1042434
      %v5696 = vsel %vm5695, %v5448, %v5694
      %vm5697 = vcmask 1043459
      %v5698 = vsel %vm5697, %v5452, %v5696
      %vm5699 = vcmask 1044484
      %v5700 = vsel %vm5699, %v5456, %v5698
      %vm5701 = vcmask 1045509
      %v5702 = vsel %vm5701, %v5460, %v5700
      %vm5703 = vcmask 1046534
      %v5704 = vsel %vm5703, %v5464, %v5702
      %vm5705 = vcmask 1047559
      %v5706 = vsel %vm5705, %v5468, %v5704
      %v5707 = vsel %vm5693, %v5476, %v5472
      %v5708 = vsel %vm5695, %v5480, %v5707
      %v5709 = vsel %vm5697, %v5484, %v5708
      %v5710 = vsel %vm5699, %v5488, %v5709
      %v5711 = vsel %vm5701, %v5492, %v5710
      %v5712 = vsel %vm5703, %v5496, %v5711
      %v5713 = vsel %vm5705, %v5500, %v5712
      %v5714 = vsel %vm5693, %v5508, %v5504
      %v5715 = vsel %vm5695, %v5512, %v5714
      %v5716 = vsel %vm5697, %v5516, %v5715
      %v5717 = vsel %vm5699, %v5520, %v5716
      %v5718 = vsel %vm5701, %v5524, %v5717
      %v5719 = vsel %vm5703, %v5528, %v5718
      %v5720 = vsel %vm5705, %v5532, %v5719
      %v5721 = vsel %vm5693, %v5540, %v5536
      %v5722 = vsel %vm5695, %v5544, %v5721
      %v5723 = vsel %vm5697, %v5548, %v5722
      %v5724 = vsel %vm5699, %v5552, %v5723
      %v5725 = vsel %vm5701, %v5556, %v5724
      %v5726 = vsel %vm5703, %v5560, %v5725
      %v5727 = vsel %vm5705, %v5564, %v5726
      %v5728 = vsel %vm5693, %v5572, %v5568
      %v5729 = vsel %vm5695, %v5576, %v5728
      %v5730 = vsel %vm5697, %v5580, %v5729
      %v5731 = vsel %vm5699, %v5584, %v5730
      %v5732 = vsel %vm5701, %v5588, %v5731
      %v5733 = vsel %vm5703, %v5592, %v5732
      %v5734 = vsel %vm5705, %v5596, %v5733
      %v5735 = vsel %vm5693, %v5604, %v5600
      %v5736 = vsel %vm5695, %v5608, %v5735
      %v5737 = vsel %vm5697, %v5612, %v5736
      %v5738 = vsel %vm5699, %v5616, %v5737
      %v5739 = vsel %vm5701, %v5620, %v5738
      %v5740 = vsel %vm5703, %v5624, %v5739
      %v5741 = vsel %vm5705, %v5628, %v5740
      %v5742 = vsel %vm5693, %v5636, %v5632
      %v5743 = vsel %vm5695, %v5640, %v5742
      %v5744 = vsel %vm5697, %v5644, %v5743
      %v5745 = vsel %vm5699, %v5648, %v5744
      %v5746 = vsel %vm5701, %v5652, %v5745
      %v5747 = vsel %vm5703, %v5656, %v5746
      %v5748 = vsel %vm5705, %v5660, %v5747
      %v5749 = vsel %vm5693, %v5668, %v5664
      %v5750 = vsel %vm5695, %v5672, %v5749
      %v5751 = vsel %vm5697, %v5676, %v5750
      %v5752 = vsel %vm5699, %v5680, %v5751
      %v5753 = vsel %vm5701, %v5684, %v5752
      %v5754 = vsel %vm5703, %v5688, %v5753
      %v5755 = vsel %vm5705, %v5692, %v5754
      %5764 = vst [vmem:[%s224] sm:$0xff] %v5706
      %5765 = vst [vmem:[%s224 + $0x8] sm:$0xff] %v5713
      %5766 = vst [vmem:[%s224 + $0x10] sm:$0xff] %v5720
      %5767 = vst [vmem:[%s224 + $0x18] sm:$0xff] %v5727
      %5768 = vst [vmem:[%s224 + $0x20] sm:$0xff] %v5734
      %5769 = vst [vmem:[%s224 + $0x28] sm:$0xff] %v5741
      %5770 = vst [vmem:[%s224 + $0x30] sm:$0xff] %v5748
      %5771 = vst [vmem:[%s224 + $0x38] sm:$0xff] %v5755
      %p5772 = scmp.lt.s32.totalorder %s16, 1
      %s5773 = scalar_select %p5772, %s16, 1
      %s5774 = smul.addr %s5773, 8
      %s5775 = smul.addr %s5774, 8
      %s5776 = scalar_lea.vmem %s5, %s5775
      // Predicated region
      $region41: #{luna_block_forward.1} parent=39 // pred_check
        %p5777 = pneg %p144
      $region42: #{luna_block_forward.1} parent=39 // pred_check_branch
        %5779 = sbr.rel (%p5777) target = $region44
      $region43: #{luna_block_forward.1} parent=39 // pred_region
        _
      $region44: #{luna_block_forward.1} parent=39 // pred_fallthru
        _
    $region40: #{luna_block_forward.1} parent=5 // pred_fallthru
      _
    %p5780 = scmp.le.s32.totalorder 2, %s11
    // Predicated region
    $region45: #{luna_block_forward.1} parent=5 // pred_check
      %p5781 = pneg %p5780
    $region46: #{luna_block_forward.1} parent=5 // pred_check_branch
      %5783 = sbr.rel (%p5781) target = $region48
    $region47: #{luna_block_forward.1} parent=5 // pred_region
      %s5784 = ssub.s32 %s11, 2
      // Predicated region
      $region49: #{luna_block_forward.1} parent=47 // pred_check
        %p5785 = pneg %p150
      $region50: #{luna_block_forward.1} parent=47 // pred_check_branch
        %5787 = sbr.rel (%p5785) target = $region52
      $region51: #{luna_block_forward.1} parent=47 // pred_region
        %p5788 = scmp.lt.s32.totalorder %s17, 1
        %s5789 = scalar_select %p5788, %s17, 1
        %s5790 = smul.addr %s5789, 8
        %s5791 = smul.addr %s5790, 8
        %s5792 = scalar_lea.vmem %s5, %s5791
      $region52: #{luna_block_forward.1} parent=47 // pred_fallthru
        _
    $region48: #{luna_block_forward.1} parent=5 // pred_fallthru
      _
  $region6: #{luna_block_forward.1} parent=0 // loop_footer
    %s15 = sadd.s32 1, %s11
  $region7: #{luna_block_forward.1} parent=0 // loop_footer_branch
    %10 = sbr.rel target = $region3
  $region8: #{luna_block_forward.1} parent=0 // loop_exit
    _

</llo_original>
